<compile_context>
chip_gen: v7x
topology: tpu7x:2x2x1
jax: 0.10.0
libtpu: 0.0.40
codegen_flags: <defaults>
</compile_context>

<pallas_src>
import functools
import math

import jax
import jax.numpy as jnp
from jax import lax
from jax.experimental import pallas as pl
from jax.experimental.pallas import tpu as pltpu


def encoder_layer_kernel(
    xq_ref, xkv_ref,
    wq_ref, bq_ref, wk_ref, bk_ref, wv_ref, bv_ref, wo_ref, bo_ref,
    g1_ref, be1_ref,
    w1_ref, b1_ref, w2_ref, b2_ref,
    g2_ref, be2_ref,
    o_ref,
    k_scr, v_scr,
    *, n_head, eps):
  bf16 = jnp.bfloat16
  xq = xq_ref[0]                       # (TQ, D) f32 -- query rows / residual for this tile
  TQ, D = xq.shape
  dh = D // n_head
  scale = 1.0 / math.sqrt(dh)

  def layer_norm(v, g_ref, b_ref):
    mu = jnp.mean(v, axis=-1, keepdims=True)
    var = jnp.mean(jnp.square(v - mu), axis=-1, keepdims=True)
    return g_ref[...] * (v - mu) * lax.rsqrt(var + eps) + b_ref[...]   # EUP rsqrt

  # ---- K/V projection: ONCE per batch element, cached head-major in VMEM scratch ----
  @pl.when(pl.program_id(1) == 0)
  def _():
    xkv = xkv_ref[0]                   # (S, D) bf16, fetched once per batch element
    for h in range(n_head):            # leading-index (head-major) weight access, no lane slices
      k_scr[h] = (jnp.dot(xkv, wk_ref[h], preferred_element_type=jnp.float32)
                  + bk_ref[h]).astype(bf16)
      v_scr[h] = (jnp.dot(xkv, wv_ref[h], preferred_element_type=jnp.float32)
                  + bv_ref[h]).astype(bf16)

  xq_b = xq.astype(bf16)

  # ---- multi-head self attention (src_mask=None path) ----
  attn = None
  for h in range(n_head):
    # Per-head Q projection via head-major (D, dh) weight; fold 1/sqrt(dh) in f32
    # before the bf16 cast.
    qh = (jnp.dot(xq_b, wq_ref[h], preferred_element_type=jnp.float32)
          + bq_ref[h]) * scale                                       # (TQ, dh) f32
    kh = k_scr[h]                                                    # (S, dh) bf16
    vh = v_scr[h]                                                    # (S, dh) bf16
    s = lax.dot_general(qh.astype(bf16), kh, (((1,), (1,)), ((), ())),
                        preferred_element_type=jnp.float32)          # (TQ, S) f32
    s = s - jnp.max(s, axis=-1, keepdims=True)
    p = jnp.exp(s)                                                   # EUP
    p = p * pl.reciprocal(jnp.sum(p, axis=-1, keepdims=True), approx=True)
    ctx = jnp.dot(p.astype(bf16), vh, preferred_element_type=jnp.float32)   # (TQ, dh)
    # Head slice of the output projection (host-reshaped Wo[h] = rows h*dh:(h+1)*dh);
    # accumulate lane-dense (TQ, D) -- replaces the old masked ctx-slab stores.
    part = jnp.dot(ctx.astype(bf16), wo_ref[h],
                   preferred_element_type=jnp.float32)               # (TQ, D)
    attn = part if attn is None else attn + part
  attn = attn + bo_ref[...]

  # dropout1 is identity at inference
  x1 = layer_norm(attn + xq, g1_ref, be1_ref)

  # ---- position-wise feed forward ----
  h1 = jnp.maximum(
      jnp.dot(x1.astype(bf16), w1_ref[...], preferred_element_type=jnp.float32)
      + b1_ref[...], 0.0)
  ff = jnp.dot(h1.astype(bf16), w2_ref[...],
               preferred_element_type=jnp.float32) + b2_ref[...]

  # dropout2 is identity at inference
  o_ref[0] = layer_norm(ff + x1, g2_ref, be2_ref).astype(o_ref.dtype)


def _tpu_vmem_capacity_bytes():
  try:
    return int(pltpu.get_tpu_info().vmem_capacity_bytes)
  except Exception:
    return 64 * 1024 * 1024      # conservative (v7x-sized) fallback


def encoder_layer(x, params, *, n_head, eps=1e-12, single_buffer_weights=True):
  B, S, D = x.shape
  F = params["w1"].shape[1]
  assert D % n_head == 0, "d_model must be divisible by n_head"
  dh = D // n_head

  vmem_cap = _tpu_vmem_capacity_bytes()

  # Query-row tile: full S when small; 256 rows when VMEM is roomy (v5e/v6e, 128 MiB),
  # 128 rows on tighter-VMEM parts (v7x, 64 MiB).
  if S <= 128:
    tq = S
  elif vmem_cap >= 100 * 1024 * 1024 and S % 256 == 0:
    tq = 256
  else:
    tq = 128
  assert S % tq == 0, "S must be divisible by the query tile size"
  n_q = S // tq

  bf16 = jnp.bfloat16

  # Host-side head-major weight layouts: head splitting is free reshapes here, so the
  # kernel only ever does leading-index (no lane-slice) accesses.
  def head_major_w(w):      # (D, D) -> (H, D, dh)
    return jnp.transpose(w.reshape(D, n_head, dh), (1, 0, 2)).astype(bf16)

  def head_major_b(b):      # (1, D) -> (H, 1, dh)
    return jnp.transpose(b.reshape(1, n_head, dh), (1, 0, 2)).astype(jnp.float32)

  def const_spec(shape):
    idx = lambda b, qi: (0,) * len(shape)
    if single_buffer_weights:
      # Constant block index => double-buffering these only burns VMEM.
      return pl.BlockSpec(shape, idx, pipeline_mode=pl.Buffered(1))
    return pl.BlockSpec(shape, idx)

  xq_spec = pl.BlockSpec((1, tq, D), lambda b, qi: (b, qi, 0))
  xkv_spec = pl.BlockSpec((1, S, D), lambda b, qi: (b, 0, 0))   # constant over qi => one DMA per b
  out_spec = pl.BlockSpec((1, tq, D), lambda b, qi: (b, qi, 0))

  in_specs = [
      xq_spec, xkv_spec,
      const_spec((n_head, D, dh)), const_spec((n_head, 1, dh)),   # wq, bq
      const_spec((n_head, D, dh)), const_spec((n_head, 1, dh)),   # wk, bk
      const_spec((n_head, D, dh)), const_spec((n_head, 1, dh)),   # wv, bv
      const_spec((n_head, dh, D)), const_spec((1, D)),            # wo, bo
      const_spec((1, D)), const_spec((1, D)),                     # gamma1, beta1
      const_spec((D, F)), const_spec((1, F)),                     # w1, b1
      const_spec((F, D)), const_spec((1, D)),                     # w2, b2
      const_spec((1, D)), const_spec((1, D)),                     # gamma2, beta2
  ]

  kernel = functools.partial(encoder_layer_kernel, n_head=n_head, eps=eps)

  flops = B * (8 * S * D * D + 4 * S * S * D + 4 * S * D * F)
  transcendentals = B * (n_head * S * S + n_head * S + 2 * S)
  bytes_accessed = (4 * B * S * D + 2 * B * S * D + 4 * B * S * D   # xq f32 + xkv bf16 + out f32
                    + 2 * (4 * D * D + 2 * D * F)                   # bf16 weights
                    + 4 * (9 * D + F))                              # f32 biases / LN params

  # Leave headroom for compiler-internal scratch/spill on every generation.
  vmem_limit = min(int(vmem_cap * 5 // 8), 96 * 1024 * 1024)

  return pl.pallas_call(
      kernel,
      out_shape=jax.ShapeDtypeStruct((B, S, D), jnp.float32),
      grid=(B, n_q),
      in_specs=in_specs,
      out_specs=out_spec,
      scratch_shapes=[
          pltpu.VMEM((n_head, S, dh), bf16),   # cached K (head-major), persists across qi
          pltpu.VMEM((n_head, S, dh), bf16),   # cached V (head-major)
      ],
      compiler_params=pltpu.CompilerParams(
          dimension_semantics=("parallel", "arbitrary"),
          vmem_limit_bytes=vmem_limit),
      cost_estimate=pl.CostEstimate(flops=flops,
                                    transcendentals=transcendentals,
                                    bytes_accessed=bytes_accessed),
  )(
      x,                           # f32 query rows / residual
      x.astype(bf16),              # bf16 K/V operand (only ever a bf16 matmul input)
      head_major_w(params["wq"]), head_major_b(params["bq"]),
      head_major_w(params["wk"]), head_major_b(params["bk"]),
      head_major_w(params["wv"]), head_major_b(params["bv"]),
      params["wo"].reshape(n_head, dh, D).astype(bf16), params["bo"],
      params["g1"], params["be1"],
      params["w1"].astype(bf16), params["b1"],
      params["w2"].astype(bf16), params["b2"],
      params["g2"], params["be2"],
  )


def encoder_layer_ref(x, p, *, n_head, eps=1e-12):
  """Pure-JAX reference mirroring the kernel's numerics (bf16 matmul inputs, f32 accum)."""
  B, S, D = x.shape
  dh = D // n_head
  bf16 = jnp.bfloat16

  def ln(v, g, b):
    mu = jnp.mean(v, axis=-1, keepdims=True)
    var = jnp.mean((v - mu) ** 2, axis=-1, keepdims=True)
    return g * (v - mu) / jnp.sqrt(var + eps) + b

  def lin(v, w, b):
    return jnp.dot(v.astype(bf16), w.astype(bf16),
                   preferred_element_type=jnp.float32) + b

  q = lin(x, p["wq"], p["bq"])
  k = lin(x, p["wk"], p["bk"])
  v = lin(x, p["wv"], p["bv"])
  qh = q.reshape(B, S, n_head, dh).transpose(0, 2, 1, 3).astype(bf16)
  kh = k.reshape(B, S, n_head, dh).transpose(0, 2, 1, 3).astype(bf16)
  vh = v.reshape(B, S, n_head, dh).transpose(0, 2, 1, 3).astype(bf16)
  s = jnp.einsum("bhqd,bhkd->bhqk", qh, kh,
                 preferred_element_type=jnp.float32) / math.sqrt(dh)
  pm = jax.nn.softmax(s, axis=-1)
  o = jnp.einsum("bhqk,bhkd->bhqd", pm.astype(bf16), vh,
                 preferred_element_type=jnp.float32)
  o = o.transpose(0, 2, 1, 3).reshape(B, S, D)
  o = lin(o, p["wo"], p["bo"])
  x1 = ln(o + x, p["g1"], p["be1"])
  h1 = jnp.maximum(lin(x1, p["w1"], p["b1"]), 0.0)
  ff = lin(h1, p["w2"], p["b2"])
  return ln(ff + x1, p["g2"], p["be2"])


def init_params(key, d_model, n_head, ffn_hidden):
  ks = jax.random.split(key, 6)
  sc = 0.05
  D, F = d_model, ffn_hidden
  return {
      "wq": sc * jax.random.normal(ks[0], (D, D), jnp.float32),
      "bq": jnp.zeros((1, D), jnp.float32),
      "wk": sc * jax.random.normal(ks[1], (D, D), jnp.float32),
      "bk": jnp.zeros((1, D), jnp.float32),
      "wv": sc * jax.random.normal(ks[2], (D, D), jnp.float32),
      "bv": jnp.zeros((1, D), jnp.float32),
      "wo": sc * jax.random.normal(ks[3], (D, D), jnp.float32),
      "bo": jnp.zeros((1, D), jnp.float32),
      "g1": jnp.ones((1, D), jnp.float32),
      "be1": jnp.zeros((1, D), jnp.float32),
      "w1": sc * jax.random.normal(ks[4], (D, F), jnp.float32),
      "b1": jnp.zeros((1, F), jnp.float32),
      "w2": sc * jax.random.normal(ks[5], (F, D), jnp.float32),
      "b2": jnp.zeros((1, D), jnp.float32),
      "g2": jnp.ones((1, D), jnp.float32),
      "be2": jnp.zeros((1, D), jnp.float32),
  }


if __name__ == "__main__":
  B, S, D, H, F = 2, 8, 32, 4, 64   # batch, seq, d_model, n_head, ffn_hidden
  # NOTE: small shapes for a functional check; production sizes should keep S a multiple
  # of the tile size and d_head a multiple of 128 (see TODOs above).

  key = jax.random.PRNGKey(0)
  kx, kp = jax.random.split(key)
  x = jax.random.normal(kx, (B, S, D), jnp.float32)
  params = init_params(kp, D, H, F)

  try:
    out = jax.block_until_ready(encoder_layer(x, params, n_head=H))
  except Exception:
    # Fallback for builds where BlockSpec(pipeline_mode=pl.Buffered(1)) is unsupported.
    out = jax.block_until_ready(
        encoder_layer(x, params, n_head=H, single_buffer_weights=False))

  ref = encoder_layer_ref(x, params, n_head=H)
  assert out.shape == (B, S, D)
  assert jnp.allclose(out, ref, atol=2e-2, rtol=2e-2), "mismatch vs reference"

  print("KERNEL_OK")
</pallas_src>

<mosaic_0001>
module attributes {stable_mosaic.version = 11 : i64} {
  func.func @encoder_layer_kernel(%arg0: i32, %arg1: i32, %arg2: memref<1x8x32xf32, #tpu.memory_space<vmem>>, %arg3: memref<1x8x32xbf16, #tpu.memory_space<vmem>>, %arg4: memref<4x32x8xbf16, #tpu.memory_space<vmem>>, %arg5: memref<4x1x8xf32, #tpu.memory_space<vmem>>, %arg6: memref<4x32x8xbf16, #tpu.memory_space<vmem>>, %arg7: memref<4x1x8xf32, #tpu.memory_space<vmem>>, %arg8: memref<4x32x8xbf16, #tpu.memory_space<vmem>>, %arg9: memref<4x1x8xf32, #tpu.memory_space<vmem>>, %arg10: memref<4x8x32xbf16, #tpu.memory_space<vmem>>, %arg11: memref<1x32xf32, #tpu.memory_space<vmem>>, %arg12: memref<1x32xf32, #tpu.memory_space<vmem>>, %arg13: memref<1x32xf32, #tpu.memory_space<vmem>>, %arg14: memref<32x64xbf16, #tpu.memory_space<vmem>>, %arg15: memref<1x64xf32, #tpu.memory_space<vmem>>, %arg16: memref<64x32xbf16, #tpu.memory_space<vmem>>, %arg17: memref<1x32xf32, #tpu.memory_space<vmem>>, %arg18: memref<1x32xf32, #tpu.memory_space<vmem>>, %arg19: memref<1x32xf32, #tpu.memory_space<vmem>>, %arg20: memref<1x8x32xf32, #tpu.memory_space<vmem>>, %arg21: memref<4x8x8xbf16, #tpu.memory_space<vmem>>, %arg22: memref<4x8x8xbf16, #tpu.memory_space<vmem>>) attributes {dimension_semantics = [#tpu.dimension_semantics<parallel>, #tpu.dimension_semantics<arbitrary>], iteration_bounds = array<i64: 2, 1>, scalar_prefetch = 0 : i64, scratch_operands = 2 : i64, tpu.core_type = #tpu.core_type<tc>, window_params = [{transform_indices = @transform_0, window_bounds = array<i64: 1, 8, 32>}, {transform_indices = @transform_1, window_bounds = array<i64: 1, 8, 32>}, {pipeline_mode = #tpu.pipeline_mode<synchronous>, transform_indices = @transform_2, window_bounds = array<i64: 4, 32, 8>}, {pipeline_mode = #tpu.pipeline_mode<synchronous>, transform_indices = @transform_3, window_bounds = array<i64: 4, 1, 8>}, {pipeline_mode = #tpu.pipeline_mode<synchronous>, transform_indices = @transform_4, window_bounds = array<i64: 4, 32, 8>}, {pipeline_mode = #tpu.pipeline_mode<synchronous>, transform_indices = @transform_5, window_bounds = array<i64: 4, 1, 8>}, {pipeline_mode = #tpu.pipeline_mode<synchronous>, transform_indices = @transform_6, window_bounds = array<i64: 4, 32, 8>}, {pipeline_mode = #tpu.pipeline_mode<synchronous>, transform_indices = @transform_7, window_bounds = array<i64: 4, 1, 8>}, {pipeline_mode = #tpu.pipeline_mode<synchronous>, transform_indices = @transform_8, window_bounds = array<i64: 4, 8, 32>}, {pipeline_mode = #tpu.pipeline_mode<synchronous>, transform_indices = @transform_9, window_bounds = array<i64: 1, 32>}, {pipeline_mode = #tpu.pipeline_mode<synchronous>, transform_indices = @transform_10, window_bounds = array<i64: 1, 32>}, {pipeline_mode = #tpu.pipeline_mode<synchronous>, transform_indices = @transform_11, window_bounds = array<i64: 1, 32>}, {pipeline_mode = #tpu.pipeline_mode<synchronous>, transform_indices = @transform_12, window_bounds = array<i64: 32, 64>}, {pipeline_mode = #tpu.pipeline_mode<synchronous>, transform_indices = @transform_13, window_bounds = array<i64: 1, 64>}, {pipeline_mode = #tpu.pipeline_mode<synchronous>, transform_indices = @transform_14, window_bounds = array<i64: 64, 32>}, {pipeline_mode = #tpu.pipeline_mode<synchronous>, transform_indices = @transform_15, window_bounds = array<i64: 1, 32>}, {pipeline_mode = #tpu.pipeline_mode<synchronous>, transform_indices = @transform_16, window_bounds = array<i64: 1, 32>}, {pipeline_mode = #tpu.pipeline_mode<synchronous>, transform_indices = @transform_17, window_bounds = array<i64: 1, 32>}, {transform_indices = @transform_18, window_bounds = array<i64: 1, 8, 32>}]} {
    %c0 = arith.constant 0 : index
    %c0_0 = arith.constant 0 : index
    %c0_1 = arith.constant 0 : index
    %0 = vector.load %arg2[%c0, %c0_0, %c0_1] : memref<1x8x32xf32, #tpu.memory_space<vmem>>, vector<1x8x32xf32>
    %1 = vector.shape_cast %0 : vector<1x8x32xf32> to vector<8x32xf32>
    %c0_i32 = arith.constant 0 : i32
    %2 = arith.cmpi eq, %arg1, %c0_i32 : i32
    %3 = arith.extui %2 : i1 to i32
    %c0_i32_2 = arith.constant 0 : i32
    %4 = arith.cmpi ne, %3, %c0_i32_2 : i32
    scf.if %4 {
      %c0_121 = arith.constant 0 : index
      %c0_122 = arith.constant 0 : index
      %c0_123 = arith.constant 0 : index
      %203 = vector.load %arg3[%c0_121, %c0_122, %c0_123] : memref<1x8x32xbf16, #tpu.memory_space<vmem>>, vector<1x8x32xbf16>
      %204 = vector.shape_cast %203 : vector<1x8x32xbf16> to vector<8x32xbf16>
      %c0_124 = arith.constant 0 : index
      %c0_125 = arith.constant 0 : index
      %c0_126 = arith.constant 0 : index
      %205 = vector.load %arg6[%c0_124, %c0_125, %c0_126] : memref<4x32x8xbf16, #tpu.memory_space<vmem>>, vector<1x32x8xbf16>
      %206 = vector.shape_cast %205 : vector<1x32x8xbf16> to vector<32x8xbf16>
      %cst_127 = arith.constant dense<0.000000e+00> : vector<8x8xf32>
      %207 = tpu.matmul %204, %206, %cst_127 {dimension_numbers = #tpu.dot_dimension_numbers<[1], [0], [0], [1], [0, 0, 1, 1], [], []>} : vector<8x32xbf16>, vector<32x8xbf16>, vector<8x8xf32> -> vector<8x8xf32>
      %c0_128 = arith.constant 0 : index
      %c0_129 = arith.constant 0 : index
      %c0_130 = arith.constant 0 : index
      %208 = vector.load %arg7[%c0_128, %c0_129, %c0_130] : memref<4x1x8xf32, #tpu.memory_space<vmem>>, vector<1x1x8xf32>
      %209 = vector.shape_cast %208 : vector<1x1x8xf32> to vector<1x8xf32>
      %210 = vector.broadcast %209 : vector<1x8xf32> to vector<8x8xf32>
      %211 = arith.addf %207, %210 : vector<8x8xf32>
      %212 = arith.truncf %211 : vector<8x8xf32> to vector<8x8xbf16>
      %c0_131 = arith.constant 0 : index
      %c0_132 = arith.constant 0 : index
      %c0_133 = arith.constant 0 : index
      %213 = vector.load %arg21[%c0_131, %c0_132, %c0_133] : memref<4x8x8xbf16, #tpu.memory_space<vmem>>, vector<1x8x8xbf16>
      %214 = vector.shape_cast %213 : vector<1x8x8xbf16> to vector<8x8xbf16>
      %215 = vector.shape_cast %212 : vector<8x8xbf16> to vector<1x8x8xbf16>
      tpu.vector_store %arg21[%c0_131, %c0_132, %c0_133], %215 {strides = array<i32>} : memref<4x8x8xbf16, #tpu.memory_space<vmem>>, vector<1x8x8xbf16>,
      %c0_134 = arith.constant 0 : index
      %c0_135 = arith.constant 0 : index
      %c0_136 = arith.constant 0 : index
      %216 = vector.load %arg8[%c0_134, %c0_135, %c0_136] : memref<4x32x8xbf16, #tpu.memory_space<vmem>>, vector<1x32x8xbf16>
      %217 = vector.shape_cast %216 : vector<1x32x8xbf16> to vector<32x8xbf16>
      %cst_137 = arith.constant dense<0.000000e+00> : vector<8x8xf32>
      %218 = tpu.matmul %204, %217, %cst_137 {dimension_numbers = #tpu.dot_dimension_numbers<[1], [0], [0], [1], [0, 0, 1, 1], [], []>} : vector<8x32xbf16>, vector<32x8xbf16>, vector<8x8xf32> -> vector<8x8xf32>
      %c0_138 = arith.constant 0 : index
      %c0_139 = arith.constant 0 : index
      %c0_140 = arith.constant 0 : index
      %219 = vector.load %arg9[%c0_138, %c0_139, %c0_140] : memref<4x1x8xf32, #tpu.memory_space<vmem>>, vector<1x1x8xf32>
      %220 = vector.shape_cast %219 : vector<1x1x8xf32> to vector<1x8xf32>
      %221 = vector.broadcast %220 : vector<1x8xf32> to vector<8x8xf32>
      %222 = arith.addf %218, %221 : vector<8x8xf32>
      %223 = arith.truncf %222 : vector<8x8xf32> to vector<8x8xbf16>
      %c0_141 = arith.constant 0 : index
      %c0_142 = arith.constant 0 : index
      %c0_143 = arith.constant 0 : index
      %224 = vector.load %arg22[%c0_141, %c0_142, %c0_143] : memref<4x8x8xbf16, #tpu.memory_space<vmem>>, vector<1x8x8xbf16>
      %225 = vector.shape_cast %224 : vector<1x8x8xbf16> to vector<8x8xbf16>
      %226 = vector.shape_cast %223 : vector<8x8xbf16> to vector<1x8x8xbf16>
      tpu.vector_store %arg22[%c0_141, %c0_142, %c0_143], %226 {strides = array<i32>} : memref<4x8x8xbf16, #tpu.memory_space<vmem>>, vector<1x8x8xbf16>,
      %c1_144 = arith.constant 1 : index
      %c0_145 = arith.constant 0 : index
      %c0_146 = arith.constant 0 : index
      %227 = vector.load %arg6[%c1_144, %c0_145, %c0_146] : memref<4x32x8xbf16, #tpu.memory_space<vmem>>, vector<1x32x8xbf16>
      %228 = vector.shape_cast %227 : vector<1x32x8xbf16> to vector<32x8xbf16>
      %cst_147 = arith.constant dense<0.000000e+00> : vector<8x8xf32>
      %229 = tpu.matmul %204, %228, %cst_147 {dimension_numbers = #tpu.dot_dimension_numbers<[1], [0], [0], [1], [0, 0, 1, 1], [], []>} : vector<8x32xbf16>, vector<32x8xbf16>, vector<8x8xf32> -> vector<8x8xf32>
      %c1_148 = arith.constant 1 : index
      %c0_149 = arith.constant 0 : index
      %c0_150 = arith.constant 0 : index
      %230 = vector.load %arg7[%c1_148, %c0_149, %c0_150] : memref<4x1x8xf32, #tpu.memory_space<vmem>>, vector<1x1x8xf32>
      %231 = vector.shape_cast %230 : vector<1x1x8xf32> to vector<1x8xf32>
      %232 = vector.broadcast %231 : vector<1x8xf32> to vector<8x8xf32>
      %233 = arith.addf %229, %232 : vector<8x8xf32>
      %234 = arith.truncf %233 : vector<8x8xf32> to vector<8x8xbf16>
      %c1_151 = arith.constant 1 : index
      %c0_152 = arith.constant 0 : index
      %c0_153 = arith.constant 0 : index
      %235 = vector.load %arg21[%c1_151, %c0_152, %c0_153] : memref<4x8x8xbf16, #tpu.memory_space<vmem>>, vector<1x8x8xbf16>
      %236 = vector.shape_cast %235 : vector<1x8x8xbf16> to vector<8x8xbf16>
      %237 = vector.shape_cast %234 : vector<8x8xbf16> to vector<1x8x8xbf16>
      tpu.vector_store %arg21[%c1_151, %c0_152, %c0_153], %237 {strides = array<i32>} : memref<4x8x8xbf16, #tpu.memory_space<vmem>>, vector<1x8x8xbf16>,
      %c1_154 = arith.constant 1 : index
      %c0_155 = arith.constant 0 : index
      %c0_156 = arith.constant 0 : index
      %238 = vector.load %arg8[%c1_154, %c0_155, %c0_156] : memref<4x32x8xbf16, #tpu.memory_space<vmem>>, vector<1x32x8xbf16>
      %239 = vector.shape_cast %238 : vector<1x32x8xbf16> to vector<32x8xbf16>
      %cst_157 = arith.constant dense<0.000000e+00> : vector<8x8xf32>
      %240 = tpu.matmul %204, %239, %cst_157 {dimension_numbers = #tpu.dot_dimension_numbers<[1], [0], [0], [1], [0, 0, 1, 1], [], []>} : vector<8x32xbf16>, vector<32x8xbf16>, vector<8x8xf32> -> vector<8x8xf32>
      %c1_158 = arith.constant 1 : index
      %c0_159 = arith.constant 0 : index
      %c0_160 = arith.constant 0 : index
      %241 = vector.load %arg9[%c1_158, %c0_159, %c0_160] : memref<4x1x8xf32, #tpu.memory_space<vmem>>, vector<1x1x8xf32>
      %242 = vector.shape_cast %241 : vector<1x1x8xf32> to vector<1x8xf32>
      %243 = vector.broadcast %242 : vector<1x8xf32> to vector<8x8xf32>
      %244 = arith.addf %240, %243 : vector<8x8xf32>
      %245 = arith.truncf %244 : vector<8x8xf32> to vector<8x8xbf16>
      %c1_161 = arith.constant 1 : index
      %c0_162 = arith.constant 0 : index
      %c0_163 = arith.constant 0 : index
      %246 = vector.load %arg22[%c1_161, %c0_162, %c0_163] : memref<4x8x8xbf16, #tpu.memory_space<vmem>>, vector<1x8x8xbf16>
      %247 = vector.shape_cast %246 : vector<1x8x8xbf16> to vector<8x8xbf16>
      %248 = vector.shape_cast %245 : vector<8x8xbf16> to vector<1x8x8xbf16>
      tpu.vector_store %arg22[%c1_161, %c0_162, %c0_163], %248 {strides = array<i32>} : memref<4x8x8xbf16, #tpu.memory_space<vmem>>, vector<1x8x8xbf16>,
      %c2_164 = arith.constant 2 : index
      %c0_165 = arith.constant 0 : index
      %c0_166 = arith.constant 0 : index
      %249 = vector.load %arg6[%c2_164, %c0_165, %c0_166] : memref<4x32x8xbf16, #tpu.memory_space<vmem>>, vector<1x32x8xbf16>
      %250 = vector.shape_cast %249 : vector<1x32x8xbf16> to vector<32x8xbf16>
      %cst_167 = arith.constant dense<0.000000e+00> : vector<8x8xf32>
      %251 = tpu.matmul %204, %250, %cst_167 {dimension_numbers = #tpu.dot_dimension_numbers<[1], [0], [0], [1], [0, 0, 1, 1], [], []>} : vector<8x32xbf16>, vector<32x8xbf16>, vector<8x8xf32> -> vector<8x8xf32>
      %c2_168 = arith.constant 2 : index
      %c0_169 = arith.constant 0 : index
      %c0_170 = arith.constant 0 : index
      %252 = vector.load %arg7[%c2_168, %c0_169, %c0_170] : memref<4x1x8xf32, #tpu.memory_space<vmem>>, vector<1x1x8xf32>
      %253 = vector.shape_cast %252 : vector<1x1x8xf32> to vector<1x8xf32>
      %254 = vector.broadcast %253 : vector<1x8xf32> to vector<8x8xf32>
      %255 = arith.addf %251, %254 : vector<8x8xf32>
      %256 = arith.truncf %255 : vector<8x8xf32> to vector<8x8xbf16>
      %c2_171 = arith.constant 2 : index
      %c0_172 = arith.constant 0 : index
      %c0_173 = arith.constant 0 : index
      %257 = vector.load %arg21[%c2_171, %c0_172, %c0_173] : memref<4x8x8xbf16, #tpu.memory_space<vmem>>, vector<1x8x8xbf16>
      %258 = vector.shape_cast %257 : vector<1x8x8xbf16> to vector<8x8xbf16>
      %259 = vector.shape_cast %256 : vector<8x8xbf16> to vector<1x8x8xbf16>
      tpu.vector_store %arg21[%c2_171, %c0_172, %c0_173], %259 {strides = array<i32>} : memref<4x8x8xbf16, #tpu.memory_space<vmem>>, vector<1x8x8xbf16>,
      %c2_174 = arith.constant 2 : index
      %c0_175 = arith.constant 0 : index
      %c0_176 = arith.constant 0 : index
      %260 = vector.load %arg8[%c2_174, %c0_175, %c0_176] : memref<4x32x8xbf16, #tpu.memory_space<vmem>>, vector<1x32x8xbf16>
      %261 = vector.shape_cast %260 : vector<1x32x8xbf16> to vector<32x8xbf16>
      %cst_177 = arith.constant dense<0.000000e+00> : vector<8x8xf32>
      %262 = tpu.matmul %204, %261, %cst_177 {dimension_numbers = #tpu.dot_dimension_numbers<[1], [0], [0], [1], [0, 0, 1, 1], [], []>} : vector<8x32xbf16>, vector<32x8xbf16>, vector<8x8xf32> -> vector<8x8xf32>
      %c2_178 = arith.constant 2 : index
      %c0_179 = arith.constant 0 : index
      %c0_180 = arith.constant 0 : index
      %263 = vector.load %arg9[%c2_178, %c0_179, %c0_180] : memref<4x1x8xf32, #tpu.memory_space<vmem>>, vector<1x1x8xf32>
      %264 = vector.shape_cast %263 : vector<1x1x8xf32> to vector<1x8xf32>
      %265 = vector.broadcast %264 : vector<1x8xf32> to vector<8x8xf32>
      %266 = arith.addf %262, %265 : vector<8x8xf32>
      %267 = arith.truncf %266 : vector<8x8xf32> to vector<8x8xbf16>
      %c2_181 = arith.constant 2 : index
      %c0_182 = arith.constant 0 : index
      %c0_183 = arith.constant 0 : index
      %268 = vector.load %arg22[%c2_181, %c0_182, %c0_183] : memref<4x8x8xbf16, #tpu.memory_space<vmem>>, vector<1x8x8xbf16>
      %269 = vector.shape_cast %268 : vector<1x8x8xbf16> to vector<8x8xbf16>
      %270 = vector.shape_cast %267 : vector<8x8xbf16> to vector<1x8x8xbf16>
      tpu.vector_store %arg22[%c2_181, %c0_182, %c0_183], %270 {strides = array<i32>} : memref<4x8x8xbf16, #tpu.memory_space<vmem>>, vector<1x8x8xbf16>,
      %c3_184 = arith.constant 3 : index
      %c0_185 = arith.constant 0 : index
      %c0_186 = arith.constant 0 : index
      %271 = vector.load %arg6[%c3_184, %c0_185, %c0_186] : memref<4x32x8xbf16, #tpu.memory_space<vmem>>, vector<1x32x8xbf16>
      %272 = vector.shape_cast %271 : vector<1x32x8xbf16> to vector<32x8xbf16>
      %cst_187 = arith.constant dense<0.000000e+00> : vector<8x8xf32>
      %273 = tpu.matmul %204, %272, %cst_187 {dimension_numbers = #tpu.dot_dimension_numbers<[1], [0], [0], [1], [0, 0, 1, 1], [], []>} : vector<8x32xbf16>, vector<32x8xbf16>, vector<8x8xf32> -> vector<8x8xf32>
      %c3_188 = arith.constant 3 : index
      %c0_189 = arith.constant 0 : index
      %c0_190 = arith.constant 0 : index
      %274 = vector.load %arg7[%c3_188, %c0_189, %c0_190] : memref<4x1x8xf32, #tpu.memory_space<vmem>>, vector<1x1x8xf32>
      %275 = vector.shape_cast %274 : vector<1x1x8xf32> to vector<1x8xf32>
      %276 = vector.broadcast %275 : vector<1x8xf32> to vector<8x8xf32>
      %277 = arith.addf %273, %276 : vector<8x8xf32>
      %278 = arith.truncf %277 : vector<8x8xf32> to vector<8x8xbf16>
      %c3_191 = arith.constant 3 : index
      %c0_192 = arith.constant 0 : index
      %c0_193 = arith.constant 0 : index
      %279 = vector.load %arg21[%c3_191, %c0_192, %c0_193] : memref<4x8x8xbf16, #tpu.memory_space<vmem>>, vector<1x8x8xbf16>
      %280 = vector.shape_cast %279 : vector<1x8x8xbf16> to vector<8x8xbf16>
      %281 = vector.shape_cast %278 : vector<8x8xbf16> to vector<1x8x8xbf16>
      tpu.vector_store %arg21[%c3_191, %c0_192, %c0_193], %281 {strides = array<i32>} : memref<4x8x8xbf16, #tpu.memory_space<vmem>>, vector<1x8x8xbf16>,
      %c3_194 = arith.constant 3 : index
      %c0_195 = arith.constant 0 : index
      %c0_196 = arith.constant 0 : index
      %282 = vector.load %arg8[%c3_194, %c0_195, %c0_196] : memref<4x32x8xbf16, #tpu.memory_space<vmem>>, vector<1x32x8xbf16>
      %283 = vector.shape_cast %282 : vector<1x32x8xbf16> to vector<32x8xbf16>
      %cst_197 = arith.constant dense<0.000000e+00> : vector<8x8xf32>
      %284 = tpu.matmul %204, %283, %cst_197 {dimension_numbers = #tpu.dot_dimension_numbers<[1], [0], [0], [1], [0, 0, 1, 1], [], []>} : vector<8x32xbf16>, vector<32x8xbf16>, vector<8x8xf32> -> vector<8x8xf32>
      %c3_198 = arith.constant 3 : index
      %c0_199 = arith.constant 0 : index
      %c0_200 = arith.constant 0 : index
      %285 = vector.load %arg9[%c3_198, %c0_199, %c0_200] : memref<4x1x8xf32, #tpu.memory_space<vmem>>, vector<1x1x8xf32>
      %286 = vector.shape_cast %285 : vector<1x1x8xf32> to vector<1x8xf32>
      %287 = vector.broadcast %286 : vector<1x8xf32> to vector<8x8xf32>
      %288 = arith.addf %284, %287 : vector<8x8xf32>
      %289 = arith.truncf %288 : vector<8x8xf32> to vector<8x8xbf16>
      %c3_201 = arith.constant 3 : index
      %c0_202 = arith.constant 0 : index
      %c0_203 = arith.constant 0 : index
      %290 = vector.load %arg22[%c3_201, %c0_202, %c0_203] : memref<4x8x8xbf16, #tpu.memory_space<vmem>>, vector<1x8x8xbf16>
      %291 = vector.shape_cast %290 : vector<1x8x8xbf16> to vector<8x8xbf16>
      %292 = vector.shape_cast %289 : vector<8x8xbf16> to vector<1x8x8xbf16>
      tpu.vector_store %arg22[%c3_201, %c0_202, %c0_203], %292 {strides = array<i32>} : memref<4x8x8xbf16, #tpu.memory_space<vmem>>, vector<1x8x8xbf16>,
    } else {
    }
    %5 = arith.truncf %1 : vector<8x32xf32> to vector<8x32xbf16>
    %c0_3 = arith.constant 0 : index
    %c0_4 = arith.constant 0 : index
    %c0_5 = arith.constant 0 : index
    %6 = vector.load %arg4[%c0_3, %c0_4, %c0_5] : memref<4x32x8xbf16, #tpu.memory_space<vmem>>, vector<1x32x8xbf16>
    %7 = vector.shape_cast %6 : vector<1x32x8xbf16> to vector<32x8xbf16>
    %cst = arith.constant dense<0.000000e+00> : vector<8x8xf32>
    %8 = tpu.matmul %5, %7, %cst {dimension_numbers = #tpu.dot_dimension_numbers<[1], [0], [0], [1], [0, 0, 1, 1], [], []>} : vector<8x32xbf16>, vector<32x8xbf16>, vector<8x8xf32> -> vector<8x8xf32>
    %c0_6 = arith.constant 0 : index
    %c0_7 = arith.constant 0 : index
    %c0_8 = arith.constant 0 : index
    %9 = vector.load %arg5[%c0_6, %c0_7, %c0_8] : memref<4x1x8xf32, #tpu.memory_space<vmem>>, vector<1x1x8xf32>
    %10 = vector.shape_cast %9 : vector<1x1x8xf32> to vector<1x8xf32>
    %11 = vector.broadcast %10 : vector<1x8xf32> to vector<8x8xf32>
    %12 = arith.addf %8, %11 : vector<8x8xf32>
    %cst_9 = arith.constant 0.353553385 : f32
    %13 = vector.broadcast %cst_9 : f32 to vector<8x8xf32>
    %14 = arith.mulf %12, %13 : vector<8x8xf32>
    %c0_10 = arith.constant 0 : index
    %c0_11 = arith.constant 0 : index
    %c0_12 = arith.constant 0 : index
    %15 = vector.load %arg21[%c0_10, %c0_11, %c0_12] : memref<4x8x8xbf16, #tpu.memory_space<vmem>>, vector<1x8x8xbf16>
    %16 = vector.shape_cast %15 : vector<1x8x8xbf16> to vector<8x8xbf16>
    %c0_13 = arith.constant 0 : index
    %c0_14 = arith.constant 0 : index
    %c0_15 = arith.constant 0 : index
    %17 = vector.load %arg22[%c0_13, %c0_14, %c0_15] : memref<4x8x8xbf16, #tpu.memory_space<vmem>>, vector<1x8x8xbf16>
    %18 = vector.shape_cast %17 : vector<1x8x8xbf16> to vector<8x8xbf16>
    %19 = arith.truncf %14 : vector<8x8xf32> to vector<8x8xbf16>
    %cst_16 = arith.constant dense<0.000000e+00> : vector<8x8xf32>
    %20 = tpu.matmul %19, %16, %cst_16 {dimension_numbers = #tpu.dot_dimension_numbers<[1], [1], [0], [0], [0, 0, 1, 0], [], []>} : vector<8x8xbf16>, vector<8x8xbf16>, vector<8x8xf32> -> vector<8x8xf32>
    %cst_17 = arith.constant dense<0xFF800000> : vector<8xf32>
    %21 = vector.multi_reduction <maximumf>, %20, %cst_17 [1] : vector<8x8xf32> to vector<8xf32>
    %22 = vector.shape_cast %21 : vector<8xf32> to vector<8x1xf32>
    %23 = vector.broadcast %22 : vector<8x1xf32> to vector<8x8xf32>
    %24 = arith.subf %20, %23 : vector<8x8xf32>
    %25 = math.exp %24 : vector<8x8xf32>
    %cst_18 = arith.constant dense<0.000000e+00> : vector<8xf32>
    %26 = vector.multi_reduction <add>, %25, %cst_18 [1] : vector<8x8xf32> to vector<8xf32>
    %27 = vector.shape_cast %26 : vector<8xf32> to vector<8x1xf32>
    %28 = tpu.reciprocal %27 {approx = true} : vector<8x1xf32> -> vector<8x1xf32>
    %29 = vector.broadcast %28 : vector<8x1xf32> to vector<8x8xf32>
    %30 = arith.mulf %25, %29 : vector<8x8xf32>
    %31 = arith.truncf %30 : vector<8x8xf32> to vector<8x8xbf16>
    %cst_19 = arith.constant dense<0.000000e+00> : vector<8x8xf32>
    %32 = tpu.matmul %31, %18, %cst_19 {dimension_numbers = #tpu.dot_dimension_numbers<[1], [0], [0], [1], [0, 0, 1, 1], [], []>} : vector<8x8xbf16>, vector<8x8xbf16>, vector<8x8xf32> -> vector<8x8xf32>
    %33 = arith.truncf %32 : vector<8x8xf32> to vector<8x8xbf16>
    %c0_20 = arith.constant 0 : index
    %c0_21 = arith.constant 0 : index
    %c0_22 = arith.constant 0 : index
    %34 = vector.load %arg10[%c0_20, %c0_21, %c0_22] : memref<4x8x32xbf16, #tpu.memory_space<vmem>>, vector<1x8x32xbf16>
    %35 = vector.shape_cast %34 : vector<1x8x32xbf16> to vector<8x32xbf16>
    %cst_23 = arith.constant dense<0.000000e+00> : vector<8x32xf32>
    %36 = tpu.matmul %33, %35, %cst_23 {dimension_numbers = #tpu.dot_dimension_numbers<[1], [0], [0], [1], [0, 0, 1, 1], [], []>} : vector<8x8xbf16>, vector<8x32xbf16>, vector<8x32xf32> -> vector<8x32xf32>
    %c1 = arith.constant 1 : index
    %c0_24 = arith.constant 0 : index
    %c0_25 = arith.constant 0 : index
    %37 = vector.load %arg4[%c1, %c0_24, %c0_25] : memref<4x32x8xbf16, #tpu.memory_space<vmem>>, vector<1x32x8xbf16>
    %38 = vector.shape_cast %37 : vector<1x32x8xbf16> to vector<32x8xbf16>
    %cst_26 = arith.constant dense<0.000000e+00> : vector<8x8xf32>
    %39 = tpu.matmul %5, %38, %cst_26 {dimension_numbers = #tpu.dot_dimension_numbers<[1], [0], [0], [1], [0, 0, 1, 1], [], []>} : vector<8x32xbf16>, vector<32x8xbf16>, vector<8x8xf32> -> vector<8x8xf32>
    %c1_27 = arith.constant 1 : index
    %c0_28 = arith.constant 0 : index
    %c0_29 = arith.constant 0 : index
    %40 = vector.load %arg5[%c1_27, %c0_28, %c0_29] : memref<4x1x8xf32, #tpu.memory_space<vmem>>, vector<1x1x8xf32>
    %41 = vector.shape_cast %40 : vector<1x1x8xf32> to vector<1x8xf32>
    %42 = vector.broadcast %41 : vector<1x8xf32> to vector<8x8xf32>
    %43 = arith.addf %39, %42 : vector<8x8xf32>
    %cst_30 = arith.constant 0.353553385 : f32
    %44 = vector.broadcast %cst_30 : f32 to vector<8x8xf32>
    %45 = arith.mulf %43, %44 : vector<8x8xf32>
    %c1_31 = arith.constant 1 : index
    %c0_32 = arith.constant 0 : index
    %c0_33 = arith.constant 0 : index
    %46 = vector.load %arg21[%c1_31, %c0_32, %c0_33] : memref<4x8x8xbf16, #tpu.memory_space<vmem>>, vector<1x8x8xbf16>
    %47 = vector.shape_cast %46 : vector<1x8x8xbf16> to vector<8x8xbf16>
    %c1_34 = arith.constant 1 : index
    %c0_35 = arith.constant 0 : index
    %c0_36 = arith.constant 0 : index
    %48 = vector.load %arg22[%c1_34, %c0_35, %c0_36] : memref<4x8x8xbf16, #tpu.memory_space<vmem>>, vector<1x8x8xbf16>
    %49 = vector.shape_cast %48 : vector<1x8x8xbf16> to vector<8x8xbf16>
    %50 = arith.truncf %45 : vector<8x8xf32> to vector<8x8xbf16>
    %cst_37 = arith.constant dense<0.000000e+00> : vector<8x8xf32>
    %51 = tpu.matmul %50, %47, %cst_37 {dimension_numbers = #tpu.dot_dimension_numbers<[1], [1], [0], [0], [0, 0, 1, 0], [], []>} : vector<8x8xbf16>, vector<8x8xbf16>, vector<8x8xf32> -> vector<8x8xf32>
    %cst_38 = arith.constant dense<0xFF800000> : vector<8xf32>
    %52 = vector.multi_reduction <maximumf>, %51, %cst_38 [1] : vector<8x8xf32> to vector<8xf32>
    %53 = vector.shape_cast %52 : vector<8xf32> to vector<8x1xf32>
    %54 = vector.broadcast %53 : vector<8x1xf32> to vector<8x8xf32>
    %55 = arith.subf %51, %54 : vector<8x8xf32>
    %56 = math.exp %55 : vector<8x8xf32>
    %cst_39 = arith.constant dense<0.000000e+00> : vector<8xf32>
    %57 = vector.multi_reduction <add>, %56, %cst_39 [1] : vector<8x8xf32> to vector<8xf32>
    %58 = vector.shape_cast %57 : vector<8xf32> to vector<8x1xf32>
    %59 = tpu.reciprocal %58 {approx = true} : vector<8x1xf32> -> vector<8x1xf32>
    %60 = vector.broadcast %59 : vector<8x1xf32> to vector<8x8xf32>
    %61 = arith.mulf %56, %60 : vector<8x8xf32>
    %62 = arith.truncf %61 : vector<8x8xf32> to vector<8x8xbf16>
    %cst_40 = arith.constant dense<0.000000e+00> : vector<8x8xf32>
    %63 = tpu.matmul %62, %49, %cst_40 {dimension_numbers = #tpu.dot_dimension_numbers<[1], [0], [0], [1], [0, 0, 1, 1], [], []>} : vector<8x8xbf16>, vector<8x8xbf16>, vector<8x8xf32> -> vector<8x8xf32>
    %64 = arith.truncf %63 : vector<8x8xf32> to vector<8x8xbf16>
    %c1_41 = arith.constant 1 : index
    %c0_42 = arith.constant 0 : index
    %c0_43 = arith.constant 0 : index
    %65 = vector.load %arg10[%c1_41, %c0_42, %c0_43] : memref<4x8x32xbf16, #tpu.memory_space<vmem>>, vector<1x8x32xbf16>
    %66 = vector.shape_cast %65 : vector<1x8x32xbf16> to vector<8x32xbf16>
    %cst_44 = arith.constant dense<0.000000e+00> : vector<8x32xf32>
    %67 = tpu.matmul %64, %66, %cst_44 {dimension_numbers = #tpu.dot_dimension_numbers<[1], [0], [0], [1], [0, 0, 1, 1], [], []>} : vector<8x8xbf16>, vector<8x32xbf16>, vector<8x32xf32> -> vector<8x32xf32>
    %68 = arith.addf %36, %67 : vector<8x32xf32>
    %c2 = arith.constant 2 : index
    %c0_45 = arith.constant 0 : index
    %c0_46 = arith.constant 0 : index
    %69 = vector.load %arg4[%c2, %c0_45, %c0_46] : memref<4x32x8xbf16, #tpu.memory_space<vmem>>, vector<1x32x8xbf16>
    %70 = vector.shape_cast %69 : vector<1x32x8xbf16> to vector<32x8xbf16>
    %cst_47 = arith.constant dense<0.000000e+00> : vector<8x8xf32>
    %71 = tpu.matmul %5, %70, %cst_47 {dimension_numbers = #tpu.dot_dimension_numbers<[1], [0], [0], [1], [0, 0, 1, 1], [], []>} : vector<8x32xbf16>, vector<32x8xbf16>, vector<8x8xf32> -> vector<8x8xf32>
    %c2_48 = arith.constant 2 : index
    %c0_49 = arith.constant 0 : index
    %c0_50 = arith.constant 0 : index
    %72 = vector.load %arg5[%c2_48, %c0_49, %c0_50] : memref<4x1x8xf32, #tpu.memory_space<vmem>>, vector<1x1x8xf32>
    %73 = vector.shape_cast %72 : vector<1x1x8xf32> to vector<1x8xf32>
    %74 = vector.broadcast %73 : vector<1x8xf32> to vector<8x8xf32>
    %75 = arith.addf %71, %74 : vector<8x8xf32>
    %cst_51 = arith.constant 0.353553385 : f32
    %76 = vector.broadcast %cst_51 : f32 to vector<8x8xf32>
    %77 = arith.mulf %75, %76 : vector<8x8xf32>
    %c2_52 = arith.constant 2 : index
    %c0_53 = arith.constant 0 : index
    %c0_54 = arith.constant 0 : index
    %78 = vector.load %arg21[%c2_52, %c0_53, %c0_54] : memref<4x8x8xbf16, #tpu.memory_space<vmem>>, vector<1x8x8xbf16>
    %79 = vector.shape_cast %78 : vector<1x8x8xbf16> to vector<8x8xbf16>
    %c2_55 = arith.constant 2 : index
    %c0_56 = arith.constant 0 : index
    %c0_57 = arith.constant 0 : index
    %80 = vector.load %arg22[%c2_55, %c0_56, %c0_57] : memref<4x8x8xbf16, #tpu.memory_space<vmem>>, vector<1x8x8xbf16>
    %81 = vector.shape_cast %80 : vector<1x8x8xbf16> to vector<8x8xbf16>
    %82 = arith.truncf %77 : vector<8x8xf32> to vector<8x8xbf16>
    %cst_58 = arith.constant dense<0.000000e+00> : vector<8x8xf32>
    %83 = tpu.matmul %82, %79, %cst_58 {dimension_numbers = #tpu.dot_dimension_numbers<[1], [1], [0], [0], [0, 0, 1, 0], [], []>} : vector<8x8xbf16>, vector<8x8xbf16>, vector<8x8xf32> -> vector<8x8xf32>
    %cst_59 = arith.constant dense<0xFF800000> : vector<8xf32>
    %84 = vector.multi_reduction <maximumf>, %83, %cst_59 [1] : vector<8x8xf32> to vector<8xf32>
    %85 = vector.shape_cast %84 : vector<8xf32> to vector<8x1xf32>
    %86 = vector.broadcast %85 : vector<8x1xf32> to vector<8x8xf32>
    %87 = arith.subf %83, %86 : vector<8x8xf32>
    %88 = math.exp %87 : vector<8x8xf32>
    %cst_60 = arith.constant dense<0.000000e+00> : vector<8xf32>
    %89 = vector.multi_reduction <add>, %88, %cst_60 [1] : vector<8x8xf32> to vector<8xf32>
    %90 = vector.shape_cast %89 : vector<8xf32> to vector<8x1xf32>
    %91 = tpu.reciprocal %90 {approx = true} : vector<8x1xf32> -> vector<8x1xf32>
    %92 = vector.broadcast %91 : vector<8x1xf32> to vector<8x8xf32>
    %93 = arith.mulf %88, %92 : vector<8x8xf32>
    %94 = arith.truncf %93 : vector<8x8xf32> to vector<8x8xbf16>
    %cst_61 = arith.constant dense<0.000000e+00> : vector<8x8xf32>
    %95 = tpu.matmul %94, %81, %cst_61 {dimension_numbers = #tpu.dot_dimension_numbers<[1], [0], [0], [1], [0, 0, 1, 1], [], []>} : vector<8x8xbf16>, vector<8x8xbf16>, vector<8x8xf32> -> vector<8x8xf32>
    %96 = arith.truncf %95 : vector<8x8xf32> to vector<8x8xbf16>
    %c2_62 = arith.constant 2 : index
    %c0_63 = arith.constant 0 : index
    %c0_64 = arith.constant 0 : index
    %97 = vector.load %arg10[%c2_62, %c0_63, %c0_64] : memref<4x8x32xbf16, #tpu.memory_space<vmem>>, vector<1x8x32xbf16>
    %98 = vector.shape_cast %97 : vector<1x8x32xbf16> to vector<8x32xbf16>
    %cst_65 = arith.constant dense<0.000000e+00> : vector<8x32xf32>
    %99 = tpu.matmul %96, %98, %cst_65 {dimension_numbers = #tpu.dot_dimension_numbers<[1], [0], [0], [1], [0, 0, 1, 1], [], []>} : vector<8x8xbf16>, vector<8x32xbf16>, vector<8x32xf32> -> vector<8x32xf32>
    %100 = arith.addf %68, %99 : vector<8x32xf32>
    %c3 = arith.constant 3 : index
    %c0_66 = arith.constant 0 : index
    %c0_67 = arith.constant 0 : index
    %101 = vector.load %arg4[%c3, %c0_66, %c0_67] : memref<4x32x8xbf16, #tpu.memory_space<vmem>>, vector<1x32x8xbf16>
    %102 = vector.shape_cast %101 : vector<1x32x8xbf16> to vector<32x8xbf16>
    %cst_68 = arith.constant dense<0.000000e+00> : vector<8x8xf32>
    %103 = tpu.matmul %5, %102, %cst_68 {dimension_numbers = #tpu.dot_dimension_numbers<[1], [0], [0], [1], [0, 0, 1, 1], [], []>} : vector<8x32xbf16>, vector<32x8xbf16>, vector<8x8xf32> -> vector<8x8xf32>
    %c3_69 = arith.constant 3 : index
    %c0_70 = arith.constant 0 : index
    %c0_71 = arith.constant 0 : index
    %104 = vector.load %arg5[%c3_69, %c0_70, %c0_71] : memref<4x1x8xf32, #tpu.memory_space<vmem>>, vector<1x1x8xf32>
    %105 = vector.shape_cast %104 : vector<1x1x8xf32> to vector<1x8xf32>
    %106 = vector.broadcast %105 : vector<1x8xf32> to vector<8x8xf32>
    %107 = arith.addf %103, %106 : vector<8x8xf32>
    %cst_72 = arith.constant 0.353553385 : f32
    %108 = vector.broadcast %cst_72 : f32 to vector<8x8xf32>
    %109 = arith.mulf %107, %108 : vector<8x8xf32>
    %c3_73 = arith.constant 3 : index
    %c0_74 = arith.constant 0 : index
    %c0_75 = arith.constant 0 : index
    %110 = vector.load %arg21[%c3_73, %c0_74, %c0_75] : memref<4x8x8xbf16, #tpu.memory_space<vmem>>, vector<1x8x8xbf16>
    %111 = vector.shape_cast %110 : vector<1x8x8xbf16> to vector<8x8xbf16>
    %c3_76 = arith.constant 3 : index
    %c0_77 = arith.constant 0 : index
    %c0_78 = arith.constant 0 : index
    %112 = vector.load %arg22[%c3_76, %c0_77, %c0_78] : memref<4x8x8xbf16, #tpu.memory_space<vmem>>, vector<1x8x8xbf16>
    %113 = vector.shape_cast %112 : vector<1x8x8xbf16> to vector<8x8xbf16>
    %114 = arith.truncf %109 : vector<8x8xf32> to vector<8x8xbf16>
    %cst_79 = arith.constant dense<0.000000e+00> : vector<8x8xf32>
    %115 = tpu.matmul %114, %111, %cst_79 {dimension_numbers = #tpu.dot_dimension_numbers<[1], [1], [0], [0], [0, 0, 1, 0], [], []>} : vector<8x8xbf16>, vector<8x8xbf16>, vector<8x8xf32> -> vector<8x8xf32>
    %cst_80 = arith.constant dense<0xFF800000> : vector<8xf32>
    %116 = vector.multi_reduction <maximumf>, %115, %cst_80 [1] : vector<8x8xf32> to vector<8xf32>
    %117 = vector.shape_cast %116 : vector<8xf32> to vector<8x1xf32>
    %118 = vector.broadcast %117 : vector<8x1xf32> to vector<8x8xf32>
    %119 = arith.subf %115, %118 : vector<8x8xf32>
    %120 = math.exp %119 : vector<8x8xf32>
    %cst_81 = arith.constant dense<0.000000e+00> : vector<8xf32>
    %121 = vector.multi_reduction <add>, %120, %cst_81 [1] : vector<8x8xf32> to vector<8xf32>
    %122 = vector.shape_cast %121 : vector<8xf32> to vector<8x1xf32>
    %123 = tpu.reciprocal %122 {approx = true} : vector<8x1xf32> -> vector<8x1xf32>
    %124 = vector.broadcast %123 : vector<8x1xf32> to vector<8x8xf32>
    %125 = arith.mulf %120, %124 : vector<8x8xf32>
    %126 = arith.truncf %125 : vector<8x8xf32> to vector<8x8xbf16>
    %cst_82 = arith.constant dense<0.000000e+00> : vector<8x8xf32>
    %127 = tpu.matmul %126, %113, %cst_82 {dimension_numbers = #tpu.dot_dimension_numbers<[1], [0], [0], [1], [0, 0, 1, 1], [], []>} : vector<8x8xbf16>, vector<8x8xbf16>, vector<8x8xf32> -> vector<8x8xf32>
    %128 = arith.truncf %127 : vector<8x8xf32> to vector<8x8xbf16>
    %c3_83 = arith.constant 3 : index
    %c0_84 = arith.constant 0 : index
    %c0_85 = arith.constant 0 : index
    %129 = vector.load %arg10[%c3_83, %c0_84, %c0_85] : memref<4x8x32xbf16, #tpu.memory_space<vmem>>, vector<1x8x32xbf16>
    %130 = vector.shape_cast %129 : vector<1x8x32xbf16> to vector<8x32xbf16>
    %cst_86 = arith.constant dense<0.000000e+00> : vector<8x32xf32>
    %131 = tpu.matmul %128, %130, %cst_86 {dimension_numbers = #tpu.dot_dimension_numbers<[1], [0], [0], [1], [0, 0, 1, 1], [], []>} : vector<8x8xbf16>, vector<8x32xbf16>, vector<8x32xf32> -> vector<8x32xf32>
    %132 = arith.addf %100, %131 : vector<8x32xf32>
    %c0_87 = arith.constant 0 : index
    %c0_88 = arith.constant 0 : index
    %133 = vector.load %arg11[%c0_87, %c0_88] : memref<1x32xf32, #tpu.memory_space<vmem>>, vector<1x32xf32>
    %134 = vector.broadcast %133 : vector<1x32xf32> to vector<8x32xf32>
    %135 = arith.addf %132, %134 : vector<8x32xf32>
    %136 = arith.addf %135, %1 : vector<8x32xf32>
    %cst_89 = arith.constant dense<0.000000e+00> : vector<8xf32>
    %137 = vector.multi_reduction <add>, %136, %cst_89 [1] : vector<8x32xf32> to vector<8xf32>
    %138 = vector.shape_cast %137 : vector<8xf32> to vector<8x1xf32>
    %cst_90 = arith.constant 3.200000e+01 : f32
    %139 = vector.broadcast %cst_90 : f32 to vector<8x1xf32>
    %140 = arith.divf %138, %139 : vector<8x1xf32>
    %141 = vector.broadcast %140 : vector<8x1xf32> to vector<8x32xf32>
    %142 = arith.subf %136, %141 : vector<8x32xf32>
    %143 = arith.mulf %142, %142 : vector<8x32xf32>
    %cst_91 = arith.constant dense<0.000000e+00> : vector<8xf32>
    %144 = vector.multi_reduction <add>, %143, %cst_91 [1] : vector<8x32xf32> to vector<8xf32>
    %145 = vector.shape_cast %144 : vector<8xf32> to vector<8x1xf32>
    %cst_92 = arith.constant 3.200000e+01 : f32
    %146 = vector.broadcast %cst_92 : f32 to vector<8x1xf32>
    %147 = arith.divf %145, %146 : vector<8x1xf32>
    %c0_93 = arith.constant 0 : index
    %c0_94 = arith.constant 0 : index
    %148 = vector.load %arg12[%c0_93, %c0_94] : memref<1x32xf32, #tpu.memory_space<vmem>>, vector<1x32xf32>
    %149 = vector.broadcast %140 : vector<8x1xf32> to vector<8x32xf32>
    %150 = arith.subf %136, %149 : vector<8x32xf32>
    %151 = vector.broadcast %148 : vector<1x32xf32> to vector<8x32xf32>
    %152 = arith.mulf %151, %150 : vector<8x32xf32>
    %cst_95 = arith.constant 9.99999996E-13 : f32
    %153 = vector.broadcast %cst_95 : f32 to vector<8x1xf32>
    %154 = arith.addf %147, %153 : vector<8x1xf32>
    %155 = math.rsqrt %154 : vector<8x1xf32>
    %156 = vector.broadcast %155 : vector<8x1xf32> to vector<8x32xf32>
    %157 = arith.mulf %152, %156 : vector<8x32xf32>
    %c0_96 = arith.constant 0 : index
    %c0_97 = arith.constant 0 : index
    %158 = vector.load %arg13[%c0_96, %c0_97] : memref<1x32xf32, #tpu.memory_space<vmem>>, vector<1x32xf32>
    %159 = vector.broadcast %158 : vector<1x32xf32> to vector<8x32xf32>
    %160 = arith.addf %157, %159 : vector<8x32xf32>
    %161 = arith.truncf %160 : vector<8x32xf32> to vector<8x32xbf16>
    %c0_98 = arith.constant 0 : index
    %c0_99 = arith.constant 0 : index
    %162 = vector.load %arg14[%c0_98, %c0_99] : memref<32x64xbf16, #tpu.memory_space<vmem>>, vector<32x64xbf16>
    %cst_100 = arith.constant dense<0.000000e+00> : vector<8x64xf32>
    %163 = tpu.matmul %161, %162, %cst_100 {dimension_numbers = #tpu.dot_dimension_numbers<[1], [0], [0], [1], [0, 0, 1, 1], [], []>} : vector<8x32xbf16>, vector<32x64xbf16>, vector<8x64xf32> -> vector<8x64xf32>
    %c0_101 = arith.constant 0 : index
    %c0_102 = arith.constant 0 : index
    %164 = vector.load %arg15[%c0_101, %c0_102] : memref<1x64xf32, #tpu.memory_space<vmem>>, vector<1x64xf32>
    %165 = vector.broadcast %164 : vector<1x64xf32> to vector<8x64xf32>
    %166 = arith.addf %163, %165 : vector<8x64xf32>
    %cst_103 = arith.constant 0.000000e+00 : f32
    %167 = vector.broadcast %cst_103 : f32 to vector<8x64xf32>
    %168 = arith.maximumf %166, %167 : vector<8x64xf32>
    %169 = arith.truncf %168 : vector<8x64xf32> to vector<8x64xbf16>
    %c0_104 = arith.constant 0 : index
    %c0_105 = arith.constant 0 : index
    %170 = vector.load %arg16[%c0_104, %c0_105] : memref<64x32xbf16, #tpu.memory_space<vmem>>, vector<64x32xbf16>
    %cst_106 = arith.constant dense<0.000000e+00> : vector<8x32xf32>
    %171 = tpu.matmul %169, %170, %cst_106 {dimension_numbers = #tpu.dot_dimension_numbers<[1], [0], [0], [1], [0, 0, 1, 1], [], []>} : vector<8x64xbf16>, vector<64x32xbf16>, vector<8x32xf32> -> vector<8x32xf32>
    %c0_107 = arith.constant 0 : index
    %c0_108 = arith.constant 0 : index
    %172 = vector.load %arg17[%c0_107, %c0_108] : memref<1x32xf32, #tpu.memory_space<vmem>>, vector<1x32xf32>
    %173 = vector.broadcast %172 : vector<1x32xf32> to vector<8x32xf32>
    %174 = arith.addf %171, %173 : vector<8x32xf32>
    %175 = arith.addf %174, %160 : vector<8x32xf32>
    %cst_109 = arith.constant dense<0.000000e+00> : vector<8xf32>
    %176 = vector.multi_reduction <add>, %175, %cst_109 [1] : vector<8x32xf32> to vector<8xf32>
    %177 = vector.shape_cast %176 : vector<8xf32> to vector<8x1xf32>
    %cst_110 = arith.constant 3.200000e+01 : f32
    %178 = vector.broadcast %cst_110 : f32 to vector<8x1xf32>
    %179 = arith.divf %177, %178 : vector<8x1xf32>
    %180 = vector.broadcast %179 : vector<8x1xf32> to vector<8x32xf32>
    %181 = arith.subf %175, %180 : vector<8x32xf32>
    %182 = arith.mulf %181, %181 : vector<8x32xf32>
    %cst_111 = arith.constant dense<0.000000e+00> : vector<8xf32>
    %183 = vector.multi_reduction <add>, %182, %cst_111 [1] : vector<8x32xf32> to vector<8xf32>
    %184 = vector.shape_cast %183 : vector<8xf32> to vector<8x1xf32>
    %cst_112 = arith.constant 3.200000e+01 : f32
    %185 = vector.broadcast %cst_112 : f32 to vector<8x1xf32>
    %186 = arith.divf %184, %185 : vector<8x1xf32>
    %c0_113 = arith.constant 0 : index
    %c0_114 = arith.constant 0 : index
    %187 = vector.load %arg18[%c0_113, %c0_114] : memref<1x32xf32, #tpu.memory_space<vmem>>, vector<1x32xf32>
    %188 = vector.broadcast %179 : vector<8x1xf32> to vector<8x32xf32>
    %189 = arith.subf %175, %188 : vector<8x32xf32>
    %190 = vector.broadcast %187 : vector<1x32xf32> to vector<8x32xf32>
    %191 = arith.mulf %190, %189 : vector<8x32xf32>
    %cst_115 = arith.constant 9.99999996E-13 : f32
    %192 = vector.broadcast %cst_115 : f32 to vector<8x1xf32>
    %193 = arith.addf %186, %192 : vector<8x1xf32>
    %194 = math.rsqrt %193 : vector<8x1xf32>
    %195 = vector.broadcast %194 : vector<8x1xf32> to vector<8x32xf32>
    %196 = arith.mulf %191, %195 : vector<8x32xf32>
    %c0_116 = arith.constant 0 : index
    %c0_117 = arith.constant 0 : index
    %197 = vector.load %arg19[%c0_116, %c0_117] : memref<1x32xf32, #tpu.memory_space<vmem>>, vector<1x32xf32>
    %198 = vector.broadcast %197 : vector<1x32xf32> to vector<8x32xf32>
    %199 = arith.addf %196, %198 : vector<8x32xf32>
    %c0_118 = arith.constant 0 : index
    %c0_119 = arith.constant 0 : index
    %c0_120 = arith.constant 0 : index
    %200 = vector.load %arg20[%c0_118, %c0_119, %c0_120] : memref<1x8x32xf32, #tpu.memory_space<vmem>>, vector<1x8x32xf32>
    %201 = vector.shape_cast %200 : vector<1x8x32xf32> to vector<8x32xf32>
    %202 = vector.shape_cast %199 : vector<8x32xf32> to vector<1x8x32xf32>
    tpu.vector_store %arg20[%c0_118, %c0_119, %c0_120], %202 {strides = array<i32>} : memref<1x8x32xf32, #tpu.memory_space<vmem>>, vector<1x8x32xf32>,
    return
  }
  func.func @transform_0(%arg0: i32, %arg1: i32) -> (i32, i32, i32) {
    %c0_i32 = arith.constant 0 : i32
    %c0_i32_0 = arith.constant 0 : i32
    return %arg0, %arg1, %c0_i32 : i32, i32, i32
  }
  func.func @transform_1(%arg0: i32, %arg1: i32) -> (i32, i32, i32) {
    %c0_i32 = arith.constant 0 : i32
    %c0_i32_0 = arith.constant 0 : i32
    %c0_i32_1 = arith.constant 0 : i32
    return %arg0, %c0_i32, %c0_i32_0 : i32, i32, i32
  }
  func.func @transform_2(%arg0: i32, %arg1: i32) -> (i32, i32, i32) {
    %c0_i32 = arith.constant 0 : i32
    %c0_i32_0 = arith.constant 0 : i32
    %c0_i32_1 = arith.constant 0 : i32
    %c0_i32_2 = arith.constant 0 : i32
    return %c0_i32, %c0_i32_0, %c0_i32_1 : i32, i32, i32
  }
  func.func @transform_3(%arg0: i32, %arg1: i32) -> (i32, i32, i32) {
    %c0_i32 = arith.constant 0 : i32
    %c0_i32_0 = arith.constant 0 : i32
    %c0_i32_1 = arith.constant 0 : i32
    %c0_i32_2 = arith.constant 0 : i32
    return %c0_i32, %c0_i32_0, %c0_i32_1 : i32, i32, i32
  }
  func.func @transform_4(%arg0: i32, %arg1: i32) -> (i32, i32, i32) {
    %c0_i32 = arith.constant 0 : i32
    %c0_i32_0 = arith.constant 0 : i32
    %c0_i32_1 = arith.constant 0 : i32
    %c0_i32_2 = arith.constant 0 : i32
    return %c0_i32, %c0_i32_0, %c0_i32_1 : i32, i32, i32
  }
  func.func @transform_5(%arg0: i32, %arg1: i32) -> (i32, i32, i32) {
    %c0_i32 = arith.constant 0 : i32
    %c0_i32_0 = arith.constant 0 : i32
    %c0_i32_1 = arith.constant 0 : i32
    %c0_i32_2 = arith.constant 0 : i32
    return %c0_i32, %c0_i32_0, %c0_i32_1 : i32, i32, i32
  }
  func.func @transform_6(%arg0: i32, %arg1: i32) -> (i32, i32, i32) {
    %c0_i32 = arith.constant 0 : i32
    %c0_i32_0 = arith.constant 0 : i32
    %c0_i32_1 = arith.constant 0 : i32
    %c0_i32_2 = arith.constant 0 : i32
    return %c0_i32, %c0_i32_0, %c0_i32_1 : i32, i32, i32
  }
  func.func @transform_7(%arg0: i32, %arg1: i32) -> (i32, i32, i32) {
    %c0_i32 = arith.constant 0 : i32
    %c0_i32_0 = arith.constant 0 : i32
    %c0_i32_1 = arith.constant 0 : i32
    %c0_i32_2 = arith.constant 0 : i32
    return %c0_i32, %c0_i32_0, %c0_i32_1 : i32, i32, i32
  }
  func.func @transform_8(%arg0: i32, %arg1: i32) -> (i32, i32, i32) {
    %c0_i32 = arith.constant 0 : i32
    %c0_i32_0 = arith.constant 0 : i32
    %c0_i32_1 = arith.constant 0 : i32
    %c0_i32_2 = arith.constant 0 : i32
    return %c0_i32, %c0_i32_0, %c0_i32_1 : i32, i32, i32
  }
  func.func @transform_9(%arg0: i32, %arg1: i32) -> (i32, i32) {
    %c0_i32 = arith.constant 0 : i32
    %c0_i32_0 = arith.constant 0 : i32
    %c0_i32_1 = arith.constant 0 : i32
    return %c0_i32, %c0_i32_0 : i32, i32
  }
  func.func @transform_10(%arg0: i32, %arg1: i32) -> (i32, i32) {
    %c0_i32 = arith.constant 0 : i32
    %c0_i32_0 = arith.constant 0 : i32
    %c0_i32_1 = arith.constant 0 : i32
    return %c0_i32, %c0_i32_0 : i32, i32
  }
  func.func @transform_11(%arg0: i32, %arg1: i32) -> (i32, i32) {
    %c0_i32 = arith.constant 0 : i32
    %c0_i32_0 = arith.constant 0 : i32
    %c0_i32_1 = arith.constant 0 : i32
    return %c0_i32, %c0_i32_0 : i32, i32
  }
  func.func @transform_12(%arg0: i32, %arg1: i32) -> (i32, i32) {
    %c0_i32 = arith.constant 0 : i32
    %c0_i32_0 = arith.constant 0 : i32
    %c0_i32_1 = arith.constant 0 : i32
    return %c0_i32, %c0_i32_0 : i32, i32
  }
  func.func @transform_13(%arg0: i32, %arg1: i32) -> (i32, i32) {
    %c0_i32 = arith.constant 0 : i32
    %c0_i32_0 = arith.constant 0 : i32
    %c0_i32_1 = arith.constant 0 : i32
    return %c0_i32, %c0_i32_0 : i32, i32
  }
  func.func @transform_14(%arg0: i32, %arg1: i32) -> (i32, i32) {
    %c0_i32 = arith.constant 0 : i32
    %c0_i32_0 = arith.constant 0 : i32
    %c0_i32_1 = arith.constant 0 : i32
    return %c0_i32, %c0_i32_0 : i32, i32
  }
  func.func @transform_15(%arg0: i32, %arg1: i32) -> (i32, i32) {
    %c0_i32 = arith.constant 0 : i32
    %c0_i32_0 = arith.constant 0 : i32
    %c0_i32_1 = arith.constant 0 : i32
    return %c0_i32, %c0_i32_0 : i32, i32
  }
  func.func @transform_16(%arg0: i32, %arg1: i32) -> (i32, i32) {
    %c0_i32 = arith.constant 0 : i32
    %c0_i32_0 = arith.constant 0 : i32
    %c0_i32_1 = arith.constant 0 : i32
    return %c0_i32, %c0_i32_0 : i32, i32
  }
  func.func @transform_17(%arg0: i32, %arg1: i32) -> (i32, i32) {
    %c0_i32 = arith.constant 0 : i32
    %c0_i32_0 = arith.constant 0 : i32
    %c0_i32_1 = arith.constant 0 : i32
    return %c0_i32, %c0_i32_0 : i32, i32
  }
  func.func @transform_18(%arg0: i32, %arg1: i32) -> (i32, i32, i32) {
    %c0_i32 = arith.constant 0 : i32
    %c0_i32_0 = arith.constant 0 : i32
    return %arg0, %arg1, %c0_i32 : i32, i32, i32
  }
}

module attributes {stable_mosaic.version = 11 : i64} {
  func.func @encoder_layer_kernel(%arg0: i32, %arg1: i32, %arg2: memref<1x8x32xf32, #tpu.memory_space<vmem>>, %arg3: memref<1x8x32xbf16, #tpu.memory_space<vmem>>, %arg4: memref<4x32x8xbf16, #tpu.memory_space<vmem>>, %arg5: memref<4x1x8xf32, #tpu.memory_space<vmem>>, %arg6: memref<4x32x8xbf16, #tpu.memory_space<vmem>>, %arg7: memref<4x1x8xf32, #tpu.memory_space<vmem>>, %arg8: memref<4x32x8xbf16, #tpu.memory_space<vmem>>, %arg9: memref<4x1x8xf32, #tpu.memory_space<vmem>>, %arg10: memref<4x8x32xbf16, #tpu.memory_space<vmem>>, %arg11: memref<1x32xf32, #tpu.memory_space<vmem>>, %arg12: memref<1x32xf32, #tpu.memory_space<vmem>>, %arg13: memref<1x32xf32, #tpu.memory_space<vmem>>, %arg14: memref<32x64xbf16, #tpu.memory_space<vmem>>, %arg15: memref<1x64xf32, #tpu.memory_space<vmem>>, %arg16: memref<64x32xbf16, #tpu.memory_space<vmem>>, %arg17: memref<1x32xf32, #tpu.memory_space<vmem>>, %arg18: memref<1x32xf32, #tpu.memory_space<vmem>>, %arg19: memref<1x32xf32, #tpu.memory_space<vmem>>, %arg20: memref<1x8x32xf32, #tpu.memory_space<vmem>>, %arg21: memref<4x8x8xbf16, #tpu.memory_space<vmem>>, %arg22: memref<4x8x8xbf16, #tpu.memory_space<vmem>>) attributes {dimension_semantics = [#tpu.dimension_semantics<parallel>, #tpu.dimension_semantics<arbitrary>], iteration_bounds = array<i64: 2, 1>, scalar_prefetch = 0 : i64, scratch_operands = 2 : i64, tpu.core_type = #tpu.core_type<tc>, window_params = [{transform_indices = @transform_0, window_bounds = array<i64: 1, 8, 32>}, {transform_indices = @transform_1, window_bounds = array<i64: 1, 8, 32>}, {pipeline_mode = #tpu.pipeline_mode<synchronous>, transform_indices = @transform_2, window_bounds = array<i64: 4, 32, 8>}, {pipeline_mode = #tpu.pipeline_mode<synchronous>, transform_indices = @transform_3, window_bounds = array<i64: 4, 1, 8>}, {pipeline_mode = #tpu.pipeline_mode<synchronous>, transform_indices = @transform_4, window_bounds = array<i64: 4, 32, 8>}, {pipeline_mode = #tpu.pipeline_mode<synchronous>, transform_indices = @transform_5, window_bounds = array<i64: 4, 1, 8>}, {pipeline_mode = #tpu.pipeline_mode<synchronous>, transform_indices = @transform_6, window_bounds = array<i64: 4, 32, 8>}, {pipeline_mode = #tpu.pipeline_mode<synchronous>, transform_indices = @transform_7, window_bounds = array<i64: 4, 1, 8>}, {pipeline_mode = #tpu.pipeline_mode<synchronous>, transform_indices = @transform_8, window_bounds = array<i64: 4, 8, 32>}, {pipeline_mode = #tpu.pipeline_mode<synchronous>, transform_indices = @transform_9, window_bounds = array<i64: 1, 32>}, {pipeline_mode = #tpu.pipeline_mode<synchronous>, transform_indices = @transform_10, window_bounds = array<i64: 1, 32>}, {pipeline_mode = #tpu.pipeline_mode<synchronous>, transform_indices = @transform_11, window_bounds = array<i64: 1, 32>}, {pipeline_mode = #tpu.pipeline_mode<synchronous>, transform_indices = @transform_12, window_bounds = array<i64: 32, 64>}, {pipeline_mode = #tpu.pipeline_mode<synchronous>, transform_indices = @transform_13, window_bounds = array<i64: 1, 64>}, {pipeline_mode = #tpu.pipeline_mode<synchronous>, transform_indices = @transform_14, window_bounds = array<i64: 64, 32>}, {pipeline_mode = #tpu.pipeline_mode<synchronous>, transform_indices = @transform_15, window_bounds = array<i64: 1, 32>}, {pipeline_mode = #tpu.pipeline_mode<synchronous>, transform_indices = @transform_16, window_bounds = array<i64: 1, 32>}, {pipeline_mode = #tpu.pipeline_mode<synchronous>, transform_indices = @transform_17, window_bounds = array<i64: 1, 32>}, {transform_indices = @transform_18, window_bounds = array<i64: 1, 8, 32>}]} {
    %c0 = arith.constant 0 : index
    %c0_0 = arith.constant 0 : index
    %c0_1 = arith.constant 0 : index
    %0 = vector.load %arg2[%c0, %c0_0, %c0_1] : memref<1x8x32xf32, #tpu.memory_space<vmem>>, vector<1x8x32xf32>
    %1 = vector.shape_cast %0 : vector<1x8x32xf32> to vector<8x32xf32>
    %c0_i32 = arith.constant 0 : i32
    %2 = arith.cmpi eq, %arg1, %c0_i32 : i32
    %3 = arith.extui %2 : i1 to i32
    %c0_i32_2 = arith.constant 0 : i32
    %4 = arith.cmpi ne, %3, %c0_i32_2 : i32
    scf.if %4 {
      %c0_121 = arith.constant 0 : index
      %c0_122 = arith.constant 0 : index
      %c0_123 = arith.constant 0 : index
      %203 = vector.load %arg3[%c0_121, %c0_122, %c0_123] : memref<1x8x32xbf16, #tpu.memory_space<vmem>>, vector<1x8x32xbf16>
      %204 = vector.shape_cast %203 : vector<1x8x32xbf16> to vector<8x32xbf16>
      %c0_124 = arith.constant 0 : index
      %c0_125 = arith.constant 0 : index
      %c0_126 = arith.constant 0 : index
      %205 = vector.load %arg6[%c0_124, %c0_125, %c0_126] : memref<4x32x8xbf16, #tpu.memory_space<vmem>>, vector<1x32x8xbf16>
      %206 = vector.shape_cast %205 : vector<1x32x8xbf16> to vector<32x8xbf16>
      %cst_127 = arith.constant dense<0.000000e+00> : vector<8x8xf32>
      %207 = tpu.matmul %204, %206, %cst_127 {dimension_numbers = #tpu.dot_dimension_numbers<[1], [0], [0], [1], [0, 0, 1, 1], [], []>} : vector<8x32xbf16>, vector<32x8xbf16>, vector<8x8xf32> -> vector<8x8xf32>
      %c0_128 = arith.constant 0 : index
      %c0_129 = arith.constant 0 : index
      %c0_130 = arith.constant 0 : index
      %208 = vector.load %arg7[%c0_128, %c0_129, %c0_130] : memref<4x1x8xf32, #tpu.memory_space<vmem>>, vector<1x1x8xf32>
      %209 = vector.shape_cast %208 : vector<1x1x8xf32> to vector<1x8xf32>
      %210 = vector.broadcast %209 : vector<1x8xf32> to vector<8x8xf32>
      %211 = arith.addf %207, %210 : vector<8x8xf32>
      %212 = arith.truncf %211 : vector<8x8xf32> to vector<8x8xbf16>
      %c0_131 = arith.constant 0 : index
      %c0_132 = arith.constant 0 : index
      %c0_133 = arith.constant 0 : index
      %213 = vector.load %arg21[%c0_131, %c0_132, %c0_133] : memref<4x8x8xbf16, #tpu.memory_space<vmem>>, vector<1x8x8xbf16>
      %214 = vector.shape_cast %213 : vector<1x8x8xbf16> to vector<8x8xbf16>
      %215 = vector.shape_cast %212 : vector<8x8xbf16> to vector<1x8x8xbf16>
      tpu.vector_store %arg21[%c0_131, %c0_132, %c0_133], %215 {strides = array<i32>} : memref<4x8x8xbf16, #tpu.memory_space<vmem>>, vector<1x8x8xbf16>,
      %c0_134 = arith.constant 0 : index
      %c0_135 = arith.constant 0 : index
      %c0_136 = arith.constant 0 : index
      %216 = vector.load %arg8[%c0_134, %c0_135, %c0_136] : memref<4x32x8xbf16, #tpu.memory_space<vmem>>, vector<1x32x8xbf16>
      %217 = vector.shape_cast %216 : vector<1x32x8xbf16> to vector<32x8xbf16>
      %cst_137 = arith.constant dense<0.000000e+00> : vector<8x8xf32>
      %218 = tpu.matmul %204, %217, %cst_137 {dimension_numbers = #tpu.dot_dimension_numbers<[1], [0], [0], [1], [0, 0, 1, 1], [], []>} : vector<8x32xbf16>, vector<32x8xbf16>, vector<8x8xf32> -> vector<8x8xf32>
      %c0_138 = arith.constant 0 : index
      %c0_139 = arith.constant 0 : index
      %c0_140 = arith.constant 0 : index
      %219 = vector.load %arg9[%c0_138, %c0_139, %c0_140] : memref<4x1x8xf32, #tpu.memory_space<vmem>>, vector<1x1x8xf32>
      %220 = vector.shape_cast %219 : vector<1x1x8xf32> to vector<1x8xf32>
      %221 = vector.broadcast %220 : vector<1x8xf32> to vector<8x8xf32>
      %222 = arith.addf %218, %221 : vector<8x8xf32>
      %223 = arith.truncf %222 : vector<8x8xf32> to vector<8x8xbf16>
      %c0_141 = arith.constant 0 : index
      %c0_142 = arith.constant 0 : index
      %c0_143 = arith.constant 0 : index
      %224 = vector.load %arg22[%c0_141, %c0_142, %c0_143] : memref<4x8x8xbf16, #tpu.memory_space<vmem>>, vector<1x8x8xbf16>
      %225 = vector.shape_cast %224 : vector<1x8x8xbf16> to vector<8x8xbf16>
      %226 = vector.shape_cast %223 : vector<8x8xbf16> to vector<1x8x8xbf16>
      tpu.vector_store %arg22[%c0_141, %c0_142, %c0_143], %226 {strides = array<i32>} : memref<4x8x8xbf16, #tpu.memory_space<vmem>>, vector<1x8x8xbf16>,
      %c1_144 = arith.constant 1 : index
      %c0_145 = arith.constant 0 : index
      %c0_146 = arith.constant 0 : index
      %227 = vector.load %arg6[%c1_144, %c0_145, %c0_146] : memref<4x32x8xbf16, #tpu.memory_space<vmem>>, vector<1x32x8xbf16>
      %228 = vector.shape_cast %227 : vector<1x32x8xbf16> to vector<32x8xbf16>
      %cst_147 = arith.constant dense<0.000000e+00> : vector<8x8xf32>
      %229 = tpu.matmul %204, %228, %cst_147 {dimension_numbers = #tpu.dot_dimension_numbers<[1], [0], [0], [1], [0, 0, 1, 1], [], []>} : vector<8x32xbf16>, vector<32x8xbf16>, vector<8x8xf32> -> vector<8x8xf32>
      %c1_148 = arith.constant 1 : index
      %c0_149 = arith.constant 0 : index
      %c0_150 = arith.constant 0 : index
      %230 = vector.load %arg7[%c1_148, %c0_149, %c0_150] : memref<4x1x8xf32, #tpu.memory_space<vmem>>, vector<1x1x8xf32>
      %231 = vector.shape_cast %230 : vector<1x1x8xf32> to vector<1x8xf32>
      %232 = vector.broadcast %231 : vector<1x8xf32> to vector<8x8xf32>
      %233 = arith.addf %229, %232 : vector<8x8xf32>
      %234 = arith.truncf %233 : vector<8x8xf32> to vector<8x8xbf16>
      %c1_151 = arith.constant 1 : index
      %c0_152 = arith.constant 0 : index
      %c0_153 = arith.constant 0 : index
      %235 = vector.load %arg21[%c1_151, %c0_152, %c0_153] : memref<4x8x8xbf16, #tpu.memory_space<vmem>>, vector<1x8x8xbf16>
      %236 = vector.shape_cast %235 : vector<1x8x8xbf16> to vector<8x8xbf16>
      %237 = vector.shape_cast %234 : vector<8x8xbf16> to vector<1x8x8xbf16>
      tpu.vector_store %arg21[%c1_151, %c0_152, %c0_153], %237 {strides = array<i32>} : memref<4x8x8xbf16, #tpu.memory_space<vmem>>, vector<1x8x8xbf16>,
      %c1_154 = arith.constant 1 : index
      %c0_155 = arith.constant 0 : index
      %c0_156 = arith.constant 0 : index
      %238 = vector.load %arg8[%c1_154, %c0_155, %c0_156] : memref<4x32x8xbf16, #tpu.memory_space<vmem>>, vector<1x32x8xbf16>
      %239 = vector.shape_cast %238 : vector<1x32x8xbf16> to vector<32x8xbf16>
      %cst_157 = arith.constant dense<0.000000e+00> : vector<8x8xf32>
      %240 = tpu.matmul %204, %239, %cst_157 {dimension_numbers = #tpu.dot_dimension_numbers<[1], [0], [0], [1], [0, 0, 1, 1], [], []>} : vector<8x32xbf16>, vector<32x8xbf16>, vector<8x8xf32> -> vector<8x8xf32>
      %c1_158 = arith.constant 1 : index
      %c0_159 = arith.constant 0 : index
      %c0_160 = arith.constant 0 : index
      %241 = vector.load %arg9[%c1_158, %c0_159, %c0_160] : memref<4x1x8xf32, #tpu.memory_space<vmem>>, vector<1x1x8xf32>
      %242 = vector.shape_cast %241 : vector<1x1x8xf32> to vector<1x8xf32>
      %243 = vector.broadcast %242 : vector<1x8xf32> to vector<8x8xf32>
      %244 = arith.addf %240, %243 : vector<8x8xf32>
      %245 = arith.truncf %244 : vector<8x8xf32> to vector<8x8xbf16>
      %c1_161 = arith.constant 1 : index
      %c0_162 = arith.constant 0 : index
      %c0_163 = arith.constant 0 : index
      %246 = vector.load %arg22[%c1_161, %c0_162, %c0_163] : memref<4x8x8xbf16, #tpu.memory_space<vmem>>, vector<1x8x8xbf16>
      %247 = vector.shape_cast %246 : vector<1x8x8xbf16> to vector<8x8xbf16>
      %248 = vector.shape_cast %245 : vector<8x8xbf16> to vector<1x8x8xbf16>
      tpu.vector_store %arg22[%c1_161, %c0_162, %c0_163], %248 {strides = array<i32>} : memref<4x8x8xbf16, #tpu.memory_space<vmem>>, vector<1x8x8xbf16>,
      %c2_164 = arith.constant 2 : index
      %c0_165 = arith.constant 0 : index
      %c0_166 = arith.constant 0 : index
      %249 = vector.load %arg6[%c2_164, %c0_165, %c0_166] : memref<4x32x8xbf16, #tpu.memory_space<vmem>>, vector<1x32x8xbf16>
      %250 = vector.shape_cast %249 : vector<1x32x8xbf16> to vector<32x8xbf16>
      %cst_167 = arith.constant dense<0.000000e+00> : vector<8x8xf32>
      %251 = tpu.matmul %204, %250, %cst_167 {dimension_numbers = #tpu.dot_dimension_numbers<[1], [0], [0], [1], [0, 0, 1, 1], [], []>} : vector<8x32xbf16>, vector<32x8xbf16>, vector<8x8xf32> -> vector<8x8xf32>
      %c2_168 = arith.constant 2 : index
      %c0_169 = arith.constant 0 : index
      %c0_170 = arith.constant 0 : index
      %252 = vector.load %arg7[%c2_168, %c0_169, %c0_170] : memref<4x1x8xf32, #tpu.memory_space<vmem>>, vector<1x1x8xf32>
      %253 = vector.shape_cast %252 : vector<1x1x8xf32> to vector<1x8xf32>
      %254 = vector.broadcast %253 : vector<1x8xf32> to vector<8x8xf32>
      %255 = arith.addf %251, %254 : vector<8x8xf32>
      %256 = arith.truncf %255 : vector<8x8xf32> to vector<8x8xbf16>
      %c2_171 = arith.constant 2 : index
      %c0_172 = arith.constant 0 : index
      %c0_173 = arith.constant 0 : index
      %257 = vector.load %arg21[%c2_171, %c0_172, %c0_173] : memref<4x8x8xbf16, #tpu.memory_space<vmem>>, vector<1x8x8xbf16>
      %258 = vector.shape_cast %257 : vector<1x8x8xbf16> to vector<8x8xbf16>
      %259 = vector.shape_cast %256 : vector<8x8xbf16> to vector<1x8x8xbf16>
      tpu.vector_store %arg21[%c2_171, %c0_172, %c0_173], %259 {strides = array<i32>} : memref<4x8x8xbf16, #tpu.memory_space<vmem>>, vector<1x8x8xbf16>,
      %c2_174 = arith.constant 2 : index
      %c0_175 = arith.constant 0 : index
      %c0_176 = arith.constant 0 : index
      %260 = vector.load %arg8[%c2_174, %c0_175, %c0_176] : memref<4x32x8xbf16, #tpu.memory_space<vmem>>, vector<1x32x8xbf16>
      %261 = vector.shape_cast %260 : vector<1x32x8xbf16> to vector<32x8xbf16>
      %cst_177 = arith.constant dense<0.000000e+00> : vector<8x8xf32>
      %262 = tpu.matmul %204, %261, %cst_177 {dimension_numbers = #tpu.dot_dimension_numbers<[1], [0], [0], [1], [0, 0, 1, 1], [], []>} : vector<8x32xbf16>, vector<32x8xbf16>, vector<8x8xf32> -> vector<8x8xf32>
      %c2_178 = arith.constant 2 : index
      %c0_179 = arith.constant 0 : index
      %c0_180 = arith.constant 0 : index
      %263 = vector.load %arg9[%c2_178, %c0_179, %c0_180] : memref<4x1x8xf32, #tpu.memory_space<vmem>>, vector<1x1x8xf32>
      %264 = vector.shape_cast %263 : vector<1x1x8xf32> to vector<1x8xf32>
      %265 = vector.broadcast %264 : vector<1x8xf32> to vector<8x8xf32>
      %266 = arith.addf %262, %265 : vector<8x8xf32>
      %267 = arith.truncf %266 : vector<8x8xf32> to vector<8x8xbf16>
      %c2_181 = arith.constant 2 : index
      %c0_182 = arith.constant 0 : index
      %c0_183 = arith.constant 0 : index
      %268 = vector.load %arg22[%c2_181, %c0_182, %c0_183] : memref<4x8x8xbf16, #tpu.memory_space<vmem>>, vector<1x8x8xbf16>
      %269 = vector.shape_cast %268 : vector<1x8x8xbf16> to vector<8x8xbf16>
      %270 = vector.shape_cast %267 : vector<8x8xbf16> to vector<1x8x8xbf16>
      tpu.vector_store %arg22[%c2_181, %c0_182, %c0_183], %270 {strides = array<i32>} : memref<4x8x8xbf16, #tpu.memory_space<vmem>>, vector<1x8x8xbf16>,
      %c3_184 = arith.constant 3 : index
      %c0_185 = arith.constant 0 : index
      %c0_186 = arith.constant 0 : index
      %271 = vector.load %arg6[%c3_184, %c0_185, %c0_186] : memref<4x32x8xbf16, #tpu.memory_space<vmem>>, vector<1x32x8xbf16>
      %272 = vector.shape_cast %271 : vector<1x32x8xbf16> to vector<32x8xbf16>
      %cst_187 = arith.constant dense<0.000000e+00> : vector<8x8xf32>
      %273 = tpu.matmul %204, %272, %cst_187 {dimension_numbers = #tpu.dot_dimension_numbers<[1], [0], [0], [1], [0, 0, 1, 1], [], []>} : vector<8x32xbf16>, vector<32x8xbf16>, vector<8x8xf32> -> vector<8x8xf32>
      %c3_188 = arith.constant 3 : index
      %c0_189 = arith.constant 0 : index
      %c0_190 = arith.constant 0 : index
      %274 = vector.load %arg7[%c3_188, %c0_189, %c0_190] : memref<4x1x8xf32, #tpu.memory_space<vmem>>, vector<1x1x8xf32>
      %275 = vector.shape_cast %274 : vector<1x1x8xf32> to vector<1x8xf32>
      %276 = vector.broadcast %275 : vector<1x8xf32> to vector<8x8xf32>
      %277 = arith.addf %273, %276 : vector<8x8xf32>
      %278 = arith.truncf %277 : vector<8x8xf32> to vector<8x8xbf16>
      %c3_191 = arith.constant 3 : index
      %c0_192 = arith.constant 0 : index
      %c0_193 = arith.constant 0 : index
      %279 = vector.load %arg21[%c3_191, %c0_192, %c0_193] : memref<4x8x8xbf16, #tpu.memory_space<vmem>>, vector<1x8x8xbf16>
      %280 = vector.shape_cast %279 : vector<1x8x8xbf16> to vector<8x8xbf16>
      %281 = vector.shape_cast %278 : vector<8x8xbf16> to vector<1x8x8xbf16>
      tpu.vector_store %arg21[%c3_191, %c0_192, %c0_193], %281 {strides = array<i32>} : memref<4x8x8xbf16, #tpu.memory_space<vmem>>, vector<1x8x8xbf16>,
      %c3_194 = arith.constant 3 : index
      %c0_195 = arith.constant 0 : index
      %c0_196 = arith.constant 0 : index
      %282 = vector.load %arg8[%c3_194, %c0_195, %c0_196] : memref<4x32x8xbf16, #tpu.memory_space<vmem>>, vector<1x32x8xbf16>
      %283 = vector.shape_cast %282 : vector<1x32x8xbf16> to vector<32x8xbf16>
      %cst_197 = arith.constant dense<0.000000e+00> : vector<8x8xf32>
      %284 = tpu.matmul %204, %283, %cst_197 {dimension_numbers = #tpu.dot_dimension_numbers<[1], [0], [0], [1], [0, 0, 1, 1], [], []>} : vector<8x32xbf16>, vector<32x8xbf16>, vector<8x8xf32> -> vector<8x8xf32>
      %c3_198 = arith.constant 3 : index
      %c0_199 = arith.constant 0 : index
      %c0_200 = arith.constant 0 : index
      %285 = vector.load %arg9[%c3_198, %c0_199, %c0_200] : memref<4x1x8xf32, #tpu.memory_space<vmem>>, vector<1x1x8xf32>
      %286 = vector.shape_cast %285 : vector<1x1x8xf32> to vector<1x8xf32>
      %287 = vector.broadcast %286 : vector<1x8xf32> to vector<8x8xf32>
      %288 = arith.addf %284, %287 : vector<8x8xf32>
      %289 = arith.truncf %288 : vector<8x8xf32> to vector<8x8xbf16>
      %c3_201 = arith.constant 3 : index
      %c0_202 = arith.constant 0 : index
      %c0_203 = arith.constant 0 : index
      %290 = vector.load %arg22[%c3_201, %c0_202, %c0_203] : memref<4x8x8xbf16, #tpu.memory_space<vmem>>, vector<1x8x8xbf16>
      %291 = vector.shape_cast %290 : vector<1x8x8xbf16> to vector<8x8xbf16>
      %292 = vector.shape_cast %289 : vector<8x8xbf16> to vector<1x8x8xbf16>
      tpu.vector_store %arg22[%c3_201, %c0_202, %c0_203], %292 {strides = array<i32>} : memref<4x8x8xbf16, #tpu.memory_space<vmem>>, vector<1x8x8xbf16>,
    } else {
    }
    %5 = arith.truncf %1 : vector<8x32xf32> to vector<8x32xbf16>
    %c0_3 = arith.constant 0 : index
    %c0_4 = arith.constant 0 : index
    %c0_5 = arith.constant 0 : index
    %6 = vector.load %arg4[%c0_3, %c0_4, %c0_5] : memref<4x32x8xbf16, #tpu.memory_space<vmem>>, vector<1x32x8xbf16>
    %7 = vector.shape_cast %6 : vector<1x32x8xbf16> to vector<32x8xbf16>
    %cst = arith.constant dense<0.000000e+00> : vector<8x8xf32>
    %8 = tpu.matmul %5, %7, %cst {dimension_numbers = #tpu.dot_dimension_numbers<[1], [0], [0], [1], [0, 0, 1, 1], [], []>} : vector<8x32xbf16>, vector<32x8xbf16>, vector<8x8xf32> -> vector<8x8xf32>
    %c0_6 = arith.constant 0 : index
    %c0_7 = arith.constant 0 : index
    %c0_8 = arith.constant 0 : index
    %9 = vector.load %arg5[%c0_6, %c0_7, %c0_8] : memref<4x1x8xf32, #tpu.memory_space<vmem>>, vector<1x1x8xf32>
    %10 = vector.shape_cast %9 : vector<1x1x8xf32> to vector<1x8xf32>
    %11 = vector.broadcast %10 : vector<1x8xf32> to vector<8x8xf32>
    %12 = arith.addf %8, %11 : vector<8x8xf32>
    %cst_9 = arith.constant 0.353553385 : f32
    %13 = vector.broadcast %cst_9 : f32 to vector<8x8xf32>
    %14 = arith.mulf %12, %13 : vector<8x8xf32>
    %c0_10 = arith.constant 0 : index
    %c0_11 = arith.constant 0 : index
    %c0_12 = arith.constant 0 : index
    %15 = vector.load %arg21[%c0_10, %c0_11, %c0_12] : memref<4x8x8xbf16, #tpu.memory_space<vmem>>, vector<1x8x8xbf16>
    %16 = vector.shape_cast %15 : vector<1x8x8xbf16> to vector<8x8xbf16>
    %c0_13 = arith.constant 0 : index
    %c0_14 = arith.constant 0 : index
    %c0_15 = arith.constant 0 : index
    %17 = vector.load %arg22[%c0_13, %c0_14, %c0_15] : memref<4x8x8xbf16, #tpu.memory_space<vmem>>, vector<1x8x8xbf16>
    %18 = vector.shape_cast %17 : vector<1x8x8xbf16> to vector<8x8xbf16>
    %19 = arith.truncf %14 : vector<8x8xf32> to vector<8x8xbf16>
    %cst_16 = arith.constant dense<0.000000e+00> : vector<8x8xf32>
    %20 = tpu.matmul %19, %16, %cst_16 {dimension_numbers = #tpu.dot_dimension_numbers<[1], [1], [0], [0], [0, 0, 1, 0], [], []>} : vector<8x8xbf16>, vector<8x8xbf16>, vector<8x8xf32> -> vector<8x8xf32>
    %cst_17 = arith.constant dense<0xFF800000> : vector<8xf32>
    %21 = vector.multi_reduction <maximumf>, %20, %cst_17 [1] : vector<8x8xf32> to vector<8xf32>
    %22 = vector.shape_cast %21 : vector<8xf32> to vector<8x1xf32>
    %23 = vector.broadcast %22 : vector<8x1xf32> to vector<8x8xf32>
    %24 = arith.subf %20, %23 : vector<8x8xf32>
    %25 = math.exp %24 : vector<8x8xf32>
    %cst_18 = arith.constant dense<0.000000e+00> : vector<8xf32>
    %26 = vector.multi_reduction <add>, %25, %cst_18 [1] : vector<8x8xf32> to vector<8xf32>
    %27 = vector.shape_cast %26 : vector<8xf32> to vector<8x1xf32>
    %28 = tpu.reciprocal %27 {approx = true} : vector<8x1xf32> -> vector<8x1xf32>
    %29 = vector.broadcast %28 : vector<8x1xf32> to vector<8x8xf32>
    %30 = arith.mulf %25, %29 : vector<8x8xf32>
    %31 = arith.truncf %30 : vector<8x8xf32> to vector<8x8xbf16>
    %cst_19 = arith.constant dense<0.000000e+00> : vector<8x8xf32>
    %32 = tpu.matmul %31, %18, %cst_19 {dimension_numbers = #tpu.dot_dimension_numbers<[1], [0], [0], [1], [0, 0, 1, 1], [], []>} : vector<8x8xbf16>, vector<8x8xbf16>, vector<8x8xf32> -> vector<8x8xf32>
    %33 = arith.truncf %32 : vector<8x8xf32> to vector<8x8xbf16>
    %c0_20 = arith.constant 0 : index
    %c0_21 = arith.constant 0 : index
    %c0_22 = arith.constant 0 : index
    %34 = vector.load %arg10[%c0_20, %c0_21, %c0_22] : memref<4x8x32xbf16, #tpu.memory_space<vmem>>, vector<1x8x32xbf16>
    %35 = vector.shape_cast %34 : vector<1x8x32xbf16> to vector<8x32xbf16>
    %cst_23 = arith.constant dense<0.000000e+00> : vector<8x32xf32>
    %36 = tpu.matmul %33, %35, %cst_23 {dimension_numbers = #tpu.dot_dimension_numbers<[1], [0], [0], [1], [0, 0, 1, 1], [], []>} : vector<8x8xbf16>, vector<8x32xbf16>, vector<8x32xf32> -> vector<8x32xf32>
    %c1 = arith.constant 1 : index
    %c0_24 = arith.constant 0 : index
    %c0_25 = arith.constant 0 : index
    %37 = vector.load %arg4[%c1, %c0_24, %c0_25] : memref<4x32x8xbf16, #tpu.memory_space<vmem>>, vector<1x32x8xbf16>
    %38 = vector.shape_cast %37 : vector<1x32x8xbf16> to vector<32x8xbf16>
    %cst_26 = arith.constant dense<0.000000e+00> : vector<8x8xf32>
    %39 = tpu.matmul %5, %38, %cst_26 {dimension_numbers = #tpu.dot_dimension_numbers<[1], [0], [0], [1], [0, 0, 1, 1], [], []>} : vector<8x32xbf16>, vector<32x8xbf16>, vector<8x8xf32> -> vector<8x8xf32>
    %c1_27 = arith.constant 1 : index
    %c0_28 = arith.constant 0 : index
    %c0_29 = arith.constant 0 : index
    %40 = vector.load %arg5[%c1_27, %c0_28, %c0_29] : memref<4x1x8xf32, #tpu.memory_space<vmem>>, vector<1x1x8xf32>
    %41 = vector.shape_cast %40 : vector<1x1x8xf32> to vector<1x8xf32>
    %42 = vector.broadcast %41 : vector<1x8xf32> to vector<8x8xf32>
    %43 = arith.addf %39, %42 : vector<8x8xf32>
    %cst_30 = arith.constant 0.353553385 : f32
    %44 = vector.broadcast %cst_30 : f32 to vector<8x8xf32>
    %45 = arith.mulf %43, %44 : vector<8x8xf32>
    %c1_31 = arith.constant 1 : index
    %c0_32 = arith.constant 0 : index
    %c0_33 = arith.constant 0 : index
    %46 = vector.load %arg21[%c1_31, %c0_32, %c0_33] : memref<4x8x8xbf16, #tpu.memory_space<vmem>>, vector<1x8x8xbf16>
    %47 = vector.shape_cast %46 : vector<1x8x8xbf16> to vector<8x8xbf16>
    %c1_34 = arith.constant 1 : index
    %c0_35 = arith.constant 0 : index
    %c0_36 = arith.constant 0 : index
    %48 = vector.load %arg22[%c1_34, %c0_35, %c0_36] : memref<4x8x8xbf16, #tpu.memory_space<vmem>>, vector<1x8x8xbf16>
    %49 = vector.shape_cast %48 : vector<1x8x8xbf16> to vector<8x8xbf16>
    %50 = arith.truncf %45 : vector<8x8xf32> to vector<8x8xbf16>
    %cst_37 = arith.constant dense<0.000000e+00> : vector<8x8xf32>
    %51 = tpu.matmul %50, %47, %cst_37 {dimension_numbers = #tpu.dot_dimension_numbers<[1], [1], [0], [0], [0, 0, 1, 0], [], []>} : vector<8x8xbf16>, vector<8x8xbf16>, vector<8x8xf32> -> vector<8x8xf32>
    %cst_38 = arith.constant dense<0xFF800000> : vector<8xf32>
    %52 = vector.multi_reduction <maximumf>, %51, %cst_38 [1] : vector<8x8xf32> to vector<8xf32>
    %53 = vector.shape_cast %52 : vector<8xf32> to vector<8x1xf32>
    %54 = vector.broadcast %53 : vector<8x1xf32> to vector<8x8xf32>
    %55 = arith.subf %51, %54 : vector<8x8xf32>
    %56 = math.exp %55 : vector<8x8xf32>
    %cst_39 = arith.constant dense<0.000000e+00> : vector<8xf32>
    %57 = vector.multi_reduction <add>, %56, %cst_39 [1] : vector<8x8xf32> to vector<8xf32>
    %58 = vector.shape_cast %57 : vector<8xf32> to vector<8x1xf32>
    %59 = tpu.reciprocal %58 {approx = true} : vector<8x1xf32> -> vector<8x1xf32>
    %60 = vector.broadcast %59 : vector<8x1xf32> to vector<8x8xf32>
    %61 = arith.mulf %56, %60 : vector<8x8xf32>
    %62 = arith.truncf %61 : vector<8x8xf32> to vector<8x8xbf16>
    %cst_40 = arith.constant dense<0.000000e+00> : vector<8x8xf32>
    %63 = tpu.matmul %62, %49, %cst_40 {dimension_numbers = #tpu.dot_dimension_numbers<[1], [0], [0], [1], [0, 0, 1, 1], [], []>} : vector<8x8xbf16>, vector<8x8xbf16>, vector<8x8xf32> -> vector<8x8xf32>
    %64 = arith.truncf %63 : vector<8x8xf32> to vector<8x8xbf16>
    %c1_41 = arith.constant 1 : index
    %c0_42 = arith.constant 0 : index
    %c0_43 = arith.constant 0 : index
    %65 = vector.load %arg10[%c1_41, %c0_42, %c0_43] : memref<4x8x32xbf16, #tpu.memory_space<vmem>>, vector<1x8x32xbf16>
    %66 = vector.shape_cast %65 : vector<1x8x32xbf16> to vector<8x32xbf16>
    %cst_44 = arith.constant dense<0.000000e+00> : vector<8x32xf32>
    %67 = tpu.matmul %64, %66, %cst_44 {dimension_numbers = #tpu.dot_dimension_numbers<[1], [0], [0], [1], [0, 0, 1, 1], [], []>} : vector<8x8xbf16>, vector<8x32xbf16>, vector<8x32xf32> -> vector<8x32xf32>
    %68 = arith.addf %36, %67 : vector<8x32xf32>
    %c2 = arith.constant 2 : index
    %c0_45 = arith.constant 0 : index
    %c0_46 = arith.constant 0 : index
    %69 = vector.load %arg4[%c2, %c0_45, %c0_46] : memref<4x32x8xbf16, #tpu.memory_space<vmem>>, vector<1x32x8xbf16>
    %70 = vector.shape_cast %69 : vector<1x32x8xbf16> to vector<32x8xbf16>
    %cst_47 = arith.constant dense<0.000000e+00> : vector<8x8xf32>
    %71 = tpu.matmul %5, %70, %cst_47 {dimension_numbers = #tpu.dot_dimension_numbers<[1], [0], [0], [1], [0, 0, 1, 1], [], []>} : vector<8x32xbf16>, vector<32x8xbf16>, vector<8x8xf32> -> vector<8x8xf32>
    %c2_48 = arith.constant 2 : index
    %c0_49 = arith.constant 0 : index
    %c0_50 = arith.constant 0 : index
    %72 = vector.load %arg5[%c2_48, %c0_49, %c0_50] : memref<4x1x8xf32, #tpu.memory_space<vmem>>, vector<1x1x8xf32>
    %73 = vector.shape_cast %72 : vector<1x1x8xf32> to vector<1x8xf32>
    %74 = vector.broadcast %73 : vector<1x8xf32> to vector<8x8xf32>
    %75 = arith.addf %71, %74 : vector<8x8xf32>
    %cst_51 = arith.constant 0.353553385 : f32
    %76 = vector.broadcast %cst_51 : f32 to vector<8x8xf32>
    %77 = arith.mulf %75, %76 : vector<8x8xf32>
    %c2_52 = arith.constant 2 : index
    %c0_53 = arith.constant 0 : index
    %c0_54 = arith.constant 0 : index
    %78 = vector.load %arg21[%c2_52, %c0_53, %c0_54] : memref<4x8x8xbf16, #tpu.memory_space<vmem>>, vector<1x8x8xbf16>
    %79 = vector.shape_cast %78 : vector<1x8x8xbf16> to vector<8x8xbf16>
    %c2_55 = arith.constant 2 : index
    %c0_56 = arith.constant 0 : index
    %c0_57 = arith.constant 0 : index
    %80 = vector.load %arg22[%c2_55, %c0_56, %c0_57] : memref<4x8x8xbf16, #tpu.memory_space<vmem>>, vector<1x8x8xbf16>
    %81 = vector.shape_cast %80 : vector<1x8x8xbf16> to vector<8x8xbf16>
    %82 = arith.truncf %77 : vector<8x8xf32> to vector<8x8xbf16>
    %cst_58 = arith.constant dense<0.000000e+00> : vector<8x8xf32>
    %83 = tpu.matmul %82, %79, %cst_58 {dimension_numbers = #tpu.dot_dimension_numbers<[1], [1], [0], [0], [0, 0, 1, 0], [], []>} : vector<8x8xbf16>, vector<8x8xbf16>, vector<8x8xf32> -> vector<8x8xf32>
    %cst_59 = arith.constant dense<0xFF800000> : vector<8xf32>
    %84 = vector.multi_reduction <maximumf>, %83, %cst_59 [1] : vector<8x8xf32> to vector<8xf32>
    %85 = vector.shape_cast %84 : vector<8xf32> to vector<8x1xf32>
    %86 = vector.broadcast %85 : vector<8x1xf32> to vector<8x8xf32>
    %87 = arith.subf %83, %86 : vector<8x8xf32>
    %88 = math.exp %87 : vector<8x8xf32>
    %cst_60 = arith.constant dense<0.000000e+00> : vector<8xf32>
    %89 = vector.multi_reduction <add>, %88, %cst_60 [1] : vector<8x8xf32> to vector<8xf32>
    %90 = vector.shape_cast %89 : vector<8xf32> to vector<8x1xf32>
    %91 = tpu.reciprocal %90 {approx = true} : vector<8x1xf32> -> vector<8x1xf32>
    %92 = vector.broadcast %91 : vector<8x1xf32> to vector<8x8xf32>
    %93 = arith.mulf %88, %92 : vector<8x8xf32>
    %94 = arith.truncf %93 : vector<8x8xf32> to vector<8x8xbf16>
    %cst_61 = arith.constant dense<0.000000e+00> : vector<8x8xf32>
    %95 = tpu.matmul %94, %81, %cst_61 {dimension_numbers = #tpu.dot_dimension_numbers<[1], [0], [0], [1], [0, 0, 1, 1], [], []>} : vector<8x8xbf16>, vector<8x8xbf16>, vector<8x8xf32> -> vector<8x8xf32>
    %96 = arith.truncf %95 : vector<8x8xf32> to vector<8x8xbf16>
    %c2_62 = arith.constant 2 : index
    %c0_63 = arith.constant 0 : index
    %c0_64 = arith.constant 0 : index
    %97 = vector.load %arg10[%c2_62, %c0_63, %c0_64] : memref<4x8x32xbf16, #tpu.memory_space<vmem>>, vector<1x8x32xbf16>
    %98 = vector.shape_cast %97 : vector<1x8x32xbf16> to vector<8x32xbf16>
    %cst_65 = arith.constant dense<0.000000e+00> : vector<8x32xf32>
    %99 = tpu.matmul %96, %98, %cst_65 {dimension_numbers = #tpu.dot_dimension_numbers<[1], [0], [0], [1], [0, 0, 1, 1], [], []>} : vector<8x8xbf16>, vector<8x32xbf16>, vector<8x32xf32> -> vector<8x32xf32>
    %100 = arith.addf %68, %99 : vector<8x32xf32>
    %c3 = arith.constant 3 : index
    %c0_66 = arith.constant 0 : index
    %c0_67 = arith.constant 0 : index
    %101 = vector.load %arg4[%c3, %c0_66, %c0_67] : memref<4x32x8xbf16, #tpu.memory_space<vmem>>, vector<1x32x8xbf16>
    %102 = vector.shape_cast %101 : vector<1x32x8xbf16> to vector<32x8xbf16>
    %cst_68 = arith.constant dense<0.000000e+00> : vector<8x8xf32>
    %103 = tpu.matmul %5, %102, %cst_68 {dimension_numbers = #tpu.dot_dimension_numbers<[1], [0], [0], [1], [0, 0, 1, 1], [], []>} : vector<8x32xbf16>, vector<32x8xbf16>, vector<8x8xf32> -> vector<8x8xf32>
    %c3_69 = arith.constant 3 : index
    %c0_70 = arith.constant 0 : index
    %c0_71 = arith.constant 0 : index
    %104 = vector.load %arg5[%c3_69, %c0_70, %c0_71] : memref<4x1x8xf32, #tpu.memory_space<vmem>>, vector<1x1x8xf32>
    %105 = vector.shape_cast %104 : vector<1x1x8xf32> to vector<1x8xf32>
    %106 = vector.broadcast %105 : vector<1x8xf32> to vector<8x8xf32>
    %107 = arith.addf %103, %106 : vector<8x8xf32>
    %cst_72 = arith.constant 0.353553385 : f32
    %108 = vector.broadcast %cst_72 : f32 to vector<8x8xf32>
    %109 = arith.mulf %107, %108 : vector<8x8xf32>
    %c3_73 = arith.constant 3 : index
    %c0_74 = arith.constant 0 : index
    %c0_75 = arith.constant 0 : index
    %110 = vector.load %arg21[%c3_73, %c0_74, %c0_75] : memref<4x8x8xbf16, #tpu.memory_space<vmem>>, vector<1x8x8xbf16>
    %111 = vector.shape_cast %110 : vector<1x8x8xbf16> to vector<8x8xbf16>
    %c3_76 = arith.constant 3 : index
    %c0_77 = arith.constant 0 : index
    %c0_78 = arith.constant 0 : index
    %112 = vector.load %arg22[%c3_76, %c0_77, %c0_78] : memref<4x8x8xbf16, #tpu.memory_space<vmem>>, vector<1x8x8xbf16>
    %113 = vector.shape_cast %112 : vector<1x8x8xbf16> to vector<8x8xbf16>
    %114 = arith.truncf %109 : vector<8x8xf32> to vector<8x8xbf16>
    %cst_79 = arith.constant dense<0.000000e+00> : vector<8x8xf32>
    %115 = tpu.matmul %114, %111, %cst_79 {dimension_numbers = #tpu.dot_dimension_numbers<[1], [1], [0], [0], [0, 0, 1, 0], [], []>} : vector<8x8xbf16>, vector<8x8xbf16>, vector<8x8xf32> -> vector<8x8xf32>
    %cst_80 = arith.constant dense<0xFF800000> : vector<8xf32>
    %116 = vector.multi_reduction <maximumf>, %115, %cst_80 [1] : vector<8x8xf32> to vector<8xf32>
    %117 = vector.shape_cast %116 : vector<8xf32> to vector<8x1xf32>
    %118 = vector.broadcast %117 : vector<8x1xf32> to vector<8x8xf32>
    %119 = arith.subf %115, %118 : vector<8x8xf32>
    %120 = math.exp %119 : vector<8x8xf32>
    %cst_81 = arith.constant dense<0.000000e+00> : vector<8xf32>
    %121 = vector.multi_reduction <add>, %120, %cst_81 [1] : vector<8x8xf32> to vector<8xf32>
    %122 = vector.shape_cast %121 : vector<8xf32> to vector<8x1xf32>
    %123 = tpu.reciprocal %122 {approx = true} : vector<8x1xf32> -> vector<8x1xf32>
    %124 = vector.broadcast %123 : vector<8x1xf32> to vector<8x8xf32>
    %125 = arith.mulf %120, %124 : vector<8x8xf32>
    %126 = arith.truncf %125 : vector<8x8xf32> to vector<8x8xbf16>
    %cst_82 = arith.constant dense<0.000000e+00> : vector<8x8xf32>
    %127 = tpu.matmul %126, %113, %cst_82 {dimension_numbers = #tpu.dot_dimension_numbers<[1], [0], [0], [1], [0, 0, 1, 1], [], []>} : vector<8x8xbf16>, vector<8x8xbf16>, vector<8x8xf32> -> vector<8x8xf32>
    %128 = arith.truncf %127 : vector<8x8xf32> to vector<8x8xbf16>
    %c3_83 = arith.constant 3 : index
    %c0_84 = arith.constant 0 : index
    %c0_85 = arith.constant 0 : index
    %129 = vector.load %arg10[%c3_83, %c0_84, %c0_85] : memref<4x8x32xbf16, #tpu.memory_space<vmem>>, vector<1x8x32xbf16>
    %130 = vector.shape_cast %129 : vector<1x8x32xbf16> to vector<8x32xbf16>
    %cst_86 = arith.constant dense<0.000000e+00> : vector<8x32xf32>
    %131 = tpu.matmul %128, %130, %cst_86 {dimension_numbers = #tpu.dot_dimension_numbers<[1], [0], [0], [1], [0, 0, 1, 1], [], []>} : vector<8x8xbf16>, vector<8x32xbf16>, vector<8x32xf32> -> vector<8x32xf32>
    %132 = arith.addf %100, %131 : vector<8x32xf32>
    %c0_87 = arith.constant 0 : index
    %c0_88 = arith.constant 0 : index
    %133 = vector.load %arg11[%c0_87, %c0_88] : memref<1x32xf32, #tpu.memory_space<vmem>>, vector<1x32xf32>
    %134 = vector.broadcast %133 : vector<1x32xf32> to vector<8x32xf32>
    %135 = arith.addf %132, %134 : vector<8x32xf32>
    %136 = arith.addf %135, %1 : vector<8x32xf32>
    %cst_89 = arith.constant dense<0.000000e+00> : vector<8xf32>
    %137 = vector.multi_reduction <add>, %136, %cst_89 [1] : vector<8x32xf32> to vector<8xf32>
    %138 = vector.shape_cast %137 : vector<8xf32> to vector<8x1xf32>
    %cst_90 = arith.constant 3.200000e+01 : f32
    %139 = vector.broadcast %cst_90 : f32 to vector<8x1xf32>
    %140 = arith.divf %138, %139 : vector<8x1xf32>
    %141 = vector.broadcast %140 : vector<8x1xf32> to vector<8x32xf32>
    %142 = arith.subf %136, %141 : vector<8x32xf32>
    %143 = arith.mulf %142, %142 : vector<8x32xf32>
    %cst_91 = arith.constant dense<0.000000e+00> : vector<8xf32>
    %144 = vector.multi_reduction <add>, %143, %cst_91 [1] : vector<8x32xf32> to vector<8xf32>
    %145 = vector.shape_cast %144 : vector<8xf32> to vector<8x1xf32>
    %cst_92 = arith.constant 3.200000e+01 : f32
    %146 = vector.broadcast %cst_92 : f32 to vector<8x1xf32>
    %147 = arith.divf %145, %146 : vector<8x1xf32>
    %c0_93 = arith.constant 0 : index
    %c0_94 = arith.constant 0 : index
    %148 = vector.load %arg12[%c0_93, %c0_94] : memref<1x32xf32, #tpu.memory_space<vmem>>, vector<1x32xf32>
    %149 = vector.broadcast %140 : vector<8x1xf32> to vector<8x32xf32>
    %150 = arith.subf %136, %149 : vector<8x32xf32>
    %151 = vector.broadcast %148 : vector<1x32xf32> to vector<8x32xf32>
    %152 = arith.mulf %151, %150 : vector<8x32xf32>
    %cst_95 = arith.constant 9.99999996E-13 : f32
    %153 = vector.broadcast %cst_95 : f32 to vector<8x1xf32>
    %154 = arith.addf %147, %153 : vector<8x1xf32>
    %155 = math.rsqrt %154 : vector<8x1xf32>
    %156 = vector.broadcast %155 : vector<8x1xf32> to vector<8x32xf32>
    %157 = arith.mulf %152, %156 : vector<8x32xf32>
    %c0_96 = arith.constant 0 : index
    %c0_97 = arith.constant 0 : index
    %158 = vector.load %arg13[%c0_96, %c0_97] : memref<1x32xf32, #tpu.memory_space<vmem>>, vector<1x32xf32>
    %159 = vector.broadcast %158 : vector<1x32xf32> to vector<8x32xf32>
    %160 = arith.addf %157, %159 : vector<8x32xf32>
    %161 = arith.truncf %160 : vector<8x32xf32> to vector<8x32xbf16>
    %c0_98 = arith.constant 0 : index
    %c0_99 = arith.constant 0 : index
    %162 = vector.load %arg14[%c0_98, %c0_99] : memref<32x64xbf16, #tpu.memory_space<vmem>>, vector<32x64xbf16>
    %cst_100 = arith.constant dense<0.000000e+00> : vector<8x64xf32>
    %163 = tpu.matmul %161, %162, %cst_100 {dimension_numbers = #tpu.dot_dimension_numbers<[1], [0], [0], [1], [0, 0, 1, 1], [], []>} : vector<8x32xbf16>, vector<32x64xbf16>, vector<8x64xf32> -> vector<8x64xf32>
    %c0_101 = arith.constant 0 : index
    %c0_102 = arith.constant 0 : index
    %164 = vector.load %arg15[%c0_101, %c0_102] : memref<1x64xf32, #tpu.memory_space<vmem>>, vector<1x64xf32>
    %165 = vector.broadcast %164 : vector<1x64xf32> to vector<8x64xf32>
    %166 = arith.addf %163, %165 : vector<8x64xf32>
    %cst_103 = arith.constant 0.000000e+00 : f32
    %167 = vector.broadcast %cst_103 : f32 to vector<8x64xf32>
    %168 = arith.maximumf %166, %167 : vector<8x64xf32>
    %169 = arith.truncf %168 : vector<8x64xf32> to vector<8x64xbf16>
    %c0_104 = arith.constant 0 : index
    %c0_105 = arith.constant 0 : index
    %170 = vector.load %arg16[%c0_104, %c0_105] : memref<64x32xbf16, #tpu.memory_space<vmem>>, vector<64x32xbf16>
    %cst_106 = arith.constant dense<0.000000e+00> : vector<8x32xf32>
    %171 = tpu.matmul %169, %170, %cst_106 {dimension_numbers = #tpu.dot_dimension_numbers<[1], [0], [0], [1], [0, 0, 1, 1], [], []>} : vector<8x64xbf16>, vector<64x32xbf16>, vector<8x32xf32> -> vector<8x32xf32>
    %c0_107 = arith.constant 0 : index
    %c0_108 = arith.constant 0 : index
    %172 = vector.load %arg17[%c0_107, %c0_108] : memref<1x32xf32, #tpu.memory_space<vmem>>, vector<1x32xf32>
    %173 = vector.broadcast %172 : vector<1x32xf32> to vector<8x32xf32>
    %174 = arith.addf %171, %173 : vector<8x32xf32>
    %175 = arith.addf %174, %160 : vector<8x32xf32>
    %cst_109 = arith.constant dense<0.000000e+00> : vector<8xf32>
    %176 = vector.multi_reduction <add>, %175, %cst_109 [1] : vector<8x32xf32> to vector<8xf32>
    %177 = vector.shape_cast %176 : vector<8xf32> to vector<8x1xf32>
    %cst_110 = arith.constant 3.200000e+01 : f32
    %178 = vector.broadcast %cst_110 : f32 to vector<8x1xf32>
    %179 = arith.divf %177, %178 : vector<8x1xf32>
    %180 = vector.broadcast %179 : vector<8x1xf32> to vector<8x32xf32>
    %181 = arith.subf %175, %180 : vector<8x32xf32>
    %182 = arith.mulf %181, %181 : vector<8x32xf32>
    %cst_111 = arith.constant dense<0.000000e+00> : vector<8xf32>
    %183 = vector.multi_reduction <add>, %182, %cst_111 [1] : vector<8x32xf32> to vector<8xf32>
    %184 = vector.shape_cast %183 : vector<8xf32> to vector<8x1xf32>
    %cst_112 = arith.constant 3.200000e+01 : f32
    %185 = vector.broadcast %cst_112 : f32 to vector<8x1xf32>
    %186 = arith.divf %184, %185 : vector<8x1xf32>
    %c0_113 = arith.constant 0 : index
    %c0_114 = arith.constant 0 : index
    %187 = vector.load %arg18[%c0_113, %c0_114] : memref<1x32xf32, #tpu.memory_space<vmem>>, vector<1x32xf32>
    %188 = vector.broadcast %179 : vector<8x1xf32> to vector<8x32xf32>
    %189 = arith.subf %175, %188 : vector<8x32xf32>
    %190 = vector.broadcast %187 : vector<1x32xf32> to vector<8x32xf32>
    %191 = arith.mulf %190, %189 : vector<8x32xf32>
    %cst_115 = arith.constant 9.99999996E-13 : f32
    %192 = vector.broadcast %cst_115 : f32 to vector<8x1xf32>
    %193 = arith.addf %186, %192 : vector<8x1xf32>
    %194 = math.rsqrt %193 : vector<8x1xf32>
    %195 = vector.broadcast %194 : vector<8x1xf32> to vector<8x32xf32>
    %196 = arith.mulf %191, %195 : vector<8x32xf32>
    %c0_116 = arith.constant 0 : index
    %c0_117 = arith.constant 0 : index
    %197 = vector.load %arg19[%c0_116, %c0_117] : memref<1x32xf32, #tpu.memory_space<vmem>>, vector<1x32xf32>
    %198 = vector.broadcast %197 : vector<1x32xf32> to vector<8x32xf32>
    %199 = arith.addf %196, %198 : vector<8x32xf32>
    %c0_118 = arith.constant 0 : index
    %c0_119 = arith.constant 0 : index
    %c0_120 = arith.constant 0 : index
    %200 = vector.load %arg20[%c0_118, %c0_119, %c0_120] : memref<1x8x32xf32, #tpu.memory_space<vmem>>, vector<1x8x32xf32>
    %201 = vector.shape_cast %200 : vector<1x8x32xf32> to vector<8x32xf32>
    %202 = vector.shape_cast %199 : vector<8x32xf32> to vector<1x8x32xf32>
    tpu.vector_store %arg20[%c0_118, %c0_119, %c0_120], %202 {strides = array<i32>} : memref<1x8x32xf32, #tpu.memory_space<vmem>>, vector<1x8x32xf32>,
    return
  }
  func.func @transform_0(%arg0: i32, %arg1: i32) -> (i32, i32, i32) {
    %c0_i32 = arith.constant 0 : i32
    %c0_i32_0 = arith.constant 0 : i32
    return %arg0, %arg1, %c0_i32 : i32, i32, i32
  }
  func.func @transform_1(%arg0: i32, %arg1: i32) -> (i32, i32, i32) {
    %c0_i32 = arith.constant 0 : i32
    %c0_i32_0 = arith.constant 0 : i32
    %c0_i32_1 = arith.constant 0 : i32
    return %arg0, %c0_i32, %c0_i32_0 : i32, i32, i32
  }
  func.func @transform_2(%arg0: i32, %arg1: i32) -> (i32, i32, i32) {
    %c0_i32 = arith.constant 0 : i32
    %c0_i32_0 = arith.constant 0 : i32
    %c0_i32_1 = arith.constant 0 : i32
    %c0_i32_2 = arith.constant 0 : i32
    return %c0_i32, %c0_i32_0, %c0_i32_1 : i32, i32, i32
  }
  func.func @transform_3(%arg0: i32, %arg1: i32) -> (i32, i32, i32) {
    %c0_i32 = arith.constant 0 : i32
    %c0_i32_0 = arith.constant 0 : i32
    %c0_i32_1 = arith.constant 0 : i32
    %c0_i32_2 = arith.constant 0 : i32
    return %c0_i32, %c0_i32_0, %c0_i32_1 : i32, i32, i32
  }
  func.func @transform_4(%arg0: i32, %arg1: i32) -> (i32, i32, i32) {
    %c0_i32 = arith.constant 0 : i32
    %c0_i32_0 = arith.constant 0 : i32
    %c0_i32_1 = arith.constant 0 : i32
    %c0_i32_2 = arith.constant 0 : i32
    return %c0_i32, %c0_i32_0, %c0_i32_1 : i32, i32, i32
  }
  func.func @transform_5(%arg0: i32, %arg1: i32) -> (i32, i32, i32) {
    %c0_i32 = arith.constant 0 : i32
    %c0_i32_0 = arith.constant 0 : i32
    %c0_i32_1 = arith.constant 0 : i32
    %c0_i32_2 = arith.constant 0 : i32
    return %c0_i32, %c0_i32_0, %c0_i32_1 : i32, i32, i32
  }
  func.func @transform_6(%arg0: i32, %arg1: i32) -> (i32, i32, i32) {
    %c0_i32 = arith.constant 0 : i32
    %c0_i32_0 = arith.constant 0 : i32
    %c0_i32_1 = arith.constant 0 : i32
    %c0_i32_2 = arith.constant 0 : i32
    return %c0_i32, %c0_i32_0, %c0_i32_1 : i32, i32, i32
  }
  func.func @transform_7(%arg0: i32, %arg1: i32) -> (i32, i32, i32) {
    %c0_i32 = arith.constant 0 : i32
    %c0_i32_0 = arith.constant 0 : i32
    %c0_i32_1 = arith.constant 0 : i32
    %c0_i32_2 = arith.constant 0 : i32
    return %c0_i32, %c0_i32_0, %c0_i32_1 : i32, i32, i32
  }
  func.func @transform_8(%arg0: i32, %arg1: i32) -> (i32, i32, i32) {
    %c0_i32 = arith.constant 0 : i32
    %c0_i32_0 = arith.constant 0 : i32
    %c0_i32_1 = arith.constant 0 : i32
    %c0_i32_2 = arith.constant 0 : i32
    return %c0_i32, %c0_i32_0, %c0_i32_1 : i32, i32, i32
  }
  func.func @transform_9(%arg0: i32, %arg1: i32) -> (i32, i32) {
    %c0_i32 = arith.constant 0 : i32
    %c0_i32_0 = arith.constant 0 : i32
    %c0_i32_1 = arith.constant 0 : i32
    return %c0_i32, %c0_i32_0 : i32, i32
  }
  func.func @transform_10(%arg0: i32, %arg1: i32) -> (i32, i32) {
    %c0_i32 = arith.constant 0 : i32
    %c0_i32_0 = arith.constant 0 : i32
    %c0_i32_1 = arith.constant 0 : i32
    return %c0_i32, %c0_i32_0 : i32, i32
  }
  func.func @transform_11(%arg0: i32, %arg1: i32) -> (i32, i32) {
    %c0_i32 = arith.constant 0 : i32
    %c0_i32_0 = arith.constant 0 : i32
    %c0_i32_1 = arith.constant 0 : i32
    return %c0_i32, %c0_i32_0 : i32, i32
  }
  func.func @transform_12(%arg0: i32, %arg1: i32) -> (i32, i32) {
    %c0_i32 = arith.constant 0 : i32
    %c0_i32_0 = arith.constant 0 : i32
    %c0_i32_1 = arith.constant 0 : i32
    return %c0_i32, %c0_i32_0 : i32, i32
  }
  func.func @transform_13(%arg0: i32, %arg1: i32) -> (i32, i32) {
    %c0_i32 = arith.constant 0 : i32
    %c0_i32_0 = arith.constant 0 : i32
    %c0_i32_1 = arith.constant 0 : i32
    return %c0_i32, %c0_i32_0 : i32, i32
  }
  func.func @transform_14(%arg0: i32, %arg1: i32) -> (i32, i32) {
    %c0_i32 = arith.constant 0 : i32
    %c0_i32_0 = arith.constant 0 : i32
    %c0_i32_1 = arith.constant 0 : i32
    return %c0_i32, %c0_i32_0 : i32, i32
  }
  func.func @transform_15(%arg0: i32, %arg1: i32) -> (i32, i32) {
    %c0_i32 = arith.constant 0 : i32
    %c0_i32_0 = arith.constant 0 : i32
    %c0_i32_1 = arith.constant 0 : i32
    return %c0_i32, %c0_i32_0 : i32, i32
  }
  func.func @transform_16(%arg0: i32, %arg1: i32) -> (i32, i32) {
    %c0_i32 = arith.constant 0 : i32
    %c0_i32_0 = arith.constant 0 : i32
    %c0_i32_1 = arith.constant 0 : i32
    return %c0_i32, %c0_i32_0 : i32, i32
  }
  func.func @transform_17(%arg0: i32, %arg1: i32) -> (i32, i32) {
    %c0_i32 = arith.constant 0 : i32
    %c0_i32_0 = arith.constant 0 : i32
    %c0_i32_1 = arith.constant 0 : i32
    return %c0_i32, %c0_i32_0 : i32, i32
  }
  func.func @transform_18(%arg0: i32, %arg1: i32) -> (i32, i32, i32) {
    %c0_i32 = arith.constant 0 : i32
    %c0_i32_0 = arith.constant 0 : i32
    return %arg0, %arg1, %c0_i32 : i32, i32, i32
  }
}

</mosaic_0001>

<llo_original>
// kernel: tpu_custom_call.1
$region0: #{tpu_custom_call.1}
  #allocation0 [shape = 'u32[]', space=smem, size = 0x4, offset = 0x4, fixed_abs, tag = 'smem constant byte address 0x4 - core index']
  #allocation1 [shape = 'u32[144,128]{1,0:T(1,128)}', space=vmem, size = 0x12000, scoped, tag = 'internal scratch']
  #allocation2 [shape = 'bf16[4,8,8]{2,1,0:T(8,128)(2,1)}', space=vmem, size = 0x2000, scoped, tag = 'scratch operand']
  #allocation3 [shape = 'bf16[4,8,8]{2,1,0:T(8,128)(2,1)}', space=vmem, size = 0x2000, scoped, tag = 'scratch operand']
  %s0 = inlined_call_operand.vmem [shape: f32[2,8,32], index: 0, kind: input, shape index: {}]
  %s1 = inlined_call_operand.vmem [shape: bf16[2,8,32], index: 1, kind: input, shape index: {}]
  %s2 = inlined_call_operand.vmem [shape: bf16[4,32,8], index: 2, kind: input, shape index: {}]
  %s3 = inlined_call_operand.vmem [shape: f32[4,1,8], index: 3, kind: input, shape index: {}]
  %s4 = inlined_call_operand.vmem [shape: bf16[4,32,8], index: 4, kind: input, shape index: {}]
  %s5 = inlined_call_operand.vmem [shape: f32[4,1,8], index: 5, kind: input, shape index: {}]
  %s6 = inlined_call_operand.vmem [shape: bf16[4,32,8], index: 6, kind: input, shape index: {}]
  %s7 = inlined_call_operand.vmem [shape: f32[4,1,8], index: 7, kind: input, shape index: {}]
  %s8 = inlined_call_operand.vmem [shape: bf16[4,8,32], index: 8, kind: input, shape index: {}]
  %s9 = inlined_call_operand.vmem [shape: f32[1,32], index: 9, kind: input, shape index: {}]
  %s10 = inlined_call_operand.vmem [shape: f32[1,32], index: 10, kind: input, shape index: {}]
  %s11 = inlined_call_operand.vmem [shape: f32[1,32], index: 11, kind: input, shape index: {}]
  %s12 = inlined_call_operand.vmem [shape: bf16[32,64], index: 12, kind: input, shape index: {}]
  %s13 = inlined_call_operand.vmem [shape: f32[1,64], index: 13, kind: input, shape index: {}]
  %s14 = inlined_call_operand.vmem [shape: bf16[64,32], index: 14, kind: input, shape index: {}]
  %s15 = inlined_call_operand.vmem [shape: f32[1,32], index: 15, kind: input, shape index: {}]
  %s16 = inlined_call_operand.vmem [shape: f32[1,32], index: 16, kind: input, shape index: {}]
  %s17 = inlined_call_operand.vmem [shape: f32[1,32], index: 17, kind: input, shape index: {}]
  %s18 = inlined_call_operand.hbm [shape: f32[2,8,32], index: 18, kind: output, shape index: {}]
  %s19 = sld [smem:[#allocation0]]
  $region109: #{tpu_custom_call.1} parent=0
    _
  %s21 = ssub.s32 1, %s19
  %s22 = scalar_select 0, %s21, %s19
  $region1: #{tpu_custom_call.1} parent=0
    #allocation4 [shape = 'u8[8192]{0}', space=vmem, size = 0x2000, scoped, tag = 'output window, operand 0']
    #allocation5 [shape = 's32[2]{0}', space=sflag, size = 0x8, scoped, tag = 'scoped memory for tpu_custom_call.1']
    %23 = vsyncpa [#allocation5], 0
    %s24 = scalar_lea.sflag [#allocation5], 1
    %25 = vsyncpa %s24, 0
    loop: start=0, step=1, limit=4
    $region2: #{tpu_custom_call.1} parent=1 // loop_pre_header
      _
    $region3: #{tpu_custom_call.1} parent=1 // loop_header
      %s27 = sphi 0, %s31
      %p28 = scmp.ge.s32.totalorder %s27, 4
      %s34 = sphi 0, %s46
      %s35 = sphi 0, %s42
      %s36 = sphi 0, %s34
      %s37 = sphi 0, %s35
      %s38 = sphi 0, %s36
      %s39 = sphi 0, %s37
      %s51 = sphi 0, %s53
      %s54 = sphi 0, %s51
      %s55 = sphi 0, %s54
      %s71 = sphi 0, %s55
      %s77 = sphi 0, %s79
      %s80 = sphi 0, %s77
      %s81 = sphi 0, %s80
      %s97 = sphi 0, %s81
      %s101 = sphi 0, %s101
      %s103 = sphi 0, %s101
      %s104 = sphi 0, %s103
      %s118 = sphi 0, %s104
      %s122 = sphi 0, %s122
      %s124 = sphi 0, %s122
      %s125 = sphi 0, %s124
      %s139 = sphi 0, %s125
      %s143 = sphi 0, %s143
      %s145 = sphi 0, %s143
      %s146 = sphi 0, %s145
      %s160 = sphi 0, %s146
      %s164 = sphi 0, %s164
      %s166 = sphi 0, %s164
      %s167 = sphi 0, %s166
      %s181 = sphi 0, %s167
      %s185 = sphi 0, %s185
      %s187 = sphi 0, %s185
      %s188 = sphi 0, %s187
      %s202 = sphi 0, %s188
      %s206 = sphi 0, %s206
      %s208 = sphi 0, %s206
      %s209 = sphi 0, %s208
      %s223 = sphi 0, %s209
      %s227 = sphi 0, %s227
      %s229 = sphi 0, %s227
      %s230 = sphi 0, %s229
      %s244 = sphi 0, %s230
      %s248 = sphi 0, %s248
      %s250 = sphi 0, %s248
      %s251 = sphi 0, %s250
      %s265 = sphi 0, %s251
      %s269 = sphi 0, %s269
      %s271 = sphi 0, %s269
      %s272 = sphi 0, %s271
      %s286 = sphi 0, %s272
      %s290 = sphi 0, %s290
      %s292 = sphi 0, %s290
      %s293 = sphi 0, %s292
      %s307 = sphi 0, %s293
      %s311 = sphi 0, %s311
      %s313 = sphi 0, %s311
      %s314 = sphi 0, %s313
      %s328 = sphi 0, %s314
      %s332 = sphi 0, %s332
      %s334 = sphi 0, %s332
      %s335 = sphi 0, %s334
      %s349 = sphi 0, %s335
      %s353 = sphi 0, %s353
      %s355 = sphi 0, %s353
      %s356 = sphi 0, %s355
      %s370 = sphi 0, %s356
      %s374 = sphi 0, %s374
      %s376 = sphi 0, %s374
      %s377 = sphi 0, %s376
      %s391 = sphi 0, %s377
      %s395 = sphi 0, %s395
      %s397 = sphi 0, %s395
      %s398 = sphi 0, %s397
      %s412 = sphi 0, %s398
      %s416 = sphi 0, %s416
      %s418 = sphi 0, %s416
      %s419 = sphi 0, %s418
      %s433 = sphi 0, %s419
      %s441 = sphi 0, %s443
      %s444 = sphi 0, %s441
      %s445 = sphi 0, %s444
      %s461 = sphi 0, %s445
    $region4: #{tpu_custom_call.1} parent=1 // loop_header_branch
      %30 = sbr.rel (%p28) target = $region8
    $region5: #{tpu_custom_call.1} parent=1 // loop_body
      %s32 = ssub.s32 %s27, 1
      %s33 = ssub.s32 %s27, 2
      %s40 = sadd.s32 1, %s35
      %p41 = scmp.ge.s32.totalorder %s40, 1
      %s42 = scalar_select %p41, 0, %s40
      %s43 = sadd.s32 1, %s34
      %s44 = scalar_select %p41, %s43, %s34
      %p45 = scmp.ge.s32.totalorder %s44, 2
      %s46 = scalar_select %p45, 0, %s44
      %s47 = ssub.s32 %s34, %s46
      %s48 = ssub.s32 %s35, %s42
      %s49 = sor.u32 %s47, %s48
      %p50 = scmp.eq.s32.totalorder %s49, 0
      %s52 = sadd.s32 %s51, 1
      %s53 = scalar_select %p50, %s51, %s52
      %p56 = pneg %p50
      %p57 = scmp.eq.s32.totalorder %s27, 1
      %p58 = por %p56, %p57
      %p59 = scmp.ne.s32.totalorder %s51, %s54
      %p60 = scmp.eq.s32.totalorder %s27, 0
      %p61 = por %p59, %p60
      %p62 = scmp.ne.s32.totalorder %s51, %s54
      %p63 = scmp.eq.s32.totalorder %s32, 1
      %p64 = por %p62, %p63
      %p65 = scmp.ne.s32.totalorder %s54, %s55
      %p66 = scmp.eq.s32.totalorder %s32, 0
      %p67 = por %p65, %p66
      %p68 = scmp.ne.s32.totalorder %s54, %s55
      %p69 = scmp.eq.s32.totalorder %s33, 1
      %p70 = por %p68, %p69
      %p72 = scmp.ne.s32.totalorder %s55, %s71
      %p73 = scmp.eq.s32.totalorder %s33, 0
      %p74 = por %p72, %p73
      %s75 = ssub.s32 %s34, %s46
      %p76 = scmp.eq.s32.totalorder %s75, 0
      %s78 = sadd.s32 %s77, 1
      %s79 = scalar_select %p76, %s77, %s78
      %p82 = pneg %p76
      %p83 = scmp.eq.s32.totalorder %s27, 1
      %p84 = por %p82, %p83
      %p85 = scmp.ne.s32.totalorder %s77, %s80
      %p86 = scmp.eq.s32.totalorder %s27, 0
      %p87 = por %p85, %p86
      %p88 = scmp.ne.s32.totalorder %s77, %s80
      %p89 = scmp.eq.s32.totalorder %s32, 1
      %p90 = por %p88, %p89
      %p91 = scmp.ne.s32.totalorder %s80, %s81
      %p92 = scmp.eq.s32.totalorder %s32, 0
      %p93 = por %p91, %p92
      %p94 = scmp.ne.s32.totalorder %s80, %s81
      %p95 = scmp.eq.s32.totalorder %s33, 1
      %p96 = por %p94, %p95
      %p98 = scmp.ne.s32.totalorder %s81, %s97
      %p99 = scmp.eq.s32.totalorder %s33, 0
      %p100 = por %p98, %p99
      %s102 = sadd.s32 %s101, 1
      %p105 = scmp.eq.s32.totalorder %s27, 1
      %p106 = scmp.ne.s32.totalorder %s101, %s103
      %p107 = scmp.eq.s32.totalorder %s27, 0
      %p108 = por %p106, %p107
      %p109 = scmp.ne.s32.totalorder %s101, %s103
      %p110 = scmp.eq.s32.totalorder %s32, 1
      %p111 = por %p109, %p110
      %p112 = scmp.ne.s32.totalorder %s103, %s104
      %p113 = scmp.eq.s32.totalorder %s32, 0
      %p114 = por %p112, %p113
      %p115 = scmp.ne.s32.totalorder %s103, %s104
      %p116 = scmp.eq.s32.totalorder %s33, 1
      %p117 = por %p115, %p116
      %p119 = scmp.ne.s32.totalorder %s104, %s118
      %p120 = scmp.eq.s32.totalorder %s33, 0
      %p121 = por %p119, %p120
      %s123 = sadd.s32 %s122, 1
      %p126 = scmp.eq.s32.totalorder %s27, 1
      %p127 = scmp.ne.s32.totalorder %s122, %s124
      %p128 = scmp.eq.s32.totalorder %s27, 0
      %p129 = por %p127, %p128
      %p130 = scmp.ne.s32.totalorder %s122, %s124
      %p131 = scmp.eq.s32.totalorder %s32, 1
      %p132 = por %p130, %p131
      %p133 = scmp.ne.s32.totalorder %s124, %s125
      %p134 = scmp.eq.s32.totalorder %s32, 0
      %p135 = por %p133, %p134
      %p136 = scmp.ne.s32.totalorder %s124, %s125
      %p137 = scmp.eq.s32.totalorder %s33, 1
      %p138 = por %p136, %p137
      %p140 = scmp.ne.s32.totalorder %s125, %s139
      %p141 = scmp.eq.s32.totalorder %s33, 0
      %p142 = por %p140, %p141
      %s144 = sadd.s32 %s143, 1
      %p147 = scmp.eq.s32.totalorder %s27, 1
      %p148 = scmp.ne.s32.totalorder %s143, %s145
      %p149 = scmp.eq.s32.totalorder %s27, 0
      %p150 = por %p148, %p149
      %p151 = scmp.ne.s32.totalorder %s143, %s145
      %p152 = scmp.eq.s32.totalorder %s32, 1
      %p153 = por %p151, %p152
      %p154 = scmp.ne.s32.totalorder %s145, %s146
      %p155 = scmp.eq.s32.totalorder %s32, 0
      %p156 = por %p154, %p155
      %p157 = scmp.ne.s32.totalorder %s145, %s146
      %p158 = scmp.eq.s32.totalorder %s33, 1
      %p159 = por %p157, %p158
      %p161 = scmp.ne.s32.totalorder %s146, %s160
      %p162 = scmp.eq.s32.totalorder %s33, 0
      %p163 = por %p161, %p162
      %s165 = sadd.s32 %s164, 1
      %p168 = scmp.eq.s32.totalorder %s27, 1
      %p169 = scmp.ne.s32.totalorder %s164, %s166
      %p170 = scmp.eq.s32.totalorder %s27, 0
      %p171 = por %p169, %p170
      %p172 = scmp.ne.s32.totalorder %s164, %s166
      %p173 = scmp.eq.s32.totalorder %s32, 1
      %p174 = por %p172, %p173
      %p175 = scmp.ne.s32.totalorder %s166, %s167
      %p176 = scmp.eq.s32.totalorder %s32, 0
      %p177 = por %p175, %p176
      %p178 = scmp.ne.s32.totalorder %s166, %s167
      %p179 = scmp.eq.s32.totalorder %s33, 1
      %p180 = por %p178, %p179
      %p182 = scmp.ne.s32.totalorder %s167, %s181
      %p183 = scmp.eq.s32.totalorder %s33, 0
      %p184 = por %p182, %p183
      %s186 = sadd.s32 %s185, 1
      %p189 = scmp.eq.s32.totalorder %s27, 1
      %p190 = scmp.ne.s32.totalorder %s185, %s187
      %p191 = scmp.eq.s32.totalorder %s27, 0
      %p192 = por %p190, %p191
      %p193 = scmp.ne.s32.totalorder %s185, %s187
      %p194 = scmp.eq.s32.totalorder %s32, 1
      %p195 = por %p193, %p194
      %p196 = scmp.ne.s32.totalorder %s187, %s188
      %p197 = scmp.eq.s32.totalorder %s32, 0
      %p198 = por %p196, %p197
      %p199 = scmp.ne.s32.totalorder %s187, %s188
      %p200 = scmp.eq.s32.totalorder %s33, 1
      %p201 = por %p199, %p200
      %p203 = scmp.ne.s32.totalorder %s188, %s202
      %p204 = scmp.eq.s32.totalorder %s33, 0
      %p205 = por %p203, %p204
      %s207 = sadd.s32 %s206, 1
      %p210 = scmp.eq.s32.totalorder %s27, 1
      %p211 = scmp.ne.s32.totalorder %s206, %s208
      %p212 = scmp.eq.s32.totalorder %s27, 0
      %p213 = por %p211, %p212
      %p214 = scmp.ne.s32.totalorder %s206, %s208
      %p215 = scmp.eq.s32.totalorder %s32, 1
      %p216 = por %p214, %p215
      %p217 = scmp.ne.s32.totalorder %s208, %s209
      %p218 = scmp.eq.s32.totalorder %s32, 0
      %p219 = por %p217, %p218
      %p220 = scmp.ne.s32.totalorder %s208, %s209
      %p221 = scmp.eq.s32.totalorder %s33, 1
      %p222 = por %p220, %p221
      %p224 = scmp.ne.s32.totalorder %s209, %s223
      %p225 = scmp.eq.s32.totalorder %s33, 0
      %p226 = por %p224, %p225
      %s228 = sadd.s32 %s227, 1
      %p231 = scmp.eq.s32.totalorder %s27, 1
      %p232 = scmp.ne.s32.totalorder %s227, %s229
      %p233 = scmp.eq.s32.totalorder %s27, 0
      %p234 = por %p232, %p233
      %p235 = scmp.ne.s32.totalorder %s227, %s229
      %p236 = scmp.eq.s32.totalorder %s32, 1
      %p237 = por %p235, %p236
      %p238 = scmp.ne.s32.totalorder %s229, %s230
      %p239 = scmp.eq.s32.totalorder %s32, 0
      %p240 = por %p238, %p239
      %p241 = scmp.ne.s32.totalorder %s229, %s230
      %p242 = scmp.eq.s32.totalorder %s33, 1
      %p243 = por %p241, %p242
      %p245 = scmp.ne.s32.totalorder %s230, %s244
      %p246 = scmp.eq.s32.totalorder %s33, 0
      %p247 = por %p245, %p246
      %s249 = sadd.s32 %s248, 1
      %p252 = scmp.eq.s32.totalorder %s27, 1
      %p253 = scmp.ne.s32.totalorder %s248, %s250
      %p254 = scmp.eq.s32.totalorder %s27, 0
      %p255 = por %p253, %p254
      %p256 = scmp.ne.s32.totalorder %s248, %s250
      %p257 = scmp.eq.s32.totalorder %s32, 1
      %p258 = por %p256, %p257
      %p259 = scmp.ne.s32.totalorder %s250, %s251
      %p260 = scmp.eq.s32.totalorder %s32, 0
      %p261 = por %p259, %p260
      %p262 = scmp.ne.s32.totalorder %s250, %s251
      %p263 = scmp.eq.s32.totalorder %s33, 1
      %p264 = por %p262, %p263
      %p266 = scmp.ne.s32.totalorder %s251, %s265
      %p267 = scmp.eq.s32.totalorder %s33, 0
      %p268 = por %p266, %p267
      %s270 = sadd.s32 %s269, 1
      %p273 = scmp.eq.s32.totalorder %s27, 1
      %p274 = scmp.ne.s32.totalorder %s269, %s271
      %p275 = scmp.eq.s32.totalorder %s27, 0
      %p276 = por %p274, %p275
      %p277 = scmp.ne.s32.totalorder %s269, %s271
      %p278 = scmp.eq.s32.totalorder %s32, 1
      %p279 = por %p277, %p278
      %p280 = scmp.ne.s32.totalorder %s271, %s272
      %p281 = scmp.eq.s32.totalorder %s32, 0
      %p282 = por %p280, %p281
      %p283 = scmp.ne.s32.totalorder %s271, %s272
      %p284 = scmp.eq.s32.totalorder %s33, 1
      %p285 = por %p283, %p284
      %p287 = scmp.ne.s32.totalorder %s272, %s286
      %p288 = scmp.eq.s32.totalorder %s33, 0
      %p289 = por %p287, %p288
      %s291 = sadd.s32 %s290, 1
      %p294 = scmp.eq.s32.totalorder %s27, 1
      %p295 = scmp.ne.s32.totalorder %s290, %s292
      %p296 = scmp.eq.s32.totalorder %s27, 0
      %p297 = por %p295, %p296
      %p298 = scmp.ne.s32.totalorder %s290, %s292
      %p299 = scmp.eq.s32.totalorder %s32, 1
      %p300 = por %p298, %p299
      %p301 = scmp.ne.s32.totalorder %s292, %s293
      %p302 = scmp.eq.s32.totalorder %s32, 0
      %p303 = por %p301, %p302
      %p304 = scmp.ne.s32.totalorder %s292, %s293
      %p305 = scmp.eq.s32.totalorder %s33, 1
      %p306 = por %p304, %p305
      %p308 = scmp.ne.s32.totalorder %s293, %s307
      %p309 = scmp.eq.s32.totalorder %s33, 0
      %p310 = por %p308, %p309
      %s312 = sadd.s32 %s311, 1
      %p315 = scmp.eq.s32.totalorder %s27, 1
      %p316 = scmp.ne.s32.totalorder %s311, %s313
      %p317 = scmp.eq.s32.totalorder %s27, 0
      %p318 = por %p316, %p317
      %p319 = scmp.ne.s32.totalorder %s311, %s313
      %p320 = scmp.eq.s32.totalorder %s32, 1
      %p321 = por %p319, %p320
      %p322 = scmp.ne.s32.totalorder %s313, %s314
      %p323 = scmp.eq.s32.totalorder %s32, 0
      %p324 = por %p322, %p323
      %p325 = scmp.ne.s32.totalorder %s313, %s314
      %p326 = scmp.eq.s32.totalorder %s33, 1
      %p327 = por %p325, %p326
      %p329 = scmp.ne.s32.totalorder %s314, %s328
      %p330 = scmp.eq.s32.totalorder %s33, 0
      %p331 = por %p329, %p330
      %s333 = sadd.s32 %s332, 1
      %p336 = scmp.eq.s32.totalorder %s27, 1
      %p337 = scmp.ne.s32.totalorder %s332, %s334
      %p338 = scmp.eq.s32.totalorder %s27, 0
      %p339 = por %p337, %p338
      %p340 = scmp.ne.s32.totalorder %s332, %s334
      %p341 = scmp.eq.s32.totalorder %s32, 1
      %p342 = por %p340, %p341
      %p343 = scmp.ne.s32.totalorder %s334, %s335
      %p344 = scmp.eq.s32.totalorder %s32, 0
      %p345 = por %p343, %p344
      %p346 = scmp.ne.s32.totalorder %s334, %s335
      %p347 = scmp.eq.s32.totalorder %s33, 1
      %p348 = por %p346, %p347
      %p350 = scmp.ne.s32.totalorder %s335, %s349
      %p351 = scmp.eq.s32.totalorder %s33, 0
      %p352 = por %p350, %p351
      %s354 = sadd.s32 %s353, 1
      %p357 = scmp.eq.s32.totalorder %s27, 1
      %p358 = scmp.ne.s32.totalorder %s353, %s355
      %p359 = scmp.eq.s32.totalorder %s27, 0
      %p360 = por %p358, %p359
      %p361 = scmp.ne.s32.totalorder %s353, %s355
      %p362 = scmp.eq.s32.totalorder %s32, 1
      %p363 = por %p361, %p362
      %p364 = scmp.ne.s32.totalorder %s355, %s356
      %p365 = scmp.eq.s32.totalorder %s32, 0
      %p366 = por %p364, %p365
      %p367 = scmp.ne.s32.totalorder %s355, %s356
      %p368 = scmp.eq.s32.totalorder %s33, 1
      %p369 = por %p367, %p368
      %p371 = scmp.ne.s32.totalorder %s356, %s370
      %p372 = scmp.eq.s32.totalorder %s33, 0
      %p373 = por %p371, %p372
      %s375 = sadd.s32 %s374, 1
      %p378 = scmp.eq.s32.totalorder %s27, 1
      %p379 = scmp.ne.s32.totalorder %s374, %s376
      %p380 = scmp.eq.s32.totalorder %s27, 0
      %p381 = por %p379, %p380
      %p382 = scmp.ne.s32.totalorder %s374, %s376
      %p383 = scmp.eq.s32.totalorder %s32, 1
      %p384 = por %p382, %p383
      %p385 = scmp.ne.s32.totalorder %s376, %s377
      %p386 = scmp.eq.s32.totalorder %s32, 0
      %p387 = por %p385, %p386
      %p388 = scmp.ne.s32.totalorder %s376, %s377
      %p389 = scmp.eq.s32.totalorder %s33, 1
      %p390 = por %p388, %p389
      %p392 = scmp.ne.s32.totalorder %s377, %s391
      %p393 = scmp.eq.s32.totalorder %s33, 0
      %p394 = por %p392, %p393
      %s396 = sadd.s32 %s395, 1
      %p399 = scmp.eq.s32.totalorder %s27, 1
      %p400 = scmp.ne.s32.totalorder %s395, %s397
      %p401 = scmp.eq.s32.totalorder %s27, 0
      %p402 = por %p400, %p401
      %p403 = scmp.ne.s32.totalorder %s395, %s397
      %p404 = scmp.eq.s32.totalorder %s32, 1
      %p405 = por %p403, %p404
      %p406 = scmp.ne.s32.totalorder %s397, %s398
      %p407 = scmp.eq.s32.totalorder %s32, 0
      %p408 = por %p406, %p407
      %p409 = scmp.ne.s32.totalorder %s397, %s398
      %p410 = scmp.eq.s32.totalorder %s33, 1
      %p411 = por %p409, %p410
      %p413 = scmp.ne.s32.totalorder %s398, %s412
      %p414 = scmp.eq.s32.totalorder %s33, 0
      %p415 = por %p413, %p414
      %s417 = sadd.s32 %s416, 1
      %p420 = scmp.eq.s32.totalorder %s27, 1
      %p421 = scmp.ne.s32.totalorder %s416, %s418
      %p422 = scmp.eq.s32.totalorder %s27, 0
      %p423 = por %p421, %p422
      %p424 = scmp.ne.s32.totalorder %s416, %s418
      %p425 = scmp.eq.s32.totalorder %s32, 1
      %p426 = por %p424, %p425
      %p427 = scmp.ne.s32.totalorder %s418, %s419
      %p428 = scmp.eq.s32.totalorder %s32, 0
      %p429 = por %p427, %p428
      %p430 = scmp.ne.s32.totalorder %s418, %s419
      %p431 = scmp.eq.s32.totalorder %s33, 1
      %p432 = por %p430, %p431
      %p434 = scmp.ne.s32.totalorder %s419, %s433
      %p435 = scmp.eq.s32.totalorder %s33, 0
      %p436 = por %p434, %p435
      %s437 = ssub.s32 %s34, %s46
      %s438 = ssub.s32 %s35, %s42
      %s439 = sor.u32 %s437, %s438
      %p440 = scmp.eq.s32.totalorder %s439, 0
      %s442 = sadd.s32 %s441, 1
      %s443 = scalar_select %p440, %s441, %s442
      %p446 = pneg %p440
      %p447 = scmp.eq.s32.totalorder %s27, 1
      %p448 = por %p446, %p447
      %p449 = scmp.ne.s32.totalorder %s441, %s444
      %p450 = scmp.eq.s32.totalorder %s27, 0
      %p451 = por %p449, %p450
      %p452 = scmp.ne.s32.totalorder %s441, %s444
      %p453 = scmp.eq.s32.totalorder %s32, 1
      %p454 = por %p452, %p453
      %p455 = scmp.ne.s32.totalorder %s444, %s445
      %p456 = scmp.eq.s32.totalorder %s32, 0
      %p457 = por %p455, %p456
      %p458 = scmp.ne.s32.totalorder %s444, %s445
      %p459 = scmp.eq.s32.totalorder %s33, 1
      %p460 = por %p458, %p459
      %p462 = scmp.ne.s32.totalorder %s445, %s461
      %p463 = scmp.eq.s32.totalorder %s33, 0
      %p464 = por %p462, %p463
      %p465 = scmp.le.s32.totalorder 1, %s27
      %p466 = scmp.lt.s32.totalorder %s27, 3
      %p467 = pnand %p465, %p466
      %p468 = pneg %p467
      // Predicated region
      $region9: #{tpu_custom_call.1} parent=5 // pred_check
        _
      $region10: #{tpu_custom_call.1} parent=5 // pred_check_branch
        %470 = sbr.rel (%p467) target = $region12
      $region11: #{tpu_custom_call.1} parent=5 // pred_region
        %s471 = ssub.s32 %s27, 1
        // Predicated region
        $region13: #{tpu_custom_call.1} parent=11 // pred_check
          %p472 = pneg %p114
        $region14: #{tpu_custom_call.1} parent=11 // pred_check_branch
          %474 = sbr.rel (%p472) target = $region16
        $region15: #{tpu_custom_call.1} parent=11 // pred_region
          _
        $region16: #{tpu_custom_call.1} parent=11 // pred_fallthru
          _
        // Predicated region
        $region17: #{tpu_custom_call.1} parent=11 // pred_check
          %p475 = pneg %p135
        $region18: #{tpu_custom_call.1} parent=11 // pred_check_branch
          %477 = sbr.rel (%p475) target = $region20
        $region19: #{tpu_custom_call.1} parent=11 // pred_region
          _
        $region20: #{tpu_custom_call.1} parent=11 // pred_fallthru
          _
        // Predicated region
        $region21: #{tpu_custom_call.1} parent=11 // pred_check
          %p478 = pneg %p156
        $region22: #{tpu_custom_call.1} parent=11 // pred_check_branch
          %480 = sbr.rel (%p478) target = $region24
        $region23: #{tpu_custom_call.1} parent=11 // pred_region
          _
        $region24: #{tpu_custom_call.1} parent=11 // pred_fallthru
          _
        // Predicated region
        $region25: #{tpu_custom_call.1} parent=11 // pred_check
          %p481 = pneg %p177
        $region26: #{tpu_custom_call.1} parent=11 // pred_check_branch
          %483 = sbr.rel (%p481) target = $region28
        $region27: #{tpu_custom_call.1} parent=11 // pred_region
          _
        $region28: #{tpu_custom_call.1} parent=11 // pred_fallthru
          _
        // Predicated region
        $region29: #{tpu_custom_call.1} parent=11 // pred_check
          %p484 = pneg %p198
        $region30: #{tpu_custom_call.1} parent=11 // pred_check_branch
          %486 = sbr.rel (%p484) target = $region32
        $region31: #{tpu_custom_call.1} parent=11 // pred_region
          _
        $region32: #{tpu_custom_call.1} parent=11 // pred_fallthru
          _
        // Predicated region
        $region33: #{tpu_custom_call.1} parent=11 // pred_check
          %p487 = pneg %p219
        $region34: #{tpu_custom_call.1} parent=11 // pred_check_branch
          %489 = sbr.rel (%p487) target = $region36
        $region35: #{tpu_custom_call.1} parent=11 // pred_region
          _
        $region36: #{tpu_custom_call.1} parent=11 // pred_fallthru
          _
        // Predicated region
        $region37: #{tpu_custom_call.1} parent=11 // pred_check
          %p490 = pneg %p240
        $region38: #{tpu_custom_call.1} parent=11 // pred_check_branch
          %492 = sbr.rel (%p490) target = $region40
        $region39: #{tpu_custom_call.1} parent=11 // pred_region
          _
        $region40: #{tpu_custom_call.1} parent=11 // pred_fallthru
          _
        // Predicated region
        $region41: #{tpu_custom_call.1} parent=11 // pred_check
          %p493 = pneg %p261
        $region42: #{tpu_custom_call.1} parent=11 // pred_check_branch
          %495 = sbr.rel (%p493) target = $region44
        $region43: #{tpu_custom_call.1} parent=11 // pred_region
          _
        $region44: #{tpu_custom_call.1} parent=11 // pred_fallthru
          _
        // Predicated region
        $region45: #{tpu_custom_call.1} parent=11 // pred_check
          %p496 = pneg %p282
        $region46: #{tpu_custom_call.1} parent=11 // pred_check_branch
          %498 = sbr.rel (%p496) target = $region48
        $region47: #{tpu_custom_call.1} parent=11 // pred_region
          _
        $region48: #{tpu_custom_call.1} parent=11 // pred_fallthru
          _
        // Predicated region
        $region49: #{tpu_custom_call.1} parent=11 // pred_check
          %p499 = pneg %p303
        $region50: #{tpu_custom_call.1} parent=11 // pred_check_branch
          %501 = sbr.rel (%p499) target = $region52
        $region51: #{tpu_custom_call.1} parent=11 // pred_region
          _
        $region52: #{tpu_custom_call.1} parent=11 // pred_fallthru
          _
        // Predicated region
        $region53: #{tpu_custom_call.1} parent=11 // pred_check
          %p502 = pneg %p324
        $region54: #{tpu_custom_call.1} parent=11 // pred_check_branch
          %504 = sbr.rel (%p502) target = $region56
        $region55: #{tpu_custom_call.1} parent=11 // pred_region
          _
        $region56: #{tpu_custom_call.1} parent=11 // pred_fallthru
          _
        // Predicated region
        $region57: #{tpu_custom_call.1} parent=11 // pred_check
          %p505 = pneg %p345
        $region58: #{tpu_custom_call.1} parent=11 // pred_check_branch
          %507 = sbr.rel (%p505) target = $region60
        $region59: #{tpu_custom_call.1} parent=11 // pred_region
          _
        $region60: #{tpu_custom_call.1} parent=11 // pred_fallthru
          _
        // Predicated region
        $region61: #{tpu_custom_call.1} parent=11 // pred_check
          %p508 = pneg %p366
        $region62: #{tpu_custom_call.1} parent=11 // pred_check_branch
          %510 = sbr.rel (%p508) target = $region64
        $region63: #{tpu_custom_call.1} parent=11 // pred_region
          _
        $region64: #{tpu_custom_call.1} parent=11 // pred_fallthru
          _
        // Predicated region
        $region65: #{tpu_custom_call.1} parent=11 // pred_check
          %p511 = pneg %p387
        $region66: #{tpu_custom_call.1} parent=11 // pred_check_branch
          %513 = sbr.rel (%p511) target = $region68
        $region67: #{tpu_custom_call.1} parent=11 // pred_region
          _
        $region68: #{tpu_custom_call.1} parent=11 // pred_fallthru
          _
        // Predicated region
        $region69: #{tpu_custom_call.1} parent=11 // pred_check
          %p514 = pneg %p408
        $region70: #{tpu_custom_call.1} parent=11 // pred_check_branch
          %516 = sbr.rel (%p514) target = $region72
        $region71: #{tpu_custom_call.1} parent=11 // pred_region
          _
        $region72: #{tpu_custom_call.1} parent=11 // pred_fallthru
          _
        // Predicated region
        $region73: #{tpu_custom_call.1} parent=11 // pred_check
          %p517 = pneg %p429
        $region74: #{tpu_custom_call.1} parent=11 // pred_check_branch
          %519 = sbr.rel (%p517) target = $region76
        $region75: #{tpu_custom_call.1} parent=11 // pred_region
          _
        $region76: #{tpu_custom_call.1} parent=11 // pred_fallthru
          _
      $region12: #{tpu_custom_call.1} parent=5 // pred_fallthru
        _
      %p520 = scmp.lt.s32.totalorder %s27, 2
      // Predicated region
      $region77: #{tpu_custom_call.1} parent=5 // pred_check
        %p521 = pneg %p520
      $region78: #{tpu_custom_call.1} parent=5 // pred_check_branch
        %523 = sbr.rel (%p521) target = $region80
      $region79: #{tpu_custom_call.1} parent=5 // pred_region
        // Predicated region
        $region81: #{tpu_custom_call.1} parent=79 // pred_check
          %p524 = pneg %p61
        $region82: #{tpu_custom_call.1} parent=79 // pred_check_branch
          %526 = sbr.rel (%p524) target = $region84
        $region83: #{tpu_custom_call.1} parent=79 // pred_region
          %p527 = scmp.lt.s32.totalorder %s34, 1
          %s528 = scalar_select %p527, %s34, 1
          %p529 = scmp.lt.s32.totalorder %s35, 0
          %s530 = scalar_select %p529, %s35, 0
          %s531 = sadd.s32 %s530, %s528
          %s532 = smul.addr %s531, 8
          %s533 = scalar_lea.vmem %s0, %s532
        $region84: #{tpu_custom_call.1} parent=79 // pred_fallthru
          _
        // Predicated region
        $region85: #{tpu_custom_call.1} parent=79 // pred_check
          %p534 = pneg %p87
        $region86: #{tpu_custom_call.1} parent=79 // pred_check_branch
          %536 = sbr.rel (%p534) target = $region88
        $region87: #{tpu_custom_call.1} parent=79 // pred_region
          %p537 = scmp.lt.s32.totalorder %s34, 1
          %s538 = scalar_select %p537, %s34, 1
          %s539 = smul.addr %s538, 4
          %s540 = scalar_lea.vmem %s1, %s539
        $region88: #{tpu_custom_call.1} parent=79 // pred_fallthru
          _
      $region80: #{tpu_custom_call.1} parent=5 // pred_fallthru
        _
      %p541 = scmp.le.s32.totalorder 1, %s27
      %p542 = scmp.lt.s32.totalorder %s27, 3
      %p543 = pnand %p541, %p542
      %p544 = pneg %p543
      // Predicated region
      $region89: #{tpu_custom_call.1} parent=5 // pred_check
        _
      $region90: #{tpu_custom_call.1} parent=5 // pred_check_branch
        %546 = sbr.rel (%p543) target = $region92
      $region91: #{tpu_custom_call.1} parent=5 // pred_region
        %s547 = ssub.s32 %s27, 1
        %p548 = scmp.lt.s32.totalorder %s36, 1
        %s549 = scalar_select %p548, %s36, 1
        %p550 = scmp.lt.s32.totalorder %s37, 0
        %s551 = scalar_select %p550, %s37, 0
        %s552 = sadd.s32 %s551, %s549
        %s553 = smul.addr %s552, 8
        %s554 = scalar_lea.vmem %s0, %s553
        %p555 = pneg %p67
        %p556 = pneg %p64
        %p557 = scmp.lt.s32.totalorder %s36, 1
        %s558 = scalar_select %p557, %s36, 1
        %s559 = smul.addr %s558, 4
        %s560 = scalar_lea.vmem %s1, %s559
        %p561 = pneg %p93
        %p562 = pneg %p90
        %p563 = pneg %p114
        %p564 = pneg %p111
        %p565 = pneg %p135
        %p566 = pneg %p132
        %p567 = pneg %p156
        %p568 = pneg %p153
        %p569 = pneg %p177
        %p570 = pneg %p174
        %p571 = pneg %p198
        %p572 = pneg %p195
        %p573 = pneg %p219
        %p574 = pneg %p216
        %p575 = pneg %p240
        %p576 = pneg %p237
        %p577 = pneg %p261
        %p578 = pneg %p258
        %p579 = pneg %p282
        %p580 = pneg %p279
        %p581 = pneg %p303
        %p582 = pneg %p300
        %p583 = pneg %p324
        %p584 = pneg %p321
        %p585 = pneg %p345
        %p586 = pneg %p342
        %p587 = pneg %p366
        %p588 = pneg %p363
        %p589 = pneg %p387
        %p590 = pneg %p384
        %p591 = pneg %p408
        %p592 = pneg %p405
        %p593 = pneg %p429
        %p594 = pneg %p426
        %p595 = pneg %p457
        %p596 = pneg %p454
        %s597 = sand.u32 %s444, 1
        %s598 = scalar_lea.sflag [#allocation5], %s597
        %s599 = sand.u32 %s444, 1
        %s600 = smul.addr %s599, 8
        %s601 = scalar_lea.vmem [#allocation4], %s600
        %p602 = scmp.lt.s32.totalorder %s36, 1
        %s603 = scalar_select %p602, %s36, 1
        %p604 = scmp.lt.s32.totalorder %s37, 0
        %s605 = scalar_select %p604, %s37, 0
        %s606 = sadd.s32 %s605, %s603
        %s607 = smul.addr %s606, 8
        %s608 = scalar_lea.vmem %s0, %s607
        %p609 = scmp.lt.s32.totalorder %s36, 1
        %s610 = scalar_select %p609, %s36, 1
        %s611 = smul.addr %s610, 4
        %s612 = scalar_lea.vmem %s1, %s611
        %v614 = vld [vmem:[%s608] sm:$0xff]
        %p615 = scmp.eq.s32.totalorder %s37, 0
        // Predicated region
        $region93: #{tpu_custom_call.1} parent=91 // pred_check
          %p616 = pneg %p615
        $region94: #{tpu_custom_call.1} parent=91 // pred_check_branch
          %618 = sbr.rel (%p616) target = $region96
        $region95: #{tpu_custom_call.1} parent=91 // pred_region
          %v619 = vld [vmem:[%s612] sm:$0xf]
          %v620 = vld [vmem:[%s4] sm:$0xf]
          %v621 = vld [vmem:[%s4 + $0x4] sm:$0xf]
          %v622 = vld [vmem:[%s4 + $0x8] sm:$0xf]
          %v623 = vld [vmem:[%s4 + $0xc] sm:$0xf]
          %v624 = vld [vmem:[%s5] sm:$0x1]
          %v626 = vlaneseq
          %v627 = vshrl.u32 %v626, 7
          %v628 = vsub.s32 0, %v627
          %v629 = vrot.slane %v624, %v628
          %v635 = vunpack.c.l.b16 %v620
          %v636 = vunpack.c.l.b16 %v621
          %v637 = vunpack.c.l.b16 %v622
          %v638 = vunpack.c.l.b16 %v623
          %v639 = vpack.c.b16 %v636, %v635
          %v640 = vpack.c.b16 %v638, %v637
          %vm643 = vcmask 261120
          %v645 = vsel %vm643, %v619, 0
          %647 = vmatprep.subr.bf16.mxu0 0
          %648 = vmatpush1.bf16.msra.mxu0 %v639
          %649 = vmatprep.subr.bf16.mxu0 0
          %650 = vmatpush1.bf16.msra.mxu0 %v640
          %651 = vmatprep.subr.bf16.mxu0 0
          %652 = vmatpush1.bf16.msra.mxu0 0
          %653 = vmatprep.subr.bf16.mxu0 0
          %654 = vmatpush1.bf16.msra.mxu0 0
          %655 = vmatprep.subr.bf16.mxu0 0
          %656 = vmatpush1.bf16.msra.mxu0 0
          %657 = vmatprep.subr.bf16.mxu0 0
          %658 = vmatpush1.bf16.msra.mxu0 0
          %659 = vmatprep.subr.bf16.mxu0 0
          %660 = vmatpush1.bf16.msra.mxu0 0
          %661 = vmatprep.subr.bf16.mxu0 0
          %662 = vmatpush1.bf16.msra.mxu0 0
          %663 = vmatprep.subr.bf16.mxu0 0
          %664 = vmatpush1.bf16.msra.mxu0 0
          %665 = vmatprep.subr.bf16.mxu0 0
          %666 = vmatpush1.bf16.msra.mxu0 0
          %667 = vmatprep.subr.bf16.mxu0 0
          %668 = vmatpush1.bf16.msra.mxu0 0
          %669 = vmatprep.subr.bf16.mxu0 0
          %670 = vmatpush1.bf16.msra.mxu0 0
          %671 = vmatprep.subr.bf16.mxu0 0
          %672 = vmatpush1.bf16.msra.mxu0 0
          %673 = vmatprep.subr.bf16.mxu0 0
          %674 = vmatpush1.bf16.msra.mxu0 0
          %675 = vmatprep.subr.bf16.mxu0 0
          %676 = vmatpush1.bf16.msra.mxu0 0
          %677 = vmatprep.subr.bf16.mxu0 0
          %678 = vmatpush1.bf16.msra.mxu0 0
          %679 = vmatprep.mubr.bf16.mxu0 0
          %680 = vmatmul.mubr.bf16.gmra.mrb[0].mxu0 %v645
          %v681 = vpop.f32.mrb[0].mxu0
          %v682 = vadd.f32 %v629, %v681
          %v683 = vpop.f32.mrb[0].mxu0
          %v684 = vpop.f32.mrb[0].mxu0
          %v685 = vpop.f32.mrb[0].mxu0
          %686 = vdwg.mxu0
          %v687 = vpack.c.bf16 %v682, %v682
          %vm688 = vcmask 60416
          %689 = vst.msk [vmem:[#allocation2] sm:$0xf] %vm688, %v687
          %v690 = vld [vmem:[%s6] sm:$0xf]
          %v691 = vld [vmem:[%s6 + $0x4] sm:$0xf]
          %v692 = vld [vmem:[%s6 + $0x8] sm:$0xf]
          %v693 = vld [vmem:[%s6 + $0xc] sm:$0xf]
          %v694 = vld [vmem:[%s7] sm:$0x1]
          %v696 = vlaneseq
          %v697 = vshrl.u32 %v696, 7
          %v698 = vsub.s32 0, %v697
          %v699 = vrot.slane %v694, %v698
          %v705 = vunpack.c.l.b16 %v690
          %v706 = vunpack.c.l.b16 %v691
          %v707 = vunpack.c.l.b16 %v692
          %v708 = vunpack.c.l.b16 %v693
          %v709 = vpack.c.b16 %v706, %v705
          %v710 = vpack.c.b16 %v708, %v707
          %713 = vmatprep.subr.bf16.mxu0 0
          %714 = vmatpush1.bf16.msra.mxu0 %v709
          %715 = vmatprep.subr.bf16.mxu0 0
          %716 = vmatpush1.bf16.msra.mxu0 %v710
          %717 = vmatprep.subr.bf16.mxu0 0
          %718 = vmatpush1.bf16.msra.mxu0 0
          %719 = vmatprep.subr.bf16.mxu0 0
          %720 = vmatpush1.bf16.msra.mxu0 0
          %721 = vmatprep.subr.bf16.mxu0 0
          %722 = vmatpush1.bf16.msra.mxu0 0
          %723 = vmatprep.subr.bf16.mxu0 0
          %724 = vmatpush1.bf16.msra.mxu0 0
          %725 = vmatprep.subr.bf16.mxu0 0
          %726 = vmatpush1.bf16.msra.mxu0 0
          %727 = vmatprep.subr.bf16.mxu0 0
          %728 = vmatpush1.bf16.msra.mxu0 0
          %729 = vmatprep.subr.bf16.mxu0 0
          %730 = vmatpush1.bf16.msra.mxu0 0
          %731 = vmatprep.subr.bf16.mxu0 0
          %732 = vmatpush1.bf16.msra.mxu0 0
          %733 = vmatprep.subr.bf16.mxu0 0
          %734 = vmatpush1.bf16.msra.mxu0 0
          %735 = vmatprep.subr.bf16.mxu0 0
          %736 = vmatpush1.bf16.msra.mxu0 0
          %737 = vmatprep.subr.bf16.mxu0 0
          %738 = vmatpush1.bf16.msra.mxu0 0
          %739 = vmatprep.subr.bf16.mxu0 0
          %740 = vmatpush1.bf16.msra.mxu0 0
          %741 = vmatprep.subr.bf16.mxu0 0
          %742 = vmatpush1.bf16.msra.mxu0 0
          %743 = vmatprep.subr.bf16.mxu0 0
          %744 = vmatpush1.bf16.msra.mxu0 0
          %745 = vmatprep.mubr.bf16.mxu0 0
          %746 = vmatmul.mubr.bf16.gmra.mrb[0].mxu0 %v645
          %v747 = vpop.f32.mrb[0].mxu0
          %v748 = vadd.f32 %v699, %v747
          %v749 = vpop.f32.mrb[0].mxu0
          %v750 = vpop.f32.mrb[0].mxu0
          %v751 = vpop.f32.mrb[0].mxu0
          %752 = vdwg.mxu0
          %v753 = vpack.c.bf16 %v748, %v748
          %754 = vst.msk [vmem:[#allocation3] sm:$0xf] %vm688, %v753
          %s755 = scalar_lea.vmem %s4, 16
          %v756 = vld [vmem:[%s755] sm:$0xf]
          %v757 = vld [vmem:[%s755 + $0x4] sm:$0xf]
          %v758 = vld [vmem:[%s755 + $0x8] sm:$0xf]
          %v759 = vld [vmem:[%s755 + $0xc] sm:$0xf]
          %s760 = scalar_lea.vmem %s5, 1
          %v761 = vld [vmem:[%s760] sm:$0x1]
          %v763 = vlaneseq
          %v764 = vshrl.u32 %v763, 7
          %v765 = vsub.s32 0, %v764
          %v766 = vrot.slane %v761, %v765
          %v772 = vunpack.c.l.b16 %v756
          %v773 = vunpack.c.l.b16 %v757
          %v774 = vunpack.c.l.b16 %v758
          %v775 = vunpack.c.l.b16 %v759
          %v776 = vpack.c.b16 %v773, %v772
          %v777 = vpack.c.b16 %v775, %v774
          %780 = vmatprep.subr.bf16.mxu0 0
          %781 = vmatpush1.bf16.msra.mxu0 %v776
          %782 = vmatprep.subr.bf16.mxu0 0
          %783 = vmatpush1.bf16.msra.mxu0 %v777
          %784 = vmatprep.subr.bf16.mxu0 0
          %785 = vmatpush1.bf16.msra.mxu0 0
          %786 = vmatprep.subr.bf16.mxu0 0
          %787 = vmatpush1.bf16.msra.mxu0 0
          %788 = vmatprep.subr.bf16.mxu0 0
          %789 = vmatpush1.bf16.msra.mxu0 0
          %790 = vmatprep.subr.bf16.mxu0 0
          %791 = vmatpush1.bf16.msra.mxu0 0
          %792 = vmatprep.subr.bf16.mxu0 0
          %793 = vmatpush1.bf16.msra.mxu0 0
          %794 = vmatprep.subr.bf16.mxu0 0
          %795 = vmatpush1.bf16.msra.mxu0 0
          %796 = vmatprep.subr.bf16.mxu0 0
          %797 = vmatpush1.bf16.msra.mxu0 0
          %798 = vmatprep.subr.bf16.mxu0 0
          %799 = vmatpush1.bf16.msra.mxu0 0
          %800 = vmatprep.subr.bf16.mxu0 0
          %801 = vmatpush1.bf16.msra.mxu0 0
          %802 = vmatprep.subr.bf16.mxu0 0
          %803 = vmatpush1.bf16.msra.mxu0 0
          %804 = vmatprep.subr.bf16.mxu0 0
          %805 = vmatpush1.bf16.msra.mxu0 0
          %806 = vmatprep.subr.bf16.mxu0 0
          %807 = vmatpush1.bf16.msra.mxu0 0
          %808 = vmatprep.subr.bf16.mxu0 0
          %809 = vmatpush1.bf16.msra.mxu0 0
          %810 = vmatprep.subr.bf16.mxu0 0
          %811 = vmatpush1.bf16.msra.mxu0 0
          %812 = vmatprep.mubr.bf16.mxu0 0
          %813 = vmatmul.mubr.bf16.gmra.mrb[0].mxu0 %v645
          %v814 = vpop.f32.mrb[0].mxu0
          %v815 = vadd.f32 %v766, %v814
          %v816 = vpop.f32.mrb[0].mxu0
          %v817 = vpop.f32.mrb[0].mxu0
          %v818 = vpop.f32.mrb[0].mxu0
          %819 = vdwg.mxu0
          %v820 = vpack.c.bf16 %v815, %v815
          %s821 = scalar_lea.vmem [#allocation2], 4
          %822 = vst.msk [vmem:[%s821] sm:$0xf] %vm688, %v820
          %s823 = scalar_lea.vmem %s6, 16
          %v824 = vld [vmem:[%s823] sm:$0xf]
          %v825 = vld [vmem:[%s823 + $0x4] sm:$0xf]
          %v826 = vld [vmem:[%s823 + $0x8] sm:$0xf]
          %v827 = vld [vmem:[%s823 + $0xc] sm:$0xf]
          %s828 = scalar_lea.vmem %s7, 1
          %v829 = vld [vmem:[%s828] sm:$0x1]
          %v831 = vlaneseq
          %v832 = vshrl.u32 %v831, 7
          %v833 = vsub.s32 0, %v832
          %v834 = vrot.slane %v829, %v833
          %v840 = vunpack.c.l.b16 %v824
          %v841 = vunpack.c.l.b16 %v825
          %v842 = vunpack.c.l.b16 %v826
          %v843 = vunpack.c.l.b16 %v827
          %v844 = vpack.c.b16 %v841, %v840
          %v845 = vpack.c.b16 %v843, %v842
          %848 = vmatprep.subr.bf16.mxu0 0
          %849 = vmatpush1.bf16.msra.mxu0 %v844
          %850 = vmatprep.subr.bf16.mxu0 0
          %851 = vmatpush1.bf16.msra.mxu0 %v845
          %852 = vmatprep.subr.bf16.mxu0 0
          %853 = vmatpush1.bf16.msra.mxu0 0
          %854 = vmatprep.subr.bf16.mxu0 0
          %855 = vmatpush1.bf16.msra.mxu0 0
          %856 = vmatprep.subr.bf16.mxu0 0
          %857 = vmatpush1.bf16.msra.mxu0 0
          %858 = vmatprep.subr.bf16.mxu0 0
          %859 = vmatpush1.bf16.msra.mxu0 0
          %860 = vmatprep.subr.bf16.mxu0 0
          %861 = vmatpush1.bf16.msra.mxu0 0
          %862 = vmatprep.subr.bf16.mxu0 0
          %863 = vmatpush1.bf16.msra.mxu0 0
          %864 = vmatprep.subr.bf16.mxu0 0
          %865 = vmatpush1.bf16.msra.mxu0 0
          %866 = vmatprep.subr.bf16.mxu0 0
          %867 = vmatpush1.bf16.msra.mxu0 0
          %868 = vmatprep.subr.bf16.mxu0 0
          %869 = vmatpush1.bf16.msra.mxu0 0
          %870 = vmatprep.subr.bf16.mxu0 0
          %871 = vmatpush1.bf16.msra.mxu0 0
          %872 = vmatprep.subr.bf16.mxu0 0
          %873 = vmatpush1.bf16.msra.mxu0 0
          %874 = vmatprep.subr.bf16.mxu0 0
          %875 = vmatpush1.bf16.msra.mxu0 0
          %876 = vmatprep.subr.bf16.mxu0 0
          %877 = vmatpush1.bf16.msra.mxu0 0
          %878 = vmatprep.subr.bf16.mxu0 0
          %879 = vmatpush1.bf16.msra.mxu0 0
          %880 = vmatprep.mubr.bf16.mxu0 0
          %881 = vmatmul.mubr.bf16.gmra.mrb[0].mxu0 %v645
          %v882 = vpop.f32.mrb[0].mxu0
          %v883 = vadd.f32 %v834, %v882
          %v884 = vpop.f32.mrb[0].mxu0
          %v885 = vpop.f32.mrb[0].mxu0
          %v886 = vpop.f32.mrb[0].mxu0
          %887 = vdwg.mxu0
          %v888 = vpack.c.bf16 %v883, %v883
          %s889 = scalar_lea.vmem [#allocation3], 4
          %890 = vst.msk [vmem:[%s889] sm:$0xf] %vm688, %v888
          %s891 = scalar_lea.vmem %s4, 32
          %v892 = vld [vmem:[%s891] sm:$0xf]
          %v893 = vld [vmem:[%s891 + $0x4] sm:$0xf]
          %v894 = vld [vmem:[%s891 + $0x8] sm:$0xf]
          %v895 = vld [vmem:[%s891 + $0xc] sm:$0xf]
          %s896 = scalar_lea.vmem %s5, 2
          %v897 = vld [vmem:[%s896] sm:$0x1]
          %v899 = vlaneseq
          %v900 = vshrl.u32 %v899, 7
          %v901 = vsub.s32 0, %v900
          %v902 = vrot.slane %v897, %v901
          %v908 = vunpack.c.l.b16 %v892
          %v909 = vunpack.c.l.b16 %v893
          %v910 = vunpack.c.l.b16 %v894
          %v911 = vunpack.c.l.b16 %v895
          %v912 = vpack.c.b16 %v909, %v908
          %v913 = vpack.c.b16 %v911, %v910
          %916 = vmatprep.subr.bf16.mxu0 0
          %917 = vmatpush1.bf16.msra.mxu0 %v912
          %918 = vmatprep.subr.bf16.mxu0 0
          %919 = vmatpush1.bf16.msra.mxu0 %v913
          %920 = vmatprep.subr.bf16.mxu0 0
          %921 = vmatpush1.bf16.msra.mxu0 0
          %922 = vmatprep.subr.bf16.mxu0 0
          %923 = vmatpush1.bf16.msra.mxu0 0
          %924 = vmatprep.subr.bf16.mxu0 0
          %925 = vmatpush1.bf16.msra.mxu0 0
          %926 = vmatprep.subr.bf16.mxu0 0
          %927 = vmatpush1.bf16.msra.mxu0 0
          %928 = vmatprep.subr.bf16.mxu0 0
          %929 = vmatpush1.bf16.msra.mxu0 0
          %930 = vmatprep.subr.bf16.mxu0 0
          %931 = vmatpush1.bf16.msra.mxu0 0
          %932 = vmatprep.subr.bf16.mxu0 0
          %933 = vmatpush1.bf16.msra.mxu0 0
          %934 = vmatprep.subr.bf16.mxu0 0
          %935 = vmatpush1.bf16.msra.mxu0 0
          %936 = vmatprep.subr.bf16.mxu0 0
          %937 = vmatpush1.bf16.msra.mxu0 0
          %938 = vmatprep.subr.bf16.mxu0 0
          %939 = vmatpush1.bf16.msra.mxu0 0
          %940 = vmatprep.subr.bf16.mxu0 0
          %941 = vmatpush1.bf16.msra.mxu0 0
          %942 = vmatprep.subr.bf16.mxu0 0
          %943 = vmatpush1.bf16.msra.mxu0 0
          %944 = vmatprep.subr.bf16.mxu0 0
          %945 = vmatpush1.bf16.msra.mxu0 0
          %946 = vmatprep.subr.bf16.mxu0 0
          %947 = vmatpush1.bf16.msra.mxu0 0
          %948 = vmatprep.mubr.bf16.mxu0 0
          %949 = vmatmul.mubr.bf16.gmra.mrb[0].mxu0 %v645
          %v950 = vpop.f32.mrb[0].mxu0
          %v951 = vadd.f32 %v902, %v950
          %v952 = vpop.f32.mrb[0].mxu0
          %v953 = vpop.f32.mrb[0].mxu0
          %v954 = vpop.f32.mrb[0].mxu0
          %955 = vdwg.mxu0
          %v956 = vpack.c.bf16 %v951, %v951
          %s957 = scalar_lea.vmem [#allocation2], 8
          %958 = vst.msk [vmem:[%s957] sm:$0xf] %vm688, %v956
          %s959 = scalar_lea.vmem %s6, 32
          %v960 = vld [vmem:[%s959] sm:$0xf]
          %v961 = vld [vmem:[%s959 + $0x4] sm:$0xf]
          %v962 = vld [vmem:[%s959 + $0x8] sm:$0xf]
          %v963 = vld [vmem:[%s959 + $0xc] sm:$0xf]
          %s964 = scalar_lea.vmem %s7, 2
          %v965 = vld [vmem:[%s964] sm:$0x1]
          %v967 = vlaneseq
          %v968 = vshrl.u32 %v967, 7
          %v969 = vsub.s32 0, %v968
          %v970 = vrot.slane %v965, %v969
          %v976 = vunpack.c.l.b16 %v960
          %v977 = vunpack.c.l.b16 %v961
          %v978 = vunpack.c.l.b16 %v962
          %v979 = vunpack.c.l.b16 %v963
          %v980 = vpack.c.b16 %v977, %v976
          %v981 = vpack.c.b16 %v979, %v978
          %984 = vmatprep.subr.bf16.mxu0 0
          %985 = vmatpush1.bf16.msra.mxu0 %v980
          %986 = vmatprep.subr.bf16.mxu0 0
          %987 = vmatpush1.bf16.msra.mxu0 %v981
          %988 = vmatprep.subr.bf16.mxu0 0
          %989 = vmatpush1.bf16.msra.mxu0 0
          %990 = vmatprep.subr.bf16.mxu0 0
          %991 = vmatpush1.bf16.msra.mxu0 0
          %992 = vmatprep.subr.bf16.mxu0 0
          %993 = vmatpush1.bf16.msra.mxu0 0
          %994 = vmatprep.subr.bf16.mxu0 0
          %995 = vmatpush1.bf16.msra.mxu0 0
          %996 = vmatprep.subr.bf16.mxu0 0
          %997 = vmatpush1.bf16.msra.mxu0 0
          %998 = vmatprep.subr.bf16.mxu0 0
          %999 = vmatpush1.bf16.msra.mxu0 0
          %1000 = vmatprep.subr.bf16.mxu0 0
          %1001 = vmatpush1.bf16.msra.mxu0 0
          %1002 = vmatprep.subr.bf16.mxu0 0
          %1003 = vmatpush1.bf16.msra.mxu0 0
          %1004 = vmatprep.subr.bf16.mxu0 0
          %1005 = vmatpush1.bf16.msra.mxu0 0
          %1006 = vmatprep.subr.bf16.mxu0 0
          %1007 = vmatpush1.bf16.msra.mxu0 0
          %1008 = vmatprep.subr.bf16.mxu0 0
          %1009 = vmatpush1.bf16.msra.mxu0 0
          %1010 = vmatprep.subr.bf16.mxu0 0
          %1011 = vmatpush1.bf16.msra.mxu0 0
          %1012 = vmatprep.subr.bf16.mxu0 0
          %1013 = vmatpush1.bf16.msra.mxu0 0
          %1014 = vmatprep.subr.bf16.mxu0 0
          %1015 = vmatpush1.bf16.msra.mxu0 0
          %1016 = vmatprep.mubr.bf16.mxu0 0
          %1017 = vmatmul.mubr.bf16.gmra.mrb[0].mxu0 %v645
          %v1018 = vpop.f32.mrb[0].mxu0
          %v1019 = vadd.f32 %v970, %v1018
          %v1020 = vpop.f32.mrb[0].mxu0
          %v1021 = vpop.f32.mrb[0].mxu0
          %v1022 = vpop.f32.mrb[0].mxu0
          %1023 = vdwg.mxu0
          %v1024 = vpack.c.bf16 %v1019, %v1019
          %s1025 = scalar_lea.vmem [#allocation3], 8
          %1026 = vst.msk [vmem:[%s1025] sm:$0xf] %vm688, %v1024
          %s1027 = scalar_lea.vmem %s4, 48
          %v1028 = vld [vmem:[%s1027] sm:$0xf]
          %v1029 = vld [vmem:[%s1027 + $0x4] sm:$0xf]
          %v1030 = vld [vmem:[%s1027 + $0x8] sm:$0xf]
          %v1031 = vld [vmem:[%s1027 + $0xc] sm:$0xf]
          %s1032 = scalar_lea.vmem %s5, 3
          %v1033 = vld [vmem:[%s1032] sm:$0x1]
          %v1035 = vlaneseq
          %v1036 = vshrl.u32 %v1035, 7
          %v1037 = vsub.s32 0, %v1036
          %v1038 = vrot.slane %v1033, %v1037
          %v1044 = vunpack.c.l.b16 %v1028
          %v1045 = vunpack.c.l.b16 %v1029
          %v1046 = vunpack.c.l.b16 %v1030
          %v1047 = vunpack.c.l.b16 %v1031
          %v1048 = vpack.c.b16 %v1045, %v1044
          %v1049 = vpack.c.b16 %v1047, %v1046
          %1052 = vmatprep.subr.bf16.mxu0 0
          %1053 = vmatpush1.bf16.msra.mxu0 %v1048
          %1054 = vmatprep.subr.bf16.mxu0 0
          %1055 = vmatpush1.bf16.msra.mxu0 %v1049
          %1056 = vmatprep.subr.bf16.mxu0 0
          %1057 = vmatpush1.bf16.msra.mxu0 0
          %1058 = vmatprep.subr.bf16.mxu0 0
          %1059 = vmatpush1.bf16.msra.mxu0 0
          %1060 = vmatprep.subr.bf16.mxu0 0
          %1061 = vmatpush1.bf16.msra.mxu0 0
          %1062 = vmatprep.subr.bf16.mxu0 0
          %1063 = vmatpush1.bf16.msra.mxu0 0
          %1064 = vmatprep.subr.bf16.mxu0 0
          %1065 = vmatpush1.bf16.msra.mxu0 0
          %1066 = vmatprep.subr.bf16.mxu0 0
          %1067 = vmatpush1.bf16.msra.mxu0 0
          %1068 = vmatprep.subr.bf16.mxu0 0
          %1069 = vmatpush1.bf16.msra.mxu0 0
          %1070 = vmatprep.subr.bf16.mxu0 0
          %1071 = vmatpush1.bf16.msra.mxu0 0
          %1072 = vmatprep.subr.bf16.mxu0 0
          %1073 = vmatpush1.bf16.msra.mxu0 0
          %1074 = vmatprep.subr.bf16.mxu0 0
          %1075 = vmatpush1.bf16.msra.mxu0 0
          %1076 = vmatprep.subr.bf16.mxu0 0
          %1077 = vmatpush1.bf16.msra.mxu0 0
          %1078 = vmatprep.subr.bf16.mxu0 0
          %1079 = vmatpush1.bf16.msra.mxu0 0
          %1080 = vmatprep.subr.bf16.mxu0 0
          %1081 = vmatpush1.bf16.msra.mxu0 0
          %1082 = vmatprep.subr.bf16.mxu0 0
          %1083 = vmatpush1.bf16.msra.mxu0 0
          %1084 = vmatprep.mubr.bf16.mxu0 0
          %1085 = vmatmul.mubr.bf16.gmra.mrb[0].mxu0 %v645
          %v1086 = vpop.f32.mrb[0].mxu0
          %v1087 = vadd.f32 %v1038, %v1086
          %v1088 = vpop.f32.mrb[0].mxu0
          %v1089 = vpop.f32.mrb[0].mxu0
          %v1090 = vpop.f32.mrb[0].mxu0
          %1091 = vdwg.mxu0
          %v1092 = vpack.c.bf16 %v1087, %v1087
          %s1093 = scalar_lea.vmem [#allocation2], 12
          %1094 = vst.msk [vmem:[%s1093] sm:$0xf] %vm688, %v1092
          %s1095 = scalar_lea.vmem %s6, 48
          %v1096 = vld [vmem:[%s1095] sm:$0xf]
          %v1097 = vld [vmem:[%s1095 + $0x4] sm:$0xf]
          %v1098 = vld [vmem:[%s1095 + $0x8] sm:$0xf]
          %v1099 = vld [vmem:[%s1095 + $0xc] sm:$0xf]
          %s1100 = scalar_lea.vmem %s7, 3
          %v1101 = vld [vmem:[%s1100] sm:$0x1]
          %v1103 = vlaneseq
          %v1104 = vshrl.u32 %v1103, 7
          %v1105 = vsub.s32 0, %v1104
          %v1106 = vrot.slane %v1101, %v1105
          %v1112 = vunpack.c.l.b16 %v1096
          %v1113 = vunpack.c.l.b16 %v1097
          %v1114 = vunpack.c.l.b16 %v1098
          %v1115 = vunpack.c.l.b16 %v1099
          %v1116 = vpack.c.b16 %v1113, %v1112
          %v1117 = vpack.c.b16 %v1115, %v1114
          %1120 = vmatprep.subr.bf16.mxu0 0
          %1121 = vmatpush1.bf16.msra.mxu0 %v1116
          %1122 = vmatprep.subr.bf16.mxu0 0
          %1123 = vmatpush1.bf16.msra.mxu0 %v1117
          %1124 = vmatprep.subr.bf16.mxu0 0
          %1125 = vmatpush1.bf16.msra.mxu0 0
          %1126 = vmatprep.subr.bf16.mxu0 0
          %1127 = vmatpush1.bf16.msra.mxu0 0
          %1128 = vmatprep.subr.bf16.mxu0 0
          %1129 = vmatpush1.bf16.msra.mxu0 0
          %1130 = vmatprep.subr.bf16.mxu0 0
          %1131 = vmatpush1.bf16.msra.mxu0 0
          %1132 = vmatprep.subr.bf16.mxu0 0
          %1133 = vmatpush1.bf16.msra.mxu0 0
          %1134 = vmatprep.subr.bf16.mxu0 0
          %1135 = vmatpush1.bf16.msra.mxu0 0
          %1136 = vmatprep.subr.bf16.mxu0 0
          %1137 = vmatpush1.bf16.msra.mxu0 0
          %1138 = vmatprep.subr.bf16.mxu0 0
          %1139 = vmatpush1.bf16.msra.mxu0 0
          %1140 = vmatprep.subr.bf16.mxu0 0
          %1141 = vmatpush1.bf16.msra.mxu0 0
          %1142 = vmatprep.subr.bf16.mxu0 0
          %1143 = vmatpush1.bf16.msra.mxu0 0
          %1144 = vmatprep.subr.bf16.mxu0 0
          %1145 = vmatpush1.bf16.msra.mxu0 0
          %1146 = vmatprep.subr.bf16.mxu0 0
          %1147 = vmatpush1.bf16.msra.mxu0 0
          %1148 = vmatprep.subr.bf16.mxu0 0
          %1149 = vmatpush1.bf16.msra.mxu0 0
          %1150 = vmatprep.subr.bf16.mxu0 0
          %1151 = vmatpush1.bf16.msra.mxu0 0
          %1152 = vmatprep.mubr.bf16.mxu0 0
          %1153 = vmatmul.mubr.bf16.gmra.mrb[0].mxu0 %v645
          %v1154 = vpop.f32.mrb[0].mxu0
          %v1155 = vadd.f32 %v1106, %v1154
          %v1156 = vpop.f32.mrb[0].mxu0
          %v1157 = vpop.f32.mrb[0].mxu0
          %v1158 = vpop.f32.mrb[0].mxu0
          %1159 = vdwg.mxu0
          %v1160 = vpack.c.bf16 %v1155, %v1155
          %s1161 = scalar_lea.vmem [#allocation3], 12
          %1162 = vst.msk [vmem:[%s1161] sm:$0xf] %vm688, %v1160
        $region96: #{tpu_custom_call.1} parent=91 // pred_fallthru
          _
        %v1163 = vpack.c.bf16 %v614, %v614
        %v1164 = vld [vmem:[%s2] sm:$0xf]
        %v1165 = vld [vmem:[%s2 + $0x4] sm:$0xf]
        %v1166 = vld [vmem:[%s2 + $0x8] sm:$0xf]
        %v1167 = vld [vmem:[%s2 + $0xc] sm:$0xf]
        %v1168 = vld [vmem:[%s3] sm:$0x1]
        %v1170 = vlaneseq
        %v1171 = vshrl.u32 %v1170, 7
        %v1172 = vsub.s32 0, %v1171
        %v1173 = vrot.slane %v1168, %v1172
        %v1179 = vunpack.c.l.b16 %v1164
        %v1180 = vunpack.c.l.b16 %v1165
        %v1181 = vunpack.c.l.b16 %v1166
        %v1182 = vunpack.c.l.b16 %v1167
        %v1183 = vpack.c.b16 %v1180, %v1179
        %v1184 = vpack.c.b16 %v1182, %v1181
        %vm1187 = vcmask 261120
        %v1189 = vsel %vm1187, %v1163, 0
        %1191 = vmatprep.subr.bf16.mxu0 0
        %1192 = vmatpush1.bf16.msra.mxu0 %v1183
        %1193 = vmatprep.subr.bf16.mxu0 0
        %1194 = vmatpush1.bf16.msra.mxu0 %v1184
        %1195 = vmatprep.subr.bf16.mxu0 0
        %1196 = vmatpush1.bf16.msra.mxu0 0
        %1197 = vmatprep.subr.bf16.mxu0 0
        %1198 = vmatpush1.bf16.msra.mxu0 0
        %1199 = vmatprep.subr.bf16.mxu0 0
        %1200 = vmatpush1.bf16.msra.mxu0 0
        %1201 = vmatprep.subr.bf16.mxu0 0
        %1202 = vmatpush1.bf16.msra.mxu0 0
        %1203 = vmatprep.subr.bf16.mxu0 0
        %1204 = vmatpush1.bf16.msra.mxu0 0
        %1205 = vmatprep.subr.bf16.mxu0 0
        %1206 = vmatpush1.bf16.msra.mxu0 0
        %1207 = vmatprep.subr.bf16.mxu0 0
        %1208 = vmatpush1.bf16.msra.mxu0 0
        %1209 = vmatprep.subr.bf16.mxu0 0
        %1210 = vmatpush1.bf16.msra.mxu0 0
        %1211 = vmatprep.subr.bf16.mxu0 0
        %1212 = vmatpush1.bf16.msra.mxu0 0
        %1213 = vmatprep.subr.bf16.mxu0 0
        %1214 = vmatpush1.bf16.msra.mxu0 0
        %1215 = vmatprep.subr.bf16.mxu0 0
        %1216 = vmatpush1.bf16.msra.mxu0 0
        %1217 = vmatprep.subr.bf16.mxu0 0
        %1218 = vmatpush1.bf16.msra.mxu0 0
        %1219 = vmatprep.subr.bf16.mxu0 0
        %1220 = vmatpush1.bf16.msra.mxu0 0
        %1221 = vmatprep.subr.bf16.mxu0 0
        %1222 = vmatpush1.bf16.msra.mxu0 0
        %1223 = vmatprep.mubr.bf16.mxu0 0
        %1224 = vmatmul.mubr.bf16.gmra.mrb[0].mxu0 %v1189
        %v1225 = vpop.f32.mrb[0].mxu0
        %v1226 = vadd.f32 %v1173, %v1225
        %v1227 = vpop.f32.mrb[0].mxu0
        %v1228 = vpop.f32.mrb[0].mxu0
        %v1229 = vpop.f32.mrb[0].mxu0
        %1230 = vdwg.mxu0
        %v1231 = vmul.f32 %v1226, 0.35355338
        %v1232 = vld [vmem:[#allocation2] sm:$0xf]
        %v1233 = vld [vmem:[#allocation3] sm:$0xf]
        %v1234 = vpack.c.bf16 %v1231, %v1231
        %vm1235 = vcmask 64512
        %v1237 = vsel %vm1235, %v1234, 0
        %v1240 = vsel %vm1235, %v1232, 0
        %1242 = vmatprep.subr.bf16.mxu0 0
        %1243 = vmatpush1.bf16.xpose.msra.mxu0 %v1240
        %1244 = vmatprep.subr.bf16.mxu0 0
        %1245 = vmatpush1.bf16.xpose.msra.mxu0 0
        %1246 = vmatprep.subr.bf16.mxu0 0
        %1247 = vmatpush1.bf16.xpose.msra.mxu0 0
        %1248 = vmatprep.subr.bf16.mxu0 0
        %1249 = vmatpush1.bf16.xpose.msra.mxu0 0
        %1250 = vmatprep.subr.bf16.mxu0 0
        %1251 = vmatpush1.bf16.xpose.msra.mxu0 0
        %1252 = vmatprep.subr.bf16.mxu0 0
        %1253 = vmatpush1.bf16.xpose.msra.mxu0 0
        %1254 = vmatprep.subr.bf16.mxu0 0
        %1255 = vmatpush1.bf16.xpose.msra.mxu0 0
        %1256 = vmatprep.subr.bf16.mxu0 0
        %1257 = vmatpush1.bf16.xpose.msra.mxu0 0
        %1258 = vmatprep.subr.bf16.mxu0 0
        %1259 = vmatpush1.bf16.xpose.msra.mxu0 0
        %1260 = vmatprep.subr.bf16.mxu0 0
        %1261 = vmatpush1.bf16.xpose.msra.mxu0 0
        %1262 = vmatprep.subr.bf16.mxu0 0
        %1263 = vmatpush1.bf16.xpose.msra.mxu0 0
        %1264 = vmatprep.subr.bf16.mxu0 0
        %1265 = vmatpush1.bf16.xpose.msra.mxu0 0
        %1266 = vmatprep.subr.bf16.mxu0 0
        %1267 = vmatpush1.bf16.xpose.msra.mxu0 0
        %1268 = vmatprep.subr.bf16.mxu0 0
        %1269 = vmatpush1.bf16.xpose.msra.mxu0 0
        %1270 = vmatprep.subr.bf16.mxu0 0
        %1271 = vmatpush1.bf16.xpose.msra.mxu0 0
        %1272 = vmatprep.subr.bf16.mxu0 0
        %1273 = vmatpush1.bf16.xpose.msra.mxu0 0
        %1274 = vmatprep.mubr.bf16.mxu0 0
        %1275 = vmatmul.mubr.bf16.gmra.mrb[0].mxu0 %v1237
        %v1276 = vpop.f32.mrb[0].mxu0
        %v1277 = vadd.f32 0.0, %v1276
        %v1278 = vpop.f32.mrb[0].mxu0
        %v1279 = vpop.f32.mrb[0].mxu0
        %v1280 = vpop.f32.mrb[0].mxu0
        %1281 = vdwg.mxu0
        %v1282 = vsel %vm1235, %v1277, -inf
        %1283 = vmax.xlane.f32.xlu0 %v1282
        %v1284 = vpop.xlane.xlu0 %1283
        %v1285 = vsub.f32 %v1277, %v1284
        %v1286 = vmul.f32 %v1285, 1.442695
        %v1287 = vpow.pop %v1286
        %v1288 = vsel %vm1235, %v1287, 0.0
        %1289 = vadd.xlane.f32.xlu0 %v1288
        %v1290 = vpop.xlane.xlu0 %1289
        %v1291 = vrcp.pop %v1290
        %v1292 = vmul.f32 %v1287, %v1291
        %v1293 = vpack.c.bf16 %v1292, %v1292
        %v1295 = vsel %vm1235, %v1293, 0
        %vm1297 = vcmask 1043456
        %v1299 = vsel %vm1297, %v1233, 0
        %1301 = vmatprep.subr.bf16.mxu0 0
        %1302 = vmatpush1.bf16.msra.mxu0 %v1299
        %1303 = vmatprep.subr.bf16.mxu0 0
        %1304 = vmatpush1.bf16.msra.mxu0 0
        %1305 = vmatprep.subr.bf16.mxu0 0
        %1306 = vmatpush1.bf16.msra.mxu0 0
        %1307 = vmatprep.subr.bf16.mxu0 0
        %1308 = vmatpush1.bf16.msra.mxu0 0
        %1309 = vmatprep.subr.bf16.mxu0 0
        %1310 = vmatpush1.bf16.msra.mxu0 0
        %1311 = vmatprep.subr.bf16.mxu0 0
        %1312 = vmatpush1.bf16.msra.mxu0 0
        %1313 = vmatprep.subr.bf16.mxu0 0
        %1314 = vmatpush1.bf16.msra.mxu0 0
        %1315 = vmatprep.subr.bf16.mxu0 0
        %1316 = vmatpush1.bf16.msra.mxu0 0
        %1317 = vmatprep.subr.bf16.mxu0 0
        %1318 = vmatpush1.bf16.msra.mxu0 0
        %1319 = vmatprep.subr.bf16.mxu0 0
        %1320 = vmatpush1.bf16.msra.mxu0 0
        %1321 = vmatprep.subr.bf16.mxu0 0
        %1322 = vmatpush1.bf16.msra.mxu0 0
        %1323 = vmatprep.subr.bf16.mxu0 0
        %1324 = vmatpush1.bf16.msra.mxu0 0
        %1325 = vmatprep.subr.bf16.mxu0 0
        %1326 = vmatpush1.bf16.msra.mxu0 0
        %1327 = vmatprep.subr.bf16.mxu0 0
        %1328 = vmatpush1.bf16.msra.mxu0 0
        %1329 = vmatprep.subr.bf16.mxu0 0
        %1330 = vmatpush1.bf16.msra.mxu0 0
        %1331 = vmatprep.subr.bf16.mxu0 0
        %1332 = vmatpush1.bf16.msra.mxu0 0
        %1333 = vmatprep.mubr.bf16.mxu0 0
        %1334 = vmatmul.mubr.bf16.gmra.mrb[0].mxu0 %v1295
        %v1335 = vpop.f32.mrb[0].mxu0
        %v1336 = vadd.f32 0.0, %v1335
        %v1337 = vpop.f32.mrb[0].mxu0
        %v1338 = vpop.f32.mrb[0].mxu0
        %v1339 = vpop.f32.mrb[0].mxu0
        %1340 = vdwg.mxu0
        %v1341 = vpack.c.bf16 %v1336, %v1336
        %v1342 = vld [vmem:[%s8] sm:$0xf]
        %s1343 = scalar_lea.vmem %s2, 16
        %v1344 = vld [vmem:[%s1343] sm:$0xf]
        %v1345 = vld [vmem:[%s1343 + $0x4] sm:$0xf]
        %v1346 = vld [vmem:[%s1343 + $0x8] sm:$0xf]
        %v1347 = vld [vmem:[%s1343 + $0xc] sm:$0xf]
        %s1348 = scalar_lea.vmem %s3, 1
        %v1349 = vld [vmem:[%s1348] sm:$0x1]
        %v1351 = vlaneseq
        %v1352 = vshrl.u32 %v1351, 7
        %v1353 = vsub.s32 0, %v1352
        %v1354 = vrot.slane %v1349, %v1353
        %v1360 = vunpack.c.l.b16 %v1344
        %v1361 = vunpack.c.l.b16 %v1345
        %v1362 = vunpack.c.l.b16 %v1346
        %v1363 = vunpack.c.l.b16 %v1347
        %v1364 = vpack.c.b16 %v1361, %v1360
        %v1365 = vpack.c.b16 %v1363, %v1362
        %1368 = vmatprep.subr.bf16.mxu0 0
        %1369 = vmatpush1.bf16.msra.mxu0 %v1364
        %1370 = vmatprep.subr.bf16.mxu0 0
        %1371 = vmatpush1.bf16.msra.mxu0 %v1365
        %1372 = vmatprep.subr.bf16.mxu0 0
        %1373 = vmatpush1.bf16.msra.mxu0 0
        %1374 = vmatprep.subr.bf16.mxu0 0
        %1375 = vmatpush1.bf16.msra.mxu0 0
        %1376 = vmatprep.subr.bf16.mxu0 0
        %1377 = vmatpush1.bf16.msra.mxu0 0
        %1378 = vmatprep.subr.bf16.mxu0 0
        %1379 = vmatpush1.bf16.msra.mxu0 0
        %1380 = vmatprep.subr.bf16.mxu0 0
        %1381 = vmatpush1.bf16.msra.mxu0 0
        %1382 = vmatprep.subr.bf16.mxu0 0
        %1383 = vmatpush1.bf16.msra.mxu0 0
        %1384 = vmatprep.subr.bf16.mxu0 0
        %1385 = vmatpush1.bf16.msra.mxu0 0
        %1386 = vmatprep.subr.bf16.mxu0 0
        %1387 = vmatpush1.bf16.msra.mxu0 0
        %1388 = vmatprep.subr.bf16.mxu0 0
        %1389 = vmatpush1.bf16.msra.mxu0 0
        %1390 = vmatprep.subr.bf16.mxu0 0
        %1391 = vmatpush1.bf16.msra.mxu0 0
        %1392 = vmatprep.subr.bf16.mxu0 0
        %1393 = vmatpush1.bf16.msra.mxu0 0
        %1394 = vmatprep.subr.bf16.mxu0 0
        %1395 = vmatpush1.bf16.msra.mxu0 0
        %1396 = vmatprep.subr.bf16.mxu0 0
        %1397 = vmatpush1.bf16.msra.mxu0 0
        %1398 = vmatprep.subr.bf16.mxu0 0
        %1399 = vmatpush1.bf16.msra.mxu0 0
        %1400 = vmatprep.mubr.bf16.mxu0 0
        %1401 = vmatmul.mubr.bf16.gmra.mrb[0].mxu0 %v1189
        %v1402 = vpop.f32.mrb[0].mxu0
        %v1403 = vadd.f32 %v1354, %v1402
        %v1404 = vpop.f32.mrb[0].mxu0
        %v1405 = vpop.f32.mrb[0].mxu0
        %v1406 = vpop.f32.mrb[0].mxu0
        %1407 = vdwg.mxu0
        %v1408 = vmul.f32 %v1403, 0.35355338
        %s1409 = scalar_lea.vmem [#allocation2], 4
        %v1410 = vld [vmem:[%s1409] sm:$0xf]
        %s1411 = scalar_lea.vmem [#allocation3], 4
        %v1412 = vld [vmem:[%s1411] sm:$0xf]
        %v1413 = vpack.c.bf16 %v1408, %v1408
        %v1415 = vsel %vm1235, %v1413, 0
        %v1418 = vsel %vm1235, %v1410, 0
        %1420 = vmatprep.subr.bf16.mxu0 0
        %1421 = vmatpush1.bf16.xpose.msra.mxu0 %v1418
        %1422 = vmatprep.subr.bf16.mxu0 0
        %1423 = vmatpush1.bf16.xpose.msra.mxu0 0
        %1424 = vmatprep.subr.bf16.mxu0 0
        %1425 = vmatpush1.bf16.xpose.msra.mxu0 0
        %1426 = vmatprep.subr.bf16.mxu0 0
        %1427 = vmatpush1.bf16.xpose.msra.mxu0 0
        %1428 = vmatprep.subr.bf16.mxu0 0
        %1429 = vmatpush1.bf16.xpose.msra.mxu0 0
        %1430 = vmatprep.subr.bf16.mxu0 0
        %1431 = vmatpush1.bf16.xpose.msra.mxu0 0
        %1432 = vmatprep.subr.bf16.mxu0 0
        %1433 = vmatpush1.bf16.xpose.msra.mxu0 0
        %1434 = vmatprep.subr.bf16.mxu0 0
        %1435 = vmatpush1.bf16.xpose.msra.mxu0 0
        %1436 = vmatprep.subr.bf16.mxu0 0
        %1437 = vmatpush1.bf16.xpose.msra.mxu0 0
        %1438 = vmatprep.subr.bf16.mxu0 0
        %1439 = vmatpush1.bf16.xpose.msra.mxu0 0
        %1440 = vmatprep.subr.bf16.mxu0 0
        %1441 = vmatpush1.bf16.xpose.msra.mxu0 0
        %1442 = vmatprep.subr.bf16.mxu0 0
        %1443 = vmatpush1.bf16.xpose.msra.mxu0 0
        %1444 = vmatprep.subr.bf16.mxu0 0
        %1445 = vmatpush1.bf16.xpose.msra.mxu0 0
        %1446 = vmatprep.subr.bf16.mxu0 0
        %1447 = vmatpush1.bf16.xpose.msra.mxu0 0
        %1448 = vmatprep.subr.bf16.mxu0 0
        %1449 = vmatpush1.bf16.xpose.msra.mxu0 0
        %1450 = vmatprep.subr.bf16.mxu0 0
        %1451 = vmatpush1.bf16.xpose.msra.mxu0 0
        %1452 = vmatprep.mubr.bf16.mxu0 0
        %1453 = vmatmul.mubr.bf16.gmra.mrb[0].mxu0 %v1415
        %v1454 = vpop.f32.mrb[0].mxu0
        %v1455 = vadd.f32 0.0, %v1454
        %v1456 = vpop.f32.mrb[0].mxu0
        %v1457 = vpop.f32.mrb[0].mxu0
        %v1458 = vpop.f32.mrb[0].mxu0
        %1459 = vdwg.mxu0
        %v1460 = vsel %vm1235, %v1455, -inf
        %1461 = vmax.xlane.f32.xlu0 %v1460
        %v1462 = vpop.xlane.xlu0 %1461
        %v1463 = vsub.f32 %v1455, %v1462
        %v1464 = vmul.f32 %v1463, 1.442695
        %v1465 = vpow.pop %v1464
        %v1466 = vsel %vm1235, %v1465, 0.0
        %1467 = vadd.xlane.f32.xlu0 %v1466
        %v1468 = vpop.xlane.xlu0 %1467
        %v1469 = vrcp.pop %v1468
        %v1470 = vmul.f32 %v1465, %v1469
        %v1471 = vpack.c.bf16 %v1470, %v1470
        %v1473 = vsel %vm1235, %v1471, 0
        %v1476 = vsel %vm1297, %v1412, 0
        %1478 = vmatprep.subr.bf16.mxu0 0
        %1479 = vmatpush1.bf16.msra.mxu0 %v1476
        %1480 = vmatprep.subr.bf16.mxu0 0
        %1481 = vmatpush1.bf16.msra.mxu0 0
        %1482 = vmatprep.subr.bf16.mxu0 0
        %1483 = vmatpush1.bf16.msra.mxu0 0
        %1484 = vmatprep.subr.bf16.mxu0 0
        %1485 = vmatpush1.bf16.msra.mxu0 0
        %1486 = vmatprep.subr.bf16.mxu0 0
        %1487 = vmatpush1.bf16.msra.mxu0 0
        %1488 = vmatprep.subr.bf16.mxu0 0
        %1489 = vmatpush1.bf16.msra.mxu0 0
        %1490 = vmatprep.subr.bf16.mxu0 0
        %1491 = vmatpush1.bf16.msra.mxu0 0
        %1492 = vmatprep.subr.bf16.mxu0 0
        %1493 = vmatpush1.bf16.msra.mxu0 0
        %1494 = vmatprep.subr.bf16.mxu0 0
        %1495 = vmatpush1.bf16.msra.mxu0 0
        %1496 = vmatprep.subr.bf16.mxu0 0
        %1497 = vmatpush1.bf16.msra.mxu0 0
        %1498 = vmatprep.subr.bf16.mxu0 0
        %1499 = vmatpush1.bf16.msra.mxu0 0
        %1500 = vmatprep.subr.bf16.mxu0 0
        %1501 = vmatpush1.bf16.msra.mxu0 0
        %1502 = vmatprep.subr.bf16.mxu0 0
        %1503 = vmatpush1.bf16.msra.mxu0 0
        %1504 = vmatprep.subr.bf16.mxu0 0
        %1505 = vmatpush1.bf16.msra.mxu0 0
        %1506 = vmatprep.subr.bf16.mxu0 0
        %1507 = vmatpush1.bf16.msra.mxu0 0
        %1508 = vmatprep.subr.bf16.mxu0 0
        %1509 = vmatpush1.bf16.msra.mxu0 0
        %1510 = vmatprep.mubr.bf16.mxu0 0
        %1511 = vmatmul.mubr.bf16.gmra.mrb[0].mxu0 %v1473
        %v1512 = vpop.f32.mrb[0].mxu0
        %v1513 = vadd.f32 0.0, %v1512
        %v1514 = vpop.f32.mrb[0].mxu0
        %v1515 = vpop.f32.mrb[0].mxu0
        %v1516 = vpop.f32.mrb[0].mxu0
        %1517 = vdwg.mxu0
        %v1518 = vpack.c.bf16 %v1513, %v1513
        %s1519 = scalar_lea.vmem %s8, 4
        %v1520 = vld [vmem:[%s1519] sm:$0xf]
        %v1522 = vsel %vm1235, %v1518, 0
        %v1525 = vsel %vm1297, %v1520, 0
        %1527 = vmatprep.subr.bf16.mxu0 0
        %1528 = vmatpush1.bf16.msra.mxu0 %v1525
        %1529 = vmatprep.subr.bf16.mxu0 0
        %1530 = vmatpush1.bf16.msra.mxu0 0
        %1531 = vmatprep.subr.bf16.mxu0 0
        %1532 = vmatpush1.bf16.msra.mxu0 0
        %1533 = vmatprep.subr.bf16.mxu0 0
        %1534 = vmatpush1.bf16.msra.mxu0 0
        %1535 = vmatprep.subr.bf16.mxu0 0
        %1536 = vmatpush1.bf16.msra.mxu0 0
        %1537 = vmatprep.subr.bf16.mxu0 0
        %1538 = vmatpush1.bf16.msra.mxu0 0
        %1539 = vmatprep.subr.bf16.mxu0 0
        %1540 = vmatpush1.bf16.msra.mxu0 0
        %1541 = vmatprep.subr.bf16.mxu0 0
        %1542 = vmatpush1.bf16.msra.mxu0 0
        %1543 = vmatprep.subr.bf16.mxu0 0
        %1544 = vmatpush1.bf16.msra.mxu0 0
        %1545 = vmatprep.subr.bf16.mxu0 0
        %1546 = vmatpush1.bf16.msra.mxu0 0
        %1547 = vmatprep.subr.bf16.mxu0 0
        %1548 = vmatpush1.bf16.msra.mxu0 0
        %1549 = vmatprep.subr.bf16.mxu0 0
        %1550 = vmatpush1.bf16.msra.mxu0 0
        %1551 = vmatprep.subr.bf16.mxu0 0
        %1552 = vmatpush1.bf16.msra.mxu0 0
        %1553 = vmatprep.subr.bf16.mxu0 0
        %1554 = vmatpush1.bf16.msra.mxu0 0
        %1555 = vmatprep.subr.bf16.mxu0 0
        %1556 = vmatpush1.bf16.msra.mxu0 0
        %1557 = vmatprep.subr.bf16.mxu0 0
        %1558 = vmatpush1.bf16.msra.mxu0 0
        %1559 = vmatprep.mubr.bf16.mxu0 0
        %1560 = vmatmul.mubr.bf16.gmra.mrb[0].mxu0 %v1522
        %v1561 = vpop.f32.mrb[0].mxu0
        %v1562 = vadd.f32 0.0, %v1561
        %v1563 = vpop.f32.mrb[0].mxu0
        %v1564 = vpop.f32.mrb[0].mxu0
        %v1565 = vpop.f32.mrb[0].mxu0
        %1566 = vdwg.mxu0
        %v1568 = vsel %vm1235, %v1341, 0
        %v1571 = vsel %vm1297, %v1342, 0
        %1573 = vmatprep.subr.bf16.mxu0 0
        %1574 = vmatpush1.bf16.msra.mxu0 %v1571
        %1575 = vmatprep.subr.bf16.mxu0 0
        %1576 = vmatpush1.bf16.msra.mxu0 0
        %1577 = vmatprep.subr.bf16.mxu0 0
        %1578 = vmatpush1.bf16.msra.mxu0 0
        %1579 = vmatprep.subr.bf16.mxu0 0
        %1580 = vmatpush1.bf16.msra.mxu0 0
        %1581 = vmatprep.subr.bf16.mxu0 0
        %1582 = vmatpush1.bf16.msra.mxu0 0
        %1583 = vmatprep.subr.bf16.mxu0 0
        %1584 = vmatpush1.bf16.msra.mxu0 0
        %1585 = vmatprep.subr.bf16.mxu0 0
        %1586 = vmatpush1.bf16.msra.mxu0 0
        %1587 = vmatprep.subr.bf16.mxu0 0
        %1588 = vmatpush1.bf16.msra.mxu0 0
        %1589 = vmatprep.subr.bf16.mxu0 0
        %1590 = vmatpush1.bf16.msra.mxu0 0
        %1591 = vmatprep.subr.bf16.mxu0 0
        %1592 = vmatpush1.bf16.msra.mxu0 0
        %1593 = vmatprep.subr.bf16.mxu0 0
        %1594 = vmatpush1.bf16.msra.mxu0 0
        %1595 = vmatprep.subr.bf16.mxu0 0
        %1596 = vmatpush1.bf16.msra.mxu0 0
        %1597 = vmatprep.subr.bf16.mxu0 0
        %1598 = vmatpush1.bf16.msra.mxu0 0
        %1599 = vmatprep.subr.bf16.mxu0 0
        %1600 = vmatpush1.bf16.msra.mxu0 0
        %1601 = vmatprep.subr.bf16.mxu0 0
        %1602 = vmatpush1.bf16.msra.mxu0 0
        %1603 = vmatprep.subr.bf16.mxu0 0
        %1604 = vmatpush1.bf16.msra.mxu0 0
        %1605 = vmatprep.mubr.bf16.mxu0 0
        %1606 = vmatmul.mubr.bf16.gmra.mrb[0].mxu0 %v1568
        %v1607 = vpop.f32.mrb[0].mxu0
        %v1608 = vadd.f32 %v1562, %v1607
        %v1609 = vpop.f32.mrb[0].mxu0
        %v1610 = vpop.f32.mrb[0].mxu0
        %v1611 = vpop.f32.mrb[0].mxu0
        %1612 = vdwg.mxu0
        %s1613 = scalar_lea.vmem %s2, 32
        %v1614 = vld [vmem:[%s1613] sm:$0xf]
        %v1615 = vld [vmem:[%s1613 + $0x4] sm:$0xf]
        %v1616 = vld [vmem:[%s1613 + $0x8] sm:$0xf]
        %v1617 = vld [vmem:[%s1613 + $0xc] sm:$0xf]
        %s1618 = scalar_lea.vmem %s3, 2
        %v1619 = vld [vmem:[%s1618] sm:$0x1]
        %v1621 = vlaneseq
        %v1622 = vshrl.u32 %v1621, 7
        %v1623 = vsub.s32 0, %v1622
        %v1624 = vrot.slane %v1619, %v1623
        %v1630 = vunpack.c.l.b16 %v1614
        %v1631 = vunpack.c.l.b16 %v1615
        %v1632 = vunpack.c.l.b16 %v1616
        %v1633 = vunpack.c.l.b16 %v1617
        %v1634 = vpack.c.b16 %v1631, %v1630
        %v1635 = vpack.c.b16 %v1633, %v1632
        %1638 = vmatprep.subr.bf16.mxu0 0
        %1639 = vmatpush1.bf16.msra.mxu0 %v1634
        %1640 = vmatprep.subr.bf16.mxu0 0
        %1641 = vmatpush1.bf16.msra.mxu0 %v1635
        %1642 = vmatprep.subr.bf16.mxu0 0
        %1643 = vmatpush1.bf16.msra.mxu0 0
        %1644 = vmatprep.subr.bf16.mxu0 0
        %1645 = vmatpush1.bf16.msra.mxu0 0
        %1646 = vmatprep.subr.bf16.mxu0 0
        %1647 = vmatpush1.bf16.msra.mxu0 0
        %1648 = vmatprep.subr.bf16.mxu0 0
        %1649 = vmatpush1.bf16.msra.mxu0 0
        %1650 = vmatprep.subr.bf16.mxu0 0
        %1651 = vmatpush1.bf16.msra.mxu0 0
        %1652 = vmatprep.subr.bf16.mxu0 0
        %1653 = vmatpush1.bf16.msra.mxu0 0
        %1654 = vmatprep.subr.bf16.mxu0 0
        %1655 = vmatpush1.bf16.msra.mxu0 0
        %1656 = vmatprep.subr.bf16.mxu0 0
        %1657 = vmatpush1.bf16.msra.mxu0 0
        %1658 = vmatprep.subr.bf16.mxu0 0
        %1659 = vmatpush1.bf16.msra.mxu0 0
        %1660 = vmatprep.subr.bf16.mxu0 0
        %1661 = vmatpush1.bf16.msra.mxu0 0
        %1662 = vmatprep.subr.bf16.mxu0 0
        %1663 = vmatpush1.bf16.msra.mxu0 0
        %1664 = vmatprep.subr.bf16.mxu0 0
        %1665 = vmatpush1.bf16.msra.mxu0 0
        %1666 = vmatprep.subr.bf16.mxu0 0
        %1667 = vmatpush1.bf16.msra.mxu0 0
        %1668 = vmatprep.subr.bf16.mxu0 0
        %1669 = vmatpush1.bf16.msra.mxu0 0
        %1670 = vmatprep.mubr.bf16.mxu0 0
        %1671 = vmatmul.mubr.bf16.gmra.mrb[0].mxu0 %v1189
        %v1672 = vpop.f32.mrb[0].mxu0
        %v1673 = vadd.f32 %v1624, %v1672
        %v1674 = vpop.f32.mrb[0].mxu0
        %v1675 = vpop.f32.mrb[0].mxu0
        %v1676 = vpop.f32.mrb[0].mxu0
        %1677 = vdwg.mxu0
        %v1678 = vmul.f32 %v1673, 0.35355338
        %s1679 = scalar_lea.vmem [#allocation2], 8
        %v1680 = vld [vmem:[%s1679] sm:$0xf]
        %s1681 = scalar_lea.vmem [#allocation3], 8
        %v1682 = vld [vmem:[%s1681] sm:$0xf]
        %v1683 = vpack.c.bf16 %v1678, %v1678
        %v1685 = vsel %vm1235, %v1683, 0
        %v1688 = vsel %vm1235, %v1680, 0
        %1690 = vmatprep.subr.bf16.mxu0 0
        %1691 = vmatpush1.bf16.xpose.msra.mxu0 %v1688
        %1692 = vmatprep.subr.bf16.mxu0 0
        %1693 = vmatpush1.bf16.xpose.msra.mxu0 0
        %1694 = vmatprep.subr.bf16.mxu0 0
        %1695 = vmatpush1.bf16.xpose.msra.mxu0 0
        %1696 = vmatprep.subr.bf16.mxu0 0
        %1697 = vmatpush1.bf16.xpose.msra.mxu0 0
        %1698 = vmatprep.subr.bf16.mxu0 0
        %1699 = vmatpush1.bf16.xpose.msra.mxu0 0
        %1700 = vmatprep.subr.bf16.mxu0 0
        %1701 = vmatpush1.bf16.xpose.msra.mxu0 0
        %1702 = vmatprep.subr.bf16.mxu0 0
        %1703 = vmatpush1.bf16.xpose.msra.mxu0 0
        %1704 = vmatprep.subr.bf16.mxu0 0
        %1705 = vmatpush1.bf16.xpose.msra.mxu0 0
        %1706 = vmatprep.subr.bf16.mxu0 0
        %1707 = vmatpush1.bf16.xpose.msra.mxu0 0
        %1708 = vmatprep.subr.bf16.mxu0 0
        %1709 = vmatpush1.bf16.xpose.msra.mxu0 0
        %1710 = vmatprep.subr.bf16.mxu0 0
        %1711 = vmatpush1.bf16.xpose.msra.mxu0 0
        %1712 = vmatprep.subr.bf16.mxu0 0
        %1713 = vmatpush1.bf16.xpose.msra.mxu0 0
        %1714 = vmatprep.subr.bf16.mxu0 0
        %1715 = vmatpush1.bf16.xpose.msra.mxu0 0
        %1716 = vmatprep.subr.bf16.mxu0 0
        %1717 = vmatpush1.bf16.xpose.msra.mxu0 0
        %1718 = vmatprep.subr.bf16.mxu0 0
        %1719 = vmatpush1.bf16.xpose.msra.mxu0 0
        %1720 = vmatprep.subr.bf16.mxu0 0
        %1721 = vmatpush1.bf16.xpose.msra.mxu0 0
        %1722 = vmatprep.mubr.bf16.mxu0 0
        %1723 = vmatmul.mubr.bf16.gmra.mrb[0].mxu0 %v1685
        %v1724 = vpop.f32.mrb[0].mxu0
        %v1725 = vadd.f32 0.0, %v1724
        %v1726 = vpop.f32.mrb[0].mxu0
        %v1727 = vpop.f32.mrb[0].mxu0
        %v1728 = vpop.f32.mrb[0].mxu0
        %1729 = vdwg.mxu0
        %v1730 = vsel %vm1235, %v1725, -inf
        %1731 = vmax.xlane.f32.xlu0 %v1730
        %v1732 = vpop.xlane.xlu0 %1731
        %v1733 = vsub.f32 %v1725, %v1732
        %v1734 = vmul.f32 %v1733, 1.442695
        %v1735 = vpow.pop %v1734
        %v1736 = vsel %vm1235, %v1735, 0.0
        %1737 = vadd.xlane.f32.xlu0 %v1736
        %v1738 = vpop.xlane.xlu0 %1737
        %v1739 = vrcp.pop %v1738
        %v1740 = vmul.f32 %v1735, %v1739
        %v1741 = vpack.c.bf16 %v1740, %v1740
        %v1743 = vsel %vm1235, %v1741, 0
        %v1746 = vsel %vm1297, %v1682, 0
        %1748 = vmatprep.subr.bf16.mxu0 0
        %1749 = vmatpush1.bf16.msra.mxu0 %v1746
        %1750 = vmatprep.subr.bf16.mxu0 0
        %1751 = vmatpush1.bf16.msra.mxu0 0
        %1752 = vmatprep.subr.bf16.mxu0 0
        %1753 = vmatpush1.bf16.msra.mxu0 0
        %1754 = vmatprep.subr.bf16.mxu0 0
        %1755 = vmatpush1.bf16.msra.mxu0 0
        %1756 = vmatprep.subr.bf16.mxu0 0
        %1757 = vmatpush1.bf16.msra.mxu0 0
        %1758 = vmatprep.subr.bf16.mxu0 0
        %1759 = vmatpush1.bf16.msra.mxu0 0
        %1760 = vmatprep.subr.bf16.mxu0 0
        %1761 = vmatpush1.bf16.msra.mxu0 0
        %1762 = vmatprep.subr.bf16.mxu0 0
        %1763 = vmatpush1.bf16.msra.mxu0 0
        %1764 = vmatprep.subr.bf16.mxu0 0
        %1765 = vmatpush1.bf16.msra.mxu0 0
        %1766 = vmatprep.subr.bf16.mxu0 0
        %1767 = vmatpush1.bf16.msra.mxu0 0
        %1768 = vmatprep.subr.bf16.mxu0 0
        %1769 = vmatpush1.bf16.msra.mxu0 0
        %1770 = vmatprep.subr.bf16.mxu0 0
        %1771 = vmatpush1.bf16.msra.mxu0 0
        %1772 = vmatprep.subr.bf16.mxu0 0
        %1773 = vmatpush1.bf16.msra.mxu0 0
        %1774 = vmatprep.subr.bf16.mxu0 0
        %1775 = vmatpush1.bf16.msra.mxu0 0
        %1776 = vmatprep.subr.bf16.mxu0 0
        %1777 = vmatpush1.bf16.msra.mxu0 0
        %1778 = vmatprep.subr.bf16.mxu0 0
        %1779 = vmatpush1.bf16.msra.mxu0 0
        %1780 = vmatprep.mubr.bf16.mxu0 0
        %1781 = vmatmul.mubr.bf16.gmra.mrb[0].mxu0 %v1743
        %v1782 = vpop.f32.mrb[0].mxu0
        %v1783 = vadd.f32 0.0, %v1782
        %v1784 = vpop.f32.mrb[0].mxu0
        %v1785 = vpop.f32.mrb[0].mxu0
        %v1786 = vpop.f32.mrb[0].mxu0
        %1787 = vdwg.mxu0
        %v1788 = vpack.c.bf16 %v1783, %v1783
        %s1789 = scalar_lea.vmem %s8, 8
        %v1790 = vld [vmem:[%s1789] sm:$0xf]
        %v1792 = vsel %vm1235, %v1788, 0
        %v1795 = vsel %vm1297, %v1790, 0
        %1797 = vmatprep.subr.bf16.mxu0 0
        %1798 = vmatpush1.bf16.msra.mxu0 %v1795
        %1799 = vmatprep.subr.bf16.mxu0 0
        %1800 = vmatpush1.bf16.msra.mxu0 0
        %1801 = vmatprep.subr.bf16.mxu0 0
        %1802 = vmatpush1.bf16.msra.mxu0 0
        %1803 = vmatprep.subr.bf16.mxu0 0
        %1804 = vmatpush1.bf16.msra.mxu0 0
        %1805 = vmatprep.subr.bf16.mxu0 0
        %1806 = vmatpush1.bf16.msra.mxu0 0
        %1807 = vmatprep.subr.bf16.mxu0 0
        %1808 = vmatpush1.bf16.msra.mxu0 0
        %1809 = vmatprep.subr.bf16.mxu0 0
        %1810 = vmatpush1.bf16.msra.mxu0 0
        %1811 = vmatprep.subr.bf16.mxu0 0
        %1812 = vmatpush1.bf16.msra.mxu0 0
        %1813 = vmatprep.subr.bf16.mxu0 0
        %1814 = vmatpush1.bf16.msra.mxu0 0
        %1815 = vmatprep.subr.bf16.mxu0 0
        %1816 = vmatpush1.bf16.msra.mxu0 0
        %1817 = vmatprep.subr.bf16.mxu0 0
        %1818 = vmatpush1.bf16.msra.mxu0 0
        %1819 = vmatprep.subr.bf16.mxu0 0
        %1820 = vmatpush1.bf16.msra.mxu0 0
        %1821 = vmatprep.subr.bf16.mxu0 0
        %1822 = vmatpush1.bf16.msra.mxu0 0
        %1823 = vmatprep.subr.bf16.mxu0 0
        %1824 = vmatpush1.bf16.msra.mxu0 0
        %1825 = vmatprep.subr.bf16.mxu0 0
        %1826 = vmatpush1.bf16.msra.mxu0 0
        %1827 = vmatprep.subr.bf16.mxu0 0
        %1828 = vmatpush1.bf16.msra.mxu0 0
        %1829 = vmatprep.mubr.bf16.mxu0 0
        %1830 = vmatmul.mubr.bf16.gmra.mrb[0].mxu0 %v1792
        %v1831 = vpop.f32.mrb[0].mxu0
        %v1832 = vadd.f32 0.0, %v1831
        %v1833 = vpop.f32.mrb[0].mxu0
        %v1834 = vpop.f32.mrb[0].mxu0
        %v1835 = vpop.f32.mrb[0].mxu0
        %1836 = vdwg.mxu0
        %v1837 = vadd.f32 %v1608, %v1832
        %s1838 = scalar_lea.vmem %s2, 48
        %v1839 = vld [vmem:[%s1838] sm:$0xf]
        %v1840 = vld [vmem:[%s1838 + $0x4] sm:$0xf]
        %v1841 = vld [vmem:[%s1838 + $0x8] sm:$0xf]
        %v1842 = vld [vmem:[%s1838 + $0xc] sm:$0xf]
        %s1843 = scalar_lea.vmem %s3, 3
        %v1844 = vld [vmem:[%s1843] sm:$0x1]
        %v1846 = vlaneseq
        %v1847 = vshrl.u32 %v1846, 7
        %v1848 = vsub.s32 0, %v1847
        %v1849 = vrot.slane %v1844, %v1848
        %v1855 = vunpack.c.l.b16 %v1839
        %v1856 = vunpack.c.l.b16 %v1840
        %v1857 = vunpack.c.l.b16 %v1841
        %v1858 = vunpack.c.l.b16 %v1842
        %v1859 = vpack.c.b16 %v1856, %v1855
        %v1860 = vpack.c.b16 %v1858, %v1857
        %1863 = vmatprep.subr.bf16.mxu0 0
        %1864 = vmatpush1.bf16.msra.mxu0 %v1859
        %1865 = vmatprep.subr.bf16.mxu0 0
        %1866 = vmatpush1.bf16.msra.mxu0 %v1860
        %1867 = vmatprep.subr.bf16.mxu0 0
        %1868 = vmatpush1.bf16.msra.mxu0 0
        %1869 = vmatprep.subr.bf16.mxu0 0
        %1870 = vmatpush1.bf16.msra.mxu0 0
        %1871 = vmatprep.subr.bf16.mxu0 0
        %1872 = vmatpush1.bf16.msra.mxu0 0
        %1873 = vmatprep.subr.bf16.mxu0 0
        %1874 = vmatpush1.bf16.msra.mxu0 0
        %1875 = vmatprep.subr.bf16.mxu0 0
        %1876 = vmatpush1.bf16.msra.mxu0 0
        %1877 = vmatprep.subr.bf16.mxu0 0
        %1878 = vmatpush1.bf16.msra.mxu0 0
        %1879 = vmatprep.subr.bf16.mxu0 0
        %1880 = vmatpush1.bf16.msra.mxu0 0
        %1881 = vmatprep.subr.bf16.mxu0 0
        %1882 = vmatpush1.bf16.msra.mxu0 0
        %1883 = vmatprep.subr.bf16.mxu0 0
        %1884 = vmatpush1.bf16.msra.mxu0 0
        %1885 = vmatprep.subr.bf16.mxu0 0
        %1886 = vmatpush1.bf16.msra.mxu0 0
        %1887 = vmatprep.subr.bf16.mxu0 0
        %1888 = vmatpush1.bf16.msra.mxu0 0
        %1889 = vmatprep.subr.bf16.mxu0 0
        %1890 = vmatpush1.bf16.msra.mxu0 0
        %1891 = vmatprep.subr.bf16.mxu0 0
        %1892 = vmatpush1.bf16.msra.mxu0 0
        %1893 = vmatprep.subr.bf16.mxu0 0
        %1894 = vmatpush1.bf16.msra.mxu0 0
        %1895 = vmatprep.mubr.bf16.mxu0 0
        %1896 = vmatmul.mubr.bf16.gmra.mrb[0].mxu0 %v1189
        %v1897 = vpop.f32.mrb[0].mxu0
        %v1898 = vadd.f32 %v1849, %v1897
        %v1899 = vpop.f32.mrb[0].mxu0
        %v1900 = vpop.f32.mrb[0].mxu0
        %v1901 = vpop.f32.mrb[0].mxu0
        %1902 = vdwg.mxu0
        %v1903 = vmul.f32 %v1898, 0.35355338
        %s1904 = scalar_lea.vmem [#allocation2], 12
        %v1905 = vld [vmem:[%s1904] sm:$0xf]
        %s1906 = scalar_lea.vmem [#allocation3], 12
        %v1907 = vld [vmem:[%s1906] sm:$0xf]
        %v1908 = vpack.c.bf16 %v1903, %v1903
        %v1910 = vsel %vm1235, %v1908, 0
        %v1913 = vsel %vm1235, %v1905, 0
        %1915 = vmatprep.subr.bf16.mxu0 0
        %1916 = vmatpush1.bf16.xpose.msra.mxu0 %v1913
        %1917 = vmatprep.subr.bf16.mxu0 0
        %1918 = vmatpush1.bf16.xpose.msra.mxu0 0
        %1919 = vmatprep.subr.bf16.mxu0 0
        %1920 = vmatpush1.bf16.xpose.msra.mxu0 0
        %1921 = vmatprep.subr.bf16.mxu0 0
        %1922 = vmatpush1.bf16.xpose.msra.mxu0 0
        %1923 = vmatprep.subr.bf16.mxu0 0
        %1924 = vmatpush1.bf16.xpose.msra.mxu0 0
        %1925 = vmatprep.subr.bf16.mxu0 0
        %1926 = vmatpush1.bf16.xpose.msra.mxu0 0
        %1927 = vmatprep.subr.bf16.mxu0 0
        %1928 = vmatpush1.bf16.xpose.msra.mxu0 0
        %1929 = vmatprep.subr.bf16.mxu0 0
        %1930 = vmatpush1.bf16.xpose.msra.mxu0 0
        %1931 = vmatprep.subr.bf16.mxu0 0
        %1932 = vmatpush1.bf16.xpose.msra.mxu0 0
        %1933 = vmatprep.subr.bf16.mxu0 0
        %1934 = vmatpush1.bf16.xpose.msra.mxu0 0
        %1935 = vmatprep.subr.bf16.mxu0 0
        %1936 = vmatpush1.bf16.xpose.msra.mxu0 0
        %1937 = vmatprep.subr.bf16.mxu0 0
        %1938 = vmatpush1.bf16.xpose.msra.mxu0 0
        %1939 = vmatprep.subr.bf16.mxu0 0
        %1940 = vmatpush1.bf16.xpose.msra.mxu0 0
        %1941 = vmatprep.subr.bf16.mxu0 0
        %1942 = vmatpush1.bf16.xpose.msra.mxu0 0
        %1943 = vmatprep.subr.bf16.mxu0 0
        %1944 = vmatpush1.bf16.xpose.msra.mxu0 0
        %1945 = vmatprep.subr.bf16.mxu0 0
        %1946 = vmatpush1.bf16.xpose.msra.mxu0 0
        %1947 = vmatprep.mubr.bf16.mxu0 0
        %1948 = vmatmul.mubr.bf16.gmra.mrb[0].mxu0 %v1910
        %v1949 = vpop.f32.mrb[0].mxu0
        %v1950 = vadd.f32 0.0, %v1949
        %v1951 = vpop.f32.mrb[0].mxu0
        %v1952 = vpop.f32.mrb[0].mxu0
        %v1953 = vpop.f32.mrb[0].mxu0
        %1954 = vdwg.mxu0
        %v1955 = vsel %vm1235, %v1950, -inf
        %1956 = vmax.xlane.f32.xlu0 %v1955
        %v1957 = vpop.xlane.xlu0 %1956
        %v1958 = vsub.f32 %v1950, %v1957
        %v1959 = vmul.f32 %v1958, 1.442695
        %v1960 = vpow.pop %v1959
        %v1961 = vsel %vm1235, %v1960, 0.0
        %1962 = vadd.xlane.f32.xlu0 %v1961
        %v1963 = vpop.xlane.xlu0 %1962
        %v1964 = vrcp.pop %v1963
        %v1965 = vmul.f32 %v1960, %v1964
        %v1966 = vpack.c.bf16 %v1965, %v1965
        %v1968 = vsel %vm1235, %v1966, 0
        %v1971 = vsel %vm1297, %v1907, 0
        %1973 = vmatprep.subr.bf16.mxu0 0
        %1974 = vmatpush1.bf16.msra.mxu0 %v1971
        %1975 = vmatprep.subr.bf16.mxu0 0
        %1976 = vmatpush1.bf16.msra.mxu0 0
        %1977 = vmatprep.subr.bf16.mxu0 0
        %1978 = vmatpush1.bf16.msra.mxu0 0
        %1979 = vmatprep.subr.bf16.mxu0 0
        %1980 = vmatpush1.bf16.msra.mxu0 0
        %1981 = vmatprep.subr.bf16.mxu0 0
        %1982 = vmatpush1.bf16.msra.mxu0 0
        %1983 = vmatprep.subr.bf16.mxu0 0
        %1984 = vmatpush1.bf16.msra.mxu0 0
        %1985 = vmatprep.subr.bf16.mxu0 0
        %1986 = vmatpush1.bf16.msra.mxu0 0
        %1987 = vmatprep.subr.bf16.mxu0 0
        %1988 = vmatpush1.bf16.msra.mxu0 0
        %1989 = vmatprep.subr.bf16.mxu0 0
        %1990 = vmatpush1.bf16.msra.mxu0 0
        %1991 = vmatprep.subr.bf16.mxu0 0
        %1992 = vmatpush1.bf16.msra.mxu0 0
        %1993 = vmatprep.subr.bf16.mxu0 0
        %1994 = vmatpush1.bf16.msra.mxu0 0
        %1995 = vmatprep.subr.bf16.mxu0 0
        %1996 = vmatpush1.bf16.msra.mxu0 0
        %1997 = vmatprep.subr.bf16.mxu0 0
        %1998 = vmatpush1.bf16.msra.mxu0 0
        %1999 = vmatprep.subr.bf16.mxu0 0
        %2000 = vmatpush1.bf16.msra.mxu0 0
        %2001 = vmatprep.subr.bf16.mxu0 0
        %2002 = vmatpush1.bf16.msra.mxu0 0
        %2003 = vmatprep.subr.bf16.mxu0 0
        %2004 = vmatpush1.bf16.msra.mxu0 0
        %2005 = vmatprep.mubr.bf16.mxu0 0
        %2006 = vmatmul.mubr.bf16.gmra.mrb[0].mxu0 %v1968
        %v2007 = vpop.f32.mrb[0].mxu0
        %v2008 = vadd.f32 0.0, %v2007
        %v2009 = vpop.f32.mrb[0].mxu0
        %v2010 = vpop.f32.mrb[0].mxu0
        %v2011 = vpop.f32.mrb[0].mxu0
        %2012 = vdwg.mxu0
        %v2013 = vpack.c.bf16 %v2008, %v2008
        %s2014 = scalar_lea.vmem %s8, 12
        %v2015 = vld [vmem:[%s2014] sm:$0xf]
        %v2017 = vsel %vm1235, %v2013, 0
        %v2020 = vsel %vm1297, %v2015, 0
        %2022 = vmatprep.subr.bf16.mxu0 0
        %2023 = vmatpush1.bf16.msra.mxu0 %v2020
        %2024 = vmatprep.subr.bf16.mxu0 0
        %2025 = vmatpush1.bf16.msra.mxu0 0
        %2026 = vmatprep.subr.bf16.mxu0 0
        %2027 = vmatpush1.bf16.msra.mxu0 0
        %2028 = vmatprep.subr.bf16.mxu0 0
        %2029 = vmatpush1.bf16.msra.mxu0 0
        %2030 = vmatprep.subr.bf16.mxu0 0
        %2031 = vmatpush1.bf16.msra.mxu0 0
        %2032 = vmatprep.subr.bf16.mxu0 0
        %2033 = vmatpush1.bf16.msra.mxu0 0
        %2034 = vmatprep.subr.bf16.mxu0 0
        %2035 = vmatpush1.bf16.msra.mxu0 0
        %2036 = vmatprep.subr.bf16.mxu0 0
        %2037 = vmatpush1.bf16.msra.mxu0 0
        %2038 = vmatprep.subr.bf16.mxu0 0
        %2039 = vmatpush1.bf16.msra.mxu0 0
        %2040 = vmatprep.subr.bf16.mxu0 0
        %2041 = vmatpush1.bf16.msra.mxu0 0
        %2042 = vmatprep.subr.bf16.mxu0 0
        %2043 = vmatpush1.bf16.msra.mxu0 0
        %2044 = vmatprep.subr.bf16.mxu0 0
        %2045 = vmatpush1.bf16.msra.mxu0 0
        %2046 = vmatprep.subr.bf16.mxu0 0
        %2047 = vmatpush1.bf16.msra.mxu0 0
        %2048 = vmatprep.subr.bf16.mxu0 0
        %2049 = vmatpush1.bf16.msra.mxu0 0
        %2050 = vmatprep.subr.bf16.mxu0 0
        %2051 = vmatpush1.bf16.msra.mxu0 0
        %2052 = vmatprep.subr.bf16.mxu0 0
        %2053 = vmatpush1.bf16.msra.mxu0 0
        %2054 = vmatprep.mubr.bf16.mxu0 0
        %2055 = vmatmul.mubr.bf16.gmra.mrb[0].mxu0 %v2017
        %v2056 = vpop.f32.mrb[0].mxu0
        %v2057 = vadd.f32 0.0, %v2056
        %v2058 = vpop.f32.mrb[0].mxu0
        %v2059 = vpop.f32.mrb[0].mxu0
        %v2060 = vpop.f32.mrb[0].mxu0
        %2061 = vdwg.mxu0
        %v2062 = vadd.f32 %v1837, %v2057
        %v2063 = vld [vmem:[%s9] sm:$0x1]
        %v2065 = vlaneseq
        %v2066 = vshrl.u32 %v2065, 7
        %v2067 = vsub.s32 0, %v2066
        %v2068 = vrot.slane %v2063, %v2067
        %v2070 = vadd.f32 %v2062, %v2068
        %v2071 = vadd.f32 %v2070, %v614
        %v2072 = vsel %vm1187, %v2071, 0.0
        %2073 = vadd.xlane.f32.xlu0 %v2072
        %v2074 = vpop.xlane.xlu0 %2073
        %v2075 = vrcp.pop 32.0
        %v2076 = vmul.f32 %v2074, %v2075
        %v2077 = vsub.f32 %v2071, %v2076
        %v2078 = vmul.f32 %v2077, %v2077
        %v2079 = vsel %vm1187, %v2078, 0.0
        %2080 = vadd.xlane.f32.xlu0 %v2079
        %v2081 = vpop.xlane.xlu0 %2080
        %v2082 = vmul.f32 %v2081, %v2075
        %v2083 = vld [vmem:[%s10] sm:$0x1]
        %v2085 = vlaneseq
        %v2086 = vshrl.u32 %v2085, 7
        %v2087 = vsub.s32 0, %v2086
        %v2088 = vrot.slane %v2083, %v2087
        %v2090 = vmul.f32 %v2088, %v2077
        %v2091 = vadd.f32 %v2082, 1e-12
        %v2092 = vrsqrt.pop %v2091
        %v2093 = vmul.f32 %v2090, %v2092
        %v2094 = vld [vmem:[%s11] sm:$0x1]
        %v2096 = vlaneseq
        %v2097 = vshrl.u32 %v2096, 7
        %v2098 = vsub.s32 0, %v2097
        %v2099 = vrot.slane %v2094, %v2098
        %v2101 = vadd.f32 %v2093, %v2099
        %v2102 = vpack.c.bf16 %v2101, %v2101
        %v2103 = vld [vmem:[%s12] sm:$0xf]
        %v2104 = vld [vmem:[%s12 + $0x4] sm:$0xf]
        %v2105 = vld [vmem:[%s12 + $0x8] sm:$0xf]
        %v2106 = vld [vmem:[%s12 + $0xc] sm:$0xf]
        %v2107 = vld [vmem:[%s13] sm:$0x1]
        %v2109 = vlaneseq
        %v2110 = vshrl.u32 %v2109, 7
        %v2111 = vsub.s32 0, %v2110
        %v2112 = vrot.slane %v2107, %v2111
        %v2118 = vunpack.c.l.b16 %v2103
        %v2119 = vunpack.c.l.b16 %v2104
        %v2120 = vunpack.c.l.b16 %v2105
        %v2121 = vunpack.c.l.b16 %v2106
        %v2122 = vpack.c.b16 %v2119, %v2118
        %v2123 = vpack.c.b16 %v2121, %v2120
        %v2127 = vsel %vm1187, %v2102, 0
        %2129 = vmatprep.subr.bf16.mxu0 0
        %2130 = vmatpush1.bf16.msra.mxu0 %v2122
        %2131 = vmatprep.subr.bf16.mxu0 0
        %2132 = vmatpush1.bf16.msra.mxu0 %v2123
        %2133 = vmatprep.subr.bf16.mxu0 0
        %2134 = vmatpush1.bf16.msra.mxu0 0
        %2135 = vmatprep.subr.bf16.mxu0 0
        %2136 = vmatpush1.bf16.msra.mxu0 0
        %2137 = vmatprep.subr.bf16.mxu0 0
        %2138 = vmatpush1.bf16.msra.mxu0 0
        %2139 = vmatprep.subr.bf16.mxu0 0
        %2140 = vmatpush1.bf16.msra.mxu0 0
        %2141 = vmatprep.subr.bf16.mxu0 0
        %2142 = vmatpush1.bf16.msra.mxu0 0
        %2143 = vmatprep.subr.bf16.mxu0 0
        %2144 = vmatpush1.bf16.msra.mxu0 0
        %2145 = vmatprep.subr.bf16.mxu0 0
        %2146 = vmatpush1.bf16.msra.mxu0 0
        %2147 = vmatprep.subr.bf16.mxu0 0
        %2148 = vmatpush1.bf16.msra.mxu0 0
        %2149 = vmatprep.subr.bf16.mxu0 0
        %2150 = vmatpush1.bf16.msra.mxu0 0
        %2151 = vmatprep.subr.bf16.mxu0 0
        %2152 = vmatpush1.bf16.msra.mxu0 0
        %2153 = vmatprep.subr.bf16.mxu0 0
        %2154 = vmatpush1.bf16.msra.mxu0 0
        %2155 = vmatprep.subr.bf16.mxu0 0
        %2156 = vmatpush1.bf16.msra.mxu0 0
        %2157 = vmatprep.subr.bf16.mxu0 0
        %2158 = vmatpush1.bf16.msra.mxu0 0
        %2159 = vmatprep.subr.bf16.mxu0 0
        %2160 = vmatpush1.bf16.msra.mxu0 0
        %2161 = vmatprep.mubr.bf16.mxu0 0
        %2162 = vmatmul.mubr.bf16.gmra.mrb[0].mxu0 %v2127
        %v2163 = vpop.f32.mrb[0].mxu0
        %v2164 = vadd.f32 %v2112, %v2163
        %v2165 = vpop.f32.mrb[0].mxu0
        %v2166 = vpop.f32.mrb[0].mxu0
        %v2167 = vpop.f32.mrb[0].mxu0
        %2168 = vdwg.mxu0
        %v2169 = vmax.f32 %v2164, 0.0
        %v2170 = vpack.c.bf16 %v2169, %v2169
        %v2171 = vld [vmem:[%s14] sm:$0xf]
        %v2172 = vld [vmem:[%s14 + $0x4] sm:$0xf]
        %v2173 = vld [vmem:[%s14 + $0x8] sm:$0xf]
        %v2174 = vld [vmem:[%s14 + $0xc] sm:$0xf]
        %v2175 = vld [vmem:[%s14 + $0x10] sm:$0xf]
        %v2176 = vld [vmem:[%s14 + $0x14] sm:$0xf]
        %v2177 = vld [vmem:[%s14 + $0x18] sm:$0xf]
        %v2178 = vld [vmem:[%s14 + $0x1c] sm:$0xf]
        %v2179 = vld [vmem:[%s15] sm:$0x1]
        %v2181 = vlaneseq
        %v2182 = vshrl.u32 %v2181, 7
        %v2183 = vsub.s32 0, %v2182
        %v2184 = vrot.slane %v2179, %v2183
        %v2194 = vunpack.c.l.b16 %v2171
        %v2195 = vunpack.c.l.b16 %v2172
        %v2196 = vunpack.c.l.b16 %v2173
        %v2197 = vunpack.c.l.b16 %v2174
        %v2198 = vunpack.c.l.b16 %v2175
        %v2199 = vunpack.c.l.b16 %v2176
        %v2200 = vunpack.c.l.b16 %v2177
        %v2201 = vunpack.c.l.b16 %v2178
        %v2202 = vpack.c.b16 %v2195, %v2194
        %v2203 = vpack.c.b16 %v2197, %v2196
        %v2204 = vpack.c.b16 %v2199, %v2198
        %v2205 = vpack.c.b16 %v2201, %v2200
        %vm2210 = vcmask 523264
        %v2212 = vsel %vm2210, %v2170, 0
        %2214 = vmatprep.subr.bf16.mxu0 0
        %2215 = vmatpush1.bf16.msra.mxu0 %v2202
        %2216 = vmatprep.subr.bf16.mxu0 0
        %2217 = vmatpush1.bf16.msra.mxu0 %v2203
        %2218 = vmatprep.subr.bf16.mxu0 0
        %2219 = vmatpush1.bf16.msra.mxu0 %v2204
        %2220 = vmatprep.subr.bf16.mxu0 0
        %2221 = vmatpush1.bf16.msra.mxu0 %v2205
        %2222 = vmatprep.subr.bf16.mxu0 0
        %2223 = vmatpush1.bf16.msra.mxu0 0
        %2224 = vmatprep.subr.bf16.mxu0 0
        %2225 = vmatpush1.bf16.msra.mxu0 0
        %2226 = vmatprep.subr.bf16.mxu0 0
        %2227 = vmatpush1.bf16.msra.mxu0 0
        %2228 = vmatprep.subr.bf16.mxu0 0
        %2229 = vmatpush1.bf16.msra.mxu0 0
        %2230 = vmatprep.subr.bf16.mxu0 0
        %2231 = vmatpush1.bf16.msra.mxu0 0
        %2232 = vmatprep.subr.bf16.mxu0 0
        %2233 = vmatpush1.bf16.msra.mxu0 0
        %2234 = vmatprep.subr.bf16.mxu0 0
        %2235 = vmatpush1.bf16.msra.mxu0 0
        %2236 = vmatprep.subr.bf16.mxu0 0
        %2237 = vmatpush1.bf16.msra.mxu0 0
        %2238 = vmatprep.subr.bf16.mxu0 0
        %2239 = vmatpush1.bf16.msra.mxu0 0
        %2240 = vmatprep.subr.bf16.mxu0 0
        %2241 = vmatpush1.bf16.msra.mxu0 0
        %2242 = vmatprep.subr.bf16.mxu0 0
        %2243 = vmatpush1.bf16.msra.mxu0 0
        %2244 = vmatprep.subr.bf16.mxu0 0
        %2245 = vmatpush1.bf16.msra.mxu0 0
        %2246 = vmatprep.mubr.bf16.mxu0 0
        %2247 = vmatmul.mubr.bf16.gmra.mrb[0].mxu0 %v2212
        %v2248 = vpop.f32.mrb[0].mxu0
        %v2249 = vadd.f32 %v2184, %v2248
        %v2250 = vpop.f32.mrb[0].mxu0
        %v2251 = vpop.f32.mrb[0].mxu0
        %v2252 = vpop.f32.mrb[0].mxu0
        %2253 = vdwg.mxu0
        %v2254 = vadd.f32 %v2249, %v2101
        %v2255 = vsel %vm1187, %v2254, 0.0
        %2256 = vadd.xlane.f32.xlu0 %v2255
        %v2257 = vpop.xlane.xlu0 %2256
        %v2258 = vmul.f32 %v2257, %v2075
        %v2259 = vsub.f32 %v2254, %v2258
        %v2260 = vmul.f32 %v2259, %v2259
        %v2261 = vsel %vm1187, %v2260, 0.0
        %2262 = vadd.xlane.f32.xlu0 %v2261
        %v2263 = vpop.xlane.xlu0 %2262
        %v2264 = vmul.f32 %v2263, %v2075
        %v2265 = vld [vmem:[%s16] sm:$0x1]
        %v2267 = vlaneseq
        %v2268 = vshrl.u32 %v2267, 7
        %v2269 = vsub.s32 0, %v2268
        %v2270 = vrot.slane %v2265, %v2269
        %v2272 = vmul.f32 %v2270, %v2259
        %v2273 = vadd.f32 %v2264, 1e-12
        %v2274 = vrsqrt.pop %v2273
        %v2275 = vmul.f32 %v2272, %v2274
        %v2276 = vld [vmem:[%s17] sm:$0x1]
        %v2278 = vlaneseq
        %v2279 = vshrl.u32 %v2278, 7
        %v2280 = vsub.s32 0, %v2279
        %v2281 = vrot.slane %v2276, %v2280
        %v2283 = vadd.f32 %v2275, %v2281
        %2284 = vst.msk [vmem:[%s601] sm:$0xff] %vm1187, %v2283
        %s2285 = sand.u32 %s444, 1
        %s2286 = scalar_lea.sflag [#allocation5], %s2285
        %s2287 = sand.u32 %s444, 1
        %s2288 = smul.addr %s2287, 8
        %s2289 = scalar_lea.vmem [#allocation4], %s2288
        // Predicated region
        $region97: #{tpu_custom_call.1} parent=91 // pred_check
          %p2290 = pneg %p454
        $region98: #{tpu_custom_call.1} parent=91 // pred_check_branch
          %2292 = sbr.rel (%p2290) target = $region100
        $region99: #{tpu_custom_call.1} parent=91 // pred_region
          %s2294 = ssub.s32 128, 128
          %2295 = vsyncadd %s2286, %s2294
          %s2296 = sadd.s32 %s37, %s36
          %s2297 = smul.addr %s2296, 128
          %s2298 = scalar_lea.hbm %s18, %s2297
          %s2300 = sshll.u32 %s2289, 4
          %s2301 = int_to_ptr.vmem [resolvable:$true] %s2300
          %2303 = dma.vmem_to_hbm [thread:$0]  %s2301, 128, %s2298, %s2286
        $region100: #{tpu_custom_call.1} parent=91 // pred_fallthru
          _
      $region92: #{tpu_custom_call.1} parent=5 // pred_fallthru
        _
      %p2304 = scmp.le.s32.totalorder 2, %s27
      // Predicated region
      $region101: #{tpu_custom_call.1} parent=5 // pred_check
        %p2305 = pneg %p2304
      $region102: #{tpu_custom_call.1} parent=5 // pred_check_branch
        %2307 = sbr.rel (%p2305) target = $region104
      $region103: #{tpu_custom_call.1} parent=5 // pred_region
        %s2308 = ssub.s32 %s27, 2
        // Predicated region
        $region105: #{tpu_custom_call.1} parent=103 // pred_check
          %p2309 = pneg %p460
        $region106: #{tpu_custom_call.1} parent=103 // pred_check_branch
          %2311 = sbr.rel (%p2309) target = $region108
        $region107: #{tpu_custom_call.1} parent=103 // pred_region
          %s2312 = sand.u32 %s445, 1
          %s2313 = scalar_lea.sflag [#allocation5], %s2312
          %s2314 = sand.u32 %s445, 1
          %s2315 = smul.addr %s2314, 8
          %s2316 = scalar_lea.vmem [#allocation4], %s2315
          %2317 = dma.done %s2313, 128
        $region108: #{tpu_custom_call.1} parent=103 // pred_fallthru
          _
      $region104: #{tpu_custom_call.1} parent=5 // pred_fallthru
        _
    $region6: #{tpu_custom_call.1} parent=1 // loop_footer
      %s31 = sadd.s32 1, %s27
    $region7: #{tpu_custom_call.1} parent=1 // loop_footer_branch
      %26 = sbr.rel target = $region3
    $region8: #{tpu_custom_call.1} parent=1 // loop_exit
      _
    %2318 = vsyncpa [#allocation5], 1
    %s2319 = scalar_lea.sflag [#allocation5], 1
    %2320 = vsyncpa %s2319, 1

// kernel: tpu_custom_call.1
$region0: #{tpu_custom_call.1}
  #allocation0 [shape = 'u32[]', space=smem, size = 0x4, offset = 0x4, fixed_abs, tag = 'smem constant byte address 0x4 - core index']
  #allocation1 [shape = 'u32[144,128]{1,0:T(1,128)}', space=vmem, size = 0x12000, scoped, tag = 'internal scratch']
  #allocation2 [shape = 'bf16[4,8,8]{2,1,0:T(8,128)(2,1)}', space=vmem, size = 0x2000, scoped, tag = 'scratch operand']
  #allocation3 [shape = 'bf16[4,8,8]{2,1,0:T(8,128)(2,1)}', space=vmem, size = 0x2000, scoped, tag = 'scratch operand']
  %s0 = inlined_call_operand.vmem [shape: f32[2,8,32], index: 0, kind: input, shape index: {}]
  %s1 = inlined_call_operand.vmem [shape: bf16[2,8,32], index: 1, kind: input, shape index: {}]
  %s2 = inlined_call_operand.vmem [shape: bf16[4,32,8], index: 2, kind: input, shape index: {}]
  %s3 = inlined_call_operand.vmem [shape: f32[4,1,8], index: 3, kind: input, shape index: {}]
  %s4 = inlined_call_operand.vmem [shape: bf16[4,32,8], index: 4, kind: input, shape index: {}]
  %s5 = inlined_call_operand.vmem [shape: f32[4,1,8], index: 5, kind: input, shape index: {}]
  %s6 = inlined_call_operand.vmem [shape: bf16[4,32,8], index: 6, kind: input, shape index: {}]
  %s7 = inlined_call_operand.vmem [shape: f32[4,1,8], index: 7, kind: input, shape index: {}]
  %s8 = inlined_call_operand.vmem [shape: bf16[4,8,32], index: 8, kind: input, shape index: {}]
  %s9 = inlined_call_operand.vmem [shape: f32[1,32], index: 9, kind: input, shape index: {}]
  %s10 = inlined_call_operand.vmem [shape: f32[1,32], index: 10, kind: input, shape index: {}]
  %s11 = inlined_call_operand.vmem [shape: f32[1,32], index: 11, kind: input, shape index: {}]
  %s12 = inlined_call_operand.vmem [shape: bf16[32,64], index: 12, kind: input, shape index: {}]
  %s13 = inlined_call_operand.vmem [shape: f32[1,64], index: 13, kind: input, shape index: {}]
  %s14 = inlined_call_operand.vmem [shape: bf16[64,32], index: 14, kind: input, shape index: {}]
  %s15 = inlined_call_operand.vmem [shape: f32[1,32], index: 15, kind: input, shape index: {}]
  %s16 = inlined_call_operand.vmem [shape: f32[1,32], index: 16, kind: input, shape index: {}]
  %s17 = inlined_call_operand.vmem [shape: f32[1,32], index: 17, kind: input, shape index: {}]
  %s18 = inlined_call_operand.hbm [shape: f32[2,8,32], index: 18, kind: output, shape index: {}]
  %s19 = sld [smem:[#allocation0]]
  $region109: #{tpu_custom_call.1} parent=0
    _
  %s21 = ssub.s32 1, %s19
  %s22 = scalar_select 0, %s21, %s19
  $region1: #{tpu_custom_call.1} parent=0
    #allocation4 [shape = 'u8[8192]{0}', space=vmem, size = 0x2000, scoped, tag = 'output window, operand 0']
    #allocation5 [shape = 's32[2]{0}', space=sflag, size = 0x8, scoped, tag = 'scoped memory for tpu_custom_call.1']
    %23 = vsyncpa [#allocation5], 0
    %s24 = scalar_lea.sflag [#allocation5], 1
    %25 = vsyncpa %s24, 0
    loop: start=0, step=1, limit=4
    $region2: #{tpu_custom_call.1} parent=1 // loop_pre_header
      _
    $region3: #{tpu_custom_call.1} parent=1 // loop_header
      %s27 = sphi 0, %s31
      %p28 = scmp.ge.s32.totalorder %s27, 4
      %s34 = sphi 0, %s46
      %s35 = sphi 0, %s42
      %s36 = sphi 0, %s34
      %s37 = sphi 0, %s35
      %s38 = sphi 0, %s36
      %s39 = sphi 0, %s37
      %s51 = sphi 0, %s53
      %s54 = sphi 0, %s51
      %s55 = sphi 0, %s54
      %s71 = sphi 0, %s55
      %s77 = sphi 0, %s79
      %s80 = sphi 0, %s77
      %s81 = sphi 0, %s80
      %s97 = sphi 0, %s81
      %s101 = sphi 0, %s101
      %s103 = sphi 0, %s101
      %s104 = sphi 0, %s103
      %s118 = sphi 0, %s104
      %s122 = sphi 0, %s122
      %s124 = sphi 0, %s122
      %s125 = sphi 0, %s124
      %s139 = sphi 0, %s125
      %s143 = sphi 0, %s143
      %s145 = sphi 0, %s143
      %s146 = sphi 0, %s145
      %s160 = sphi 0, %s146
      %s164 = sphi 0, %s164
      %s166 = sphi 0, %s164
      %s167 = sphi 0, %s166
      %s181 = sphi 0, %s167
      %s185 = sphi 0, %s185
      %s187 = sphi 0, %s185
      %s188 = sphi 0, %s187
      %s202 = sphi 0, %s188
      %s206 = sphi 0, %s206
      %s208 = sphi 0, %s206
      %s209 = sphi 0, %s208
      %s223 = sphi 0, %s209
      %s227 = sphi 0, %s227
      %s229 = sphi 0, %s227
      %s230 = sphi 0, %s229
      %s244 = sphi 0, %s230
      %s248 = sphi 0, %s248
      %s250 = sphi 0, %s248
      %s251 = sphi 0, %s250
      %s265 = sphi 0, %s251
      %s269 = sphi 0, %s269
      %s271 = sphi 0, %s269
      %s272 = sphi 0, %s271
      %s286 = sphi 0, %s272
      %s290 = sphi 0, %s290
      %s292 = sphi 0, %s290
      %s293 = sphi 0, %s292
      %s307 = sphi 0, %s293
      %s311 = sphi 0, %s311
      %s313 = sphi 0, %s311
      %s314 = sphi 0, %s313
      %s328 = sphi 0, %s314
      %s332 = sphi 0, %s332
      %s334 = sphi 0, %s332
      %s335 = sphi 0, %s334
      %s349 = sphi 0, %s335
      %s353 = sphi 0, %s353
      %s355 = sphi 0, %s353
      %s356 = sphi 0, %s355
      %s370 = sphi 0, %s356
      %s374 = sphi 0, %s374
      %s376 = sphi 0, %s374
      %s377 = sphi 0, %s376
      %s391 = sphi 0, %s377
      %s395 = sphi 0, %s395
      %s397 = sphi 0, %s395
      %s398 = sphi 0, %s397
      %s412 = sphi 0, %s398
      %s416 = sphi 0, %s416
      %s418 = sphi 0, %s416
      %s419 = sphi 0, %s418
      %s433 = sphi 0, %s419
      %s441 = sphi 0, %s443
      %s444 = sphi 0, %s441
      %s445 = sphi 0, %s444
      %s461 = sphi 0, %s445
    $region4: #{tpu_custom_call.1} parent=1 // loop_header_branch
      %30 = sbr.rel (%p28) target = $region8
    $region5: #{tpu_custom_call.1} parent=1 // loop_body
      %s32 = ssub.s32 %s27, 1
      %s33 = ssub.s32 %s27, 2
      %s40 = sadd.s32 1, %s35
      %p41 = scmp.ge.s32.totalorder %s40, 1
      %s42 = scalar_select %p41, 0, %s40
      %s43 = sadd.s32 1, %s34
      %s44 = scalar_select %p41, %s43, %s34
      %p45 = scmp.ge.s32.totalorder %s44, 2
      %s46 = scalar_select %p45, 0, %s44
      %s47 = ssub.s32 %s34, %s46
      %s48 = ssub.s32 %s35, %s42
      %s49 = sor.u32 %s47, %s48
      %p50 = scmp.eq.s32.totalorder %s49, 0
      %s52 = sadd.s32 %s51, 1
      %s53 = scalar_select %p50, %s51, %s52
      %p56 = pneg %p50
      %p57 = scmp.eq.s32.totalorder %s27, 1
      %p58 = por %p56, %p57
      %p59 = scmp.ne.s32.totalorder %s51, %s54
      %p60 = scmp.eq.s32.totalorder %s27, 0
      %p61 = por %p59, %p60
      %p62 = scmp.ne.s32.totalorder %s51, %s54
      %p63 = scmp.eq.s32.totalorder %s32, 1
      %p64 = por %p62, %p63
      %p65 = scmp.ne.s32.totalorder %s54, %s55
      %p66 = scmp.eq.s32.totalorder %s32, 0
      %p67 = por %p65, %p66
      %p68 = scmp.ne.s32.totalorder %s54, %s55
      %p69 = scmp.eq.s32.totalorder %s33, 1
      %p70 = por %p68, %p69
      %p72 = scmp.ne.s32.totalorder %s55, %s71
      %p73 = scmp.eq.s32.totalorder %s33, 0
      %p74 = por %p72, %p73
      %s75 = ssub.s32 %s34, %s46
      %p76 = scmp.eq.s32.totalorder %s75, 0
      %s78 = sadd.s32 %s77, 1
      %s79 = scalar_select %p76, %s77, %s78
      %p82 = pneg %p76
      %p83 = scmp.eq.s32.totalorder %s27, 1
      %p84 = por %p82, %p83
      %p85 = scmp.ne.s32.totalorder %s77, %s80
      %p86 = scmp.eq.s32.totalorder %s27, 0
      %p87 = por %p85, %p86
      %p88 = scmp.ne.s32.totalorder %s77, %s80
      %p89 = scmp.eq.s32.totalorder %s32, 1
      %p90 = por %p88, %p89
      %p91 = scmp.ne.s32.totalorder %s80, %s81
      %p92 = scmp.eq.s32.totalorder %s32, 0
      %p93 = por %p91, %p92
      %p94 = scmp.ne.s32.totalorder %s80, %s81
      %p95 = scmp.eq.s32.totalorder %s33, 1
      %p96 = por %p94, %p95
      %p98 = scmp.ne.s32.totalorder %s81, %s97
      %p99 = scmp.eq.s32.totalorder %s33, 0
      %p100 = por %p98, %p99
      %s102 = sadd.s32 %s101, 1
      %p105 = scmp.eq.s32.totalorder %s27, 1
      %p106 = scmp.ne.s32.totalorder %s101, %s103
      %p107 = scmp.eq.s32.totalorder %s27, 0
      %p108 = por %p106, %p107
      %p109 = scmp.ne.s32.totalorder %s101, %s103
      %p110 = scmp.eq.s32.totalorder %s32, 1
      %p111 = por %p109, %p110
      %p112 = scmp.ne.s32.totalorder %s103, %s104
      %p113 = scmp.eq.s32.totalorder %s32, 0
      %p114 = por %p112, %p113
      %p115 = scmp.ne.s32.totalorder %s103, %s104
      %p116 = scmp.eq.s32.totalorder %s33, 1
      %p117 = por %p115, %p116
      %p119 = scmp.ne.s32.totalorder %s104, %s118
      %p120 = scmp.eq.s32.totalorder %s33, 0
      %p121 = por %p119, %p120
      %s123 = sadd.s32 %s122, 1
      %p126 = scmp.eq.s32.totalorder %s27, 1
      %p127 = scmp.ne.s32.totalorder %s122, %s124
      %p128 = scmp.eq.s32.totalorder %s27, 0
      %p129 = por %p127, %p128
      %p130 = scmp.ne.s32.totalorder %s122, %s124
      %p131 = scmp.eq.s32.totalorder %s32, 1
      %p132 = por %p130, %p131
      %p133 = scmp.ne.s32.totalorder %s124, %s125
      %p134 = scmp.eq.s32.totalorder %s32, 0
      %p135 = por %p133, %p134
      %p136 = scmp.ne.s32.totalorder %s124, %s125
      %p137 = scmp.eq.s32.totalorder %s33, 1
      %p138 = por %p136, %p137
      %p140 = scmp.ne.s32.totalorder %s125, %s139
      %p141 = scmp.eq.s32.totalorder %s33, 0
      %p142 = por %p140, %p141
      %s144 = sadd.s32 %s143, 1
      %p147 = scmp.eq.s32.totalorder %s27, 1
      %p148 = scmp.ne.s32.totalorder %s143, %s145
      %p149 = scmp.eq.s32.totalorder %s27, 0
      %p150 = por %p148, %p149
      %p151 = scmp.ne.s32.totalorder %s143, %s145
      %p152 = scmp.eq.s32.totalorder %s32, 1
      %p153 = por %p151, %p152
      %p154 = scmp.ne.s32.totalorder %s145, %s146
      %p155 = scmp.eq.s32.totalorder %s32, 0
      %p156 = por %p154, %p155
      %p157 = scmp.ne.s32.totalorder %s145, %s146
      %p158 = scmp.eq.s32.totalorder %s33, 1
      %p159 = por %p157, %p158
      %p161 = scmp.ne.s32.totalorder %s146, %s160
      %p162 = scmp.eq.s32.totalorder %s33, 0
      %p163 = por %p161, %p162
      %s165 = sadd.s32 %s164, 1
      %p168 = scmp.eq.s32.totalorder %s27, 1
      %p169 = scmp.ne.s32.totalorder %s164, %s166
      %p170 = scmp.eq.s32.totalorder %s27, 0
      %p171 = por %p169, %p170
      %p172 = scmp.ne.s32.totalorder %s164, %s166
      %p173 = scmp.eq.s32.totalorder %s32, 1
      %p174 = por %p172, %p173
      %p175 = scmp.ne.s32.totalorder %s166, %s167
      %p176 = scmp.eq.s32.totalorder %s32, 0
      %p177 = por %p175, %p176
      %p178 = scmp.ne.s32.totalorder %s166, %s167
      %p179 = scmp.eq.s32.totalorder %s33, 1
      %p180 = por %p178, %p179
      %p182 = scmp.ne.s32.totalorder %s167, %s181
      %p183 = scmp.eq.s32.totalorder %s33, 0
      %p184 = por %p182, %p183
      %s186 = sadd.s32 %s185, 1
      %p189 = scmp.eq.s32.totalorder %s27, 1
      %p190 = scmp.ne.s32.totalorder %s185, %s187
      %p191 = scmp.eq.s32.totalorder %s27, 0
      %p192 = por %p190, %p191
      %p193 = scmp.ne.s32.totalorder %s185, %s187
      %p194 = scmp.eq.s32.totalorder %s32, 1
      %p195 = por %p193, %p194
      %p196 = scmp.ne.s32.totalorder %s187, %s188
      %p197 = scmp.eq.s32.totalorder %s32, 0
      %p198 = por %p196, %p197
      %p199 = scmp.ne.s32.totalorder %s187, %s188
      %p200 = scmp.eq.s32.totalorder %s33, 1
      %p201 = por %p199, %p200
      %p203 = scmp.ne.s32.totalorder %s188, %s202
      %p204 = scmp.eq.s32.totalorder %s33, 0
      %p205 = por %p203, %p204
      %s207 = sadd.s32 %s206, 1
      %p210 = scmp.eq.s32.totalorder %s27, 1
      %p211 = scmp.ne.s32.totalorder %s206, %s208
      %p212 = scmp.eq.s32.totalorder %s27, 0
      %p213 = por %p211, %p212
      %p214 = scmp.ne.s32.totalorder %s206, %s208
      %p215 = scmp.eq.s32.totalorder %s32, 1
      %p216 = por %p214, %p215
      %p217 = scmp.ne.s32.totalorder %s208, %s209
      %p218 = scmp.eq.s32.totalorder %s32, 0
      %p219 = por %p217, %p218
      %p220 = scmp.ne.s32.totalorder %s208, %s209
      %p221 = scmp.eq.s32.totalorder %s33, 1
      %p222 = por %p220, %p221
      %p224 = scmp.ne.s32.totalorder %s209, %s223
      %p225 = scmp.eq.s32.totalorder %s33, 0
      %p226 = por %p224, %p225
      %s228 = sadd.s32 %s227, 1
      %p231 = scmp.eq.s32.totalorder %s27, 1
      %p232 = scmp.ne.s32.totalorder %s227, %s229
      %p233 = scmp.eq.s32.totalorder %s27, 0
      %p234 = por %p232, %p233
      %p235 = scmp.ne.s32.totalorder %s227, %s229
      %p236 = scmp.eq.s32.totalorder %s32, 1
      %p237 = por %p235, %p236
      %p238 = scmp.ne.s32.totalorder %s229, %s230
      %p239 = scmp.eq.s32.totalorder %s32, 0
      %p240 = por %p238, %p239
      %p241 = scmp.ne.s32.totalorder %s229, %s230
      %p242 = scmp.eq.s32.totalorder %s33, 1
      %p243 = por %p241, %p242
      %p245 = scmp.ne.s32.totalorder %s230, %s244
      %p246 = scmp.eq.s32.totalorder %s33, 0
      %p247 = por %p245, %p246
      %s249 = sadd.s32 %s248, 1
      %p252 = scmp.eq.s32.totalorder %s27, 1
      %p253 = scmp.ne.s32.totalorder %s248, %s250
      %p254 = scmp.eq.s32.totalorder %s27, 0
      %p255 = por %p253, %p254
      %p256 = scmp.ne.s32.totalorder %s248, %s250
      %p257 = scmp.eq.s32.totalorder %s32, 1
      %p258 = por %p256, %p257
      %p259 = scmp.ne.s32.totalorder %s250, %s251
      %p260 = scmp.eq.s32.totalorder %s32, 0
      %p261 = por %p259, %p260
      %p262 = scmp.ne.s32.totalorder %s250, %s251
      %p263 = scmp.eq.s32.totalorder %s33, 1
      %p264 = por %p262, %p263
      %p266 = scmp.ne.s32.totalorder %s251, %s265
      %p267 = scmp.eq.s32.totalorder %s33, 0
      %p268 = por %p266, %p267
      %s270 = sadd.s32 %s269, 1
      %p273 = scmp.eq.s32.totalorder %s27, 1
      %p274 = scmp.ne.s32.totalorder %s269, %s271
      %p275 = scmp.eq.s32.totalorder %s27, 0
      %p276 = por %p274, %p275
      %p277 = scmp.ne.s32.totalorder %s269, %s271
      %p278 = scmp.eq.s32.totalorder %s32, 1
      %p279 = por %p277, %p278
      %p280 = scmp.ne.s32.totalorder %s271, %s272
      %p281 = scmp.eq.s32.totalorder %s32, 0
      %p282 = por %p280, %p281
      %p283 = scmp.ne.s32.totalorder %s271, %s272
      %p284 = scmp.eq.s32.totalorder %s33, 1
      %p285 = por %p283, %p284
      %p287 = scmp.ne.s32.totalorder %s272, %s286
      %p288 = scmp.eq.s32.totalorder %s33, 0
      %p289 = por %p287, %p288
      %s291 = sadd.s32 %s290, 1
      %p294 = scmp.eq.s32.totalorder %s27, 1
      %p295 = scmp.ne.s32.totalorder %s290, %s292
      %p296 = scmp.eq.s32.totalorder %s27, 0
      %p297 = por %p295, %p296
      %p298 = scmp.ne.s32.totalorder %s290, %s292
      %p299 = scmp.eq.s32.totalorder %s32, 1
      %p300 = por %p298, %p299
      %p301 = scmp.ne.s32.totalorder %s292, %s293
      %p302 = scmp.eq.s32.totalorder %s32, 0
      %p303 = por %p301, %p302
      %p304 = scmp.ne.s32.totalorder %s292, %s293
      %p305 = scmp.eq.s32.totalorder %s33, 1
      %p306 = por %p304, %p305
      %p308 = scmp.ne.s32.totalorder %s293, %s307
      %p309 = scmp.eq.s32.totalorder %s33, 0
      %p310 = por %p308, %p309
      %s312 = sadd.s32 %s311, 1
      %p315 = scmp.eq.s32.totalorder %s27, 1
      %p316 = scmp.ne.s32.totalorder %s311, %s313
      %p317 = scmp.eq.s32.totalorder %s27, 0
      %p318 = por %p316, %p317
      %p319 = scmp.ne.s32.totalorder %s311, %s313
      %p320 = scmp.eq.s32.totalorder %s32, 1
      %p321 = por %p319, %p320
      %p322 = scmp.ne.s32.totalorder %s313, %s314
      %p323 = scmp.eq.s32.totalorder %s32, 0
      %p324 = por %p322, %p323
      %p325 = scmp.ne.s32.totalorder %s313, %s314
      %p326 = scmp.eq.s32.totalorder %s33, 1
      %p327 = por %p325, %p326
      %p329 = scmp.ne.s32.totalorder %s314, %s328
      %p330 = scmp.eq.s32.totalorder %s33, 0
      %p331 = por %p329, %p330
      %s333 = sadd.s32 %s332, 1
      %p336 = scmp.eq.s32.totalorder %s27, 1
      %p337 = scmp.ne.s32.totalorder %s332, %s334
      %p338 = scmp.eq.s32.totalorder %s27, 0
      %p339 = por %p337, %p338
      %p340 = scmp.ne.s32.totalorder %s332, %s334
      %p341 = scmp.eq.s32.totalorder %s32, 1
      %p342 = por %p340, %p341
      %p343 = scmp.ne.s32.totalorder %s334, %s335
      %p344 = scmp.eq.s32.totalorder %s32, 0
      %p345 = por %p343, %p344
      %p346 = scmp.ne.s32.totalorder %s334, %s335
      %p347 = scmp.eq.s32.totalorder %s33, 1
      %p348 = por %p346, %p347
      %p350 = scmp.ne.s32.totalorder %s335, %s349
      %p351 = scmp.eq.s32.totalorder %s33, 0
      %p352 = por %p350, %p351
      %s354 = sadd.s32 %s353, 1
      %p357 = scmp.eq.s32.totalorder %s27, 1
      %p358 = scmp.ne.s32.totalorder %s353, %s355
      %p359 = scmp.eq.s32.totalorder %s27, 0
      %p360 = por %p358, %p359
      %p361 = scmp.ne.s32.totalorder %s353, %s355
      %p362 = scmp.eq.s32.totalorder %s32, 1
      %p363 = por %p361, %p362
      %p364 = scmp.ne.s32.totalorder %s355, %s356
      %p365 = scmp.eq.s32.totalorder %s32, 0
      %p366 = por %p364, %p365
      %p367 = scmp.ne.s32.totalorder %s355, %s356
      %p368 = scmp.eq.s32.totalorder %s33, 1
      %p369 = por %p367, %p368
      %p371 = scmp.ne.s32.totalorder %s356, %s370
      %p372 = scmp.eq.s32.totalorder %s33, 0
      %p373 = por %p371, %p372
      %s375 = sadd.s32 %s374, 1
      %p378 = scmp.eq.s32.totalorder %s27, 1
      %p379 = scmp.ne.s32.totalorder %s374, %s376
      %p380 = scmp.eq.s32.totalorder %s27, 0
      %p381 = por %p379, %p380
      %p382 = scmp.ne.s32.totalorder %s374, %s376
      %p383 = scmp.eq.s32.totalorder %s32, 1
      %p384 = por %p382, %p383
      %p385 = scmp.ne.s32.totalorder %s376, %s377
      %p386 = scmp.eq.s32.totalorder %s32, 0
      %p387 = por %p385, %p386
      %p388 = scmp.ne.s32.totalorder %s376, %s377
      %p389 = scmp.eq.s32.totalorder %s33, 1
      %p390 = por %p388, %p389
      %p392 = scmp.ne.s32.totalorder %s377, %s391
      %p393 = scmp.eq.s32.totalorder %s33, 0
      %p394 = por %p392, %p393
      %s396 = sadd.s32 %s395, 1
      %p399 = scmp.eq.s32.totalorder %s27, 1
      %p400 = scmp.ne.s32.totalorder %s395, %s397
      %p401 = scmp.eq.s32.totalorder %s27, 0
      %p402 = por %p400, %p401
      %p403 = scmp.ne.s32.totalorder %s395, %s397
      %p404 = scmp.eq.s32.totalorder %s32, 1
      %p405 = por %p403, %p404
      %p406 = scmp.ne.s32.totalorder %s397, %s398
      %p407 = scmp.eq.s32.totalorder %s32, 0
      %p408 = por %p406, %p407
      %p409 = scmp.ne.s32.totalorder %s397, %s398
      %p410 = scmp.eq.s32.totalorder %s33, 1
      %p411 = por %p409, %p410
      %p413 = scmp.ne.s32.totalorder %s398, %s412
      %p414 = scmp.eq.s32.totalorder %s33, 0
      %p415 = por %p413, %p414
      %s417 = sadd.s32 %s416, 1
      %p420 = scmp.eq.s32.totalorder %s27, 1
      %p421 = scmp.ne.s32.totalorder %s416, %s418
      %p422 = scmp.eq.s32.totalorder %s27, 0
      %p423 = por %p421, %p422
      %p424 = scmp.ne.s32.totalorder %s416, %s418
      %p425 = scmp.eq.s32.totalorder %s32, 1
      %p426 = por %p424, %p425
      %p427 = scmp.ne.s32.totalorder %s418, %s419
      %p428 = scmp.eq.s32.totalorder %s32, 0
      %p429 = por %p427, %p428
      %p430 = scmp.ne.s32.totalorder %s418, %s419
      %p431 = scmp.eq.s32.totalorder %s33, 1
      %p432 = por %p430, %p431
      %p434 = scmp.ne.s32.totalorder %s419, %s433
      %p435 = scmp.eq.s32.totalorder %s33, 0
      %p436 = por %p434, %p435
      %s437 = ssub.s32 %s34, %s46
      %s438 = ssub.s32 %s35, %s42
      %s439 = sor.u32 %s437, %s438
      %p440 = scmp.eq.s32.totalorder %s439, 0
      %s442 = sadd.s32 %s441, 1
      %s443 = scalar_select %p440, %s441, %s442
      %p446 = pneg %p440
      %p447 = scmp.eq.s32.totalorder %s27, 1
      %p448 = por %p446, %p447
      %p449 = scmp.ne.s32.totalorder %s441, %s444
      %p450 = scmp.eq.s32.totalorder %s27, 0
      %p451 = por %p449, %p450
      %p452 = scmp.ne.s32.totalorder %s441, %s444
      %p453 = scmp.eq.s32.totalorder %s32, 1
      %p454 = por %p452, %p453
      %p455 = scmp.ne.s32.totalorder %s444, %s445
      %p456 = scmp.eq.s32.totalorder %s32, 0
      %p457 = por %p455, %p456
      %p458 = scmp.ne.s32.totalorder %s444, %s445
      %p459 = scmp.eq.s32.totalorder %s33, 1
      %p460 = por %p458, %p459
      %p462 = scmp.ne.s32.totalorder %s445, %s461
      %p463 = scmp.eq.s32.totalorder %s33, 0
      %p464 = por %p462, %p463
      %p465 = scmp.le.s32.totalorder 1, %s27
      %p466 = scmp.lt.s32.totalorder %s27, 3
      %p467 = pnand %p465, %p466
      %p468 = pneg %p467
      // Predicated region
      $region9: #{tpu_custom_call.1} parent=5 // pred_check
        _
      $region10: #{tpu_custom_call.1} parent=5 // pred_check_branch
        %470 = sbr.rel (%p467) target = $region12
      $region11: #{tpu_custom_call.1} parent=5 // pred_region
        %s471 = ssub.s32 %s27, 1
        // Predicated region
        $region13: #{tpu_custom_call.1} parent=11 // pred_check
          %p472 = pneg %p114
        $region14: #{tpu_custom_call.1} parent=11 // pred_check_branch
          %474 = sbr.rel (%p472) target = $region16
        $region15: #{tpu_custom_call.1} parent=11 // pred_region
          _
        $region16: #{tpu_custom_call.1} parent=11 // pred_fallthru
          _
        // Predicated region
        $region17: #{tpu_custom_call.1} parent=11 // pred_check
          %p475 = pneg %p135
        $region18: #{tpu_custom_call.1} parent=11 // pred_check_branch
          %477 = sbr.rel (%p475) target = $region20
        $region19: #{tpu_custom_call.1} parent=11 // pred_region
          _
        $region20: #{tpu_custom_call.1} parent=11 // pred_fallthru
          _
        // Predicated region
        $region21: #{tpu_custom_call.1} parent=11 // pred_check
          %p478 = pneg %p156
        $region22: #{tpu_custom_call.1} parent=11 // pred_check_branch
          %480 = sbr.rel (%p478) target = $region24
        $region23: #{tpu_custom_call.1} parent=11 // pred_region
          _
        $region24: #{tpu_custom_call.1} parent=11 // pred_fallthru
          _
        // Predicated region
        $region25: #{tpu_custom_call.1} parent=11 // pred_check
          %p481 = pneg %p177
        $region26: #{tpu_custom_call.1} parent=11 // pred_check_branch
          %483 = sbr.rel (%p481) target = $region28
        $region27: #{tpu_custom_call.1} parent=11 // pred_region
          _
        $region28: #{tpu_custom_call.1} parent=11 // pred_fallthru
          _
        // Predicated region
        $region29: #{tpu_custom_call.1} parent=11 // pred_check
          %p484 = pneg %p198
        $region30: #{tpu_custom_call.1} parent=11 // pred_check_branch
          %486 = sbr.rel (%p484) target = $region32
        $region31: #{tpu_custom_call.1} parent=11 // pred_region
          _
        $region32: #{tpu_custom_call.1} parent=11 // pred_fallthru
          _
        // Predicated region
        $region33: #{tpu_custom_call.1} parent=11 // pred_check
          %p487 = pneg %p219
        $region34: #{tpu_custom_call.1} parent=11 // pred_check_branch
          %489 = sbr.rel (%p487) target = $region36
        $region35: #{tpu_custom_call.1} parent=11 // pred_region
          _
        $region36: #{tpu_custom_call.1} parent=11 // pred_fallthru
          _
        // Predicated region
        $region37: #{tpu_custom_call.1} parent=11 // pred_check
          %p490 = pneg %p240
        $region38: #{tpu_custom_call.1} parent=11 // pred_check_branch
          %492 = sbr.rel (%p490) target = $region40
        $region39: #{tpu_custom_call.1} parent=11 // pred_region
          _
        $region40: #{tpu_custom_call.1} parent=11 // pred_fallthru
          _
        // Predicated region
        $region41: #{tpu_custom_call.1} parent=11 // pred_check
          %p493 = pneg %p261
        $region42: #{tpu_custom_call.1} parent=11 // pred_check_branch
          %495 = sbr.rel (%p493) target = $region44
        $region43: #{tpu_custom_call.1} parent=11 // pred_region
          _
        $region44: #{tpu_custom_call.1} parent=11 // pred_fallthru
          _
        // Predicated region
        $region45: #{tpu_custom_call.1} parent=11 // pred_check
          %p496 = pneg %p282
        $region46: #{tpu_custom_call.1} parent=11 // pred_check_branch
          %498 = sbr.rel (%p496) target = $region48
        $region47: #{tpu_custom_call.1} parent=11 // pred_region
          _
        $region48: #{tpu_custom_call.1} parent=11 // pred_fallthru
          _
        // Predicated region
        $region49: #{tpu_custom_call.1} parent=11 // pred_check
          %p499 = pneg %p303
        $region50: #{tpu_custom_call.1} parent=11 // pred_check_branch
          %501 = sbr.rel (%p499) target = $region52
        $region51: #{tpu_custom_call.1} parent=11 // pred_region
          _
        $region52: #{tpu_custom_call.1} parent=11 // pred_fallthru
          _
        // Predicated region
        $region53: #{tpu_custom_call.1} parent=11 // pred_check
          %p502 = pneg %p324
        $region54: #{tpu_custom_call.1} parent=11 // pred_check_branch
          %504 = sbr.rel (%p502) target = $region56
        $region55: #{tpu_custom_call.1} parent=11 // pred_region
          _
        $region56: #{tpu_custom_call.1} parent=11 // pred_fallthru
          _
        // Predicated region
        $region57: #{tpu_custom_call.1} parent=11 // pred_check
          %p505 = pneg %p345
        $region58: #{tpu_custom_call.1} parent=11 // pred_check_branch
          %507 = sbr.rel (%p505) target = $region60
        $region59: #{tpu_custom_call.1} parent=11 // pred_region
          _
        $region60: #{tpu_custom_call.1} parent=11 // pred_fallthru
          _
        // Predicated region
        $region61: #{tpu_custom_call.1} parent=11 // pred_check
          %p508 = pneg %p366
        $region62: #{tpu_custom_call.1} parent=11 // pred_check_branch
          %510 = sbr.rel (%p508) target = $region64
        $region63: #{tpu_custom_call.1} parent=11 // pred_region
          _
        $region64: #{tpu_custom_call.1} parent=11 // pred_fallthru
          _
        // Predicated region
        $region65: #{tpu_custom_call.1} parent=11 // pred_check
          %p511 = pneg %p387
        $region66: #{tpu_custom_call.1} parent=11 // pred_check_branch
          %513 = sbr.rel (%p511) target = $region68
        $region67: #{tpu_custom_call.1} parent=11 // pred_region
          _
        $region68: #{tpu_custom_call.1} parent=11 // pred_fallthru
          _
        // Predicated region
        $region69: #{tpu_custom_call.1} parent=11 // pred_check
          %p514 = pneg %p408
        $region70: #{tpu_custom_call.1} parent=11 // pred_check_branch
          %516 = sbr.rel (%p514) target = $region72
        $region71: #{tpu_custom_call.1} parent=11 // pred_region
          _
        $region72: #{tpu_custom_call.1} parent=11 // pred_fallthru
          _
        // Predicated region
        $region73: #{tpu_custom_call.1} parent=11 // pred_check
          %p517 = pneg %p429
        $region74: #{tpu_custom_call.1} parent=11 // pred_check_branch
          %519 = sbr.rel (%p517) target = $region76
        $region75: #{tpu_custom_call.1} parent=11 // pred_region
          _
        $region76: #{tpu_custom_call.1} parent=11 // pred_fallthru
          _
      $region12: #{tpu_custom_call.1} parent=5 // pred_fallthru
        _
      %p520 = scmp.lt.s32.totalorder %s27, 2
      // Predicated region
      $region77: #{tpu_custom_call.1} parent=5 // pred_check
        %p521 = pneg %p520
      $region78: #{tpu_custom_call.1} parent=5 // pred_check_branch
        %523 = sbr.rel (%p521) target = $region80
      $region79: #{tpu_custom_call.1} parent=5 // pred_region
        // Predicated region
        $region81: #{tpu_custom_call.1} parent=79 // pred_check
          %p524 = pneg %p61
        $region82: #{tpu_custom_call.1} parent=79 // pred_check_branch
          %526 = sbr.rel (%p524) target = $region84
        $region83: #{tpu_custom_call.1} parent=79 // pred_region
          %p527 = scmp.lt.s32.totalorder %s34, 1
          %s528 = scalar_select %p527, %s34, 1
          %p529 = scmp.lt.s32.totalorder %s35, 0
          %s530 = scalar_select %p529, %s35, 0
          %s531 = sadd.s32 %s530, %s528
          %s532 = smul.addr %s531, 8
          %s533 = scalar_lea.vmem %s0, %s532
        $region84: #{tpu_custom_call.1} parent=79 // pred_fallthru
          _
        // Predicated region
        $region85: #{tpu_custom_call.1} parent=79 // pred_check
          %p534 = pneg %p87
        $region86: #{tpu_custom_call.1} parent=79 // pred_check_branch
          %536 = sbr.rel (%p534) target = $region88
        $region87: #{tpu_custom_call.1} parent=79 // pred_region
          %p537 = scmp.lt.s32.totalorder %s34, 1
          %s538 = scalar_select %p537, %s34, 1
          %s539 = smul.addr %s538, 4
          %s540 = scalar_lea.vmem %s1, %s539
        $region88: #{tpu_custom_call.1} parent=79 // pred_fallthru
          _
      $region80: #{tpu_custom_call.1} parent=5 // pred_fallthru
        _
      %p541 = scmp.le.s32.totalorder 1, %s27
      %p542 = scmp.lt.s32.totalorder %s27, 3
      %p543 = pnand %p541, %p542
      %p544 = pneg %p543
      // Predicated region
      $region89: #{tpu_custom_call.1} parent=5 // pred_check
        _
      $region90: #{tpu_custom_call.1} parent=5 // pred_check_branch
        %546 = sbr.rel (%p543) target = $region92
      $region91: #{tpu_custom_call.1} parent=5 // pred_region
        %s547 = ssub.s32 %s27, 1
        %p548 = scmp.lt.s32.totalorder %s36, 1
        %s549 = scalar_select %p548, %s36, 1
        %p550 = scmp.lt.s32.totalorder %s37, 0
        %s551 = scalar_select %p550, %s37, 0
        %s552 = sadd.s32 %s551, %s549
        %s553 = smul.addr %s552, 8
        %s554 = scalar_lea.vmem %s0, %s553
        %p555 = pneg %p67
        %p556 = pneg %p64
        %p557 = scmp.lt.s32.totalorder %s36, 1
        %s558 = scalar_select %p557, %s36, 1
        %s559 = smul.addr %s558, 4
        %s560 = scalar_lea.vmem %s1, %s559
        %p561 = pneg %p93
        %p562 = pneg %p90
        %p563 = pneg %p114
        %p564 = pneg %p111
        %p565 = pneg %p135
        %p566 = pneg %p132
        %p567 = pneg %p156
        %p568 = pneg %p153
        %p569 = pneg %p177
        %p570 = pneg %p174
        %p571 = pneg %p198
        %p572 = pneg %p195
        %p573 = pneg %p219
        %p574 = pneg %p216
        %p575 = pneg %p240
        %p576 = pneg %p237
        %p577 = pneg %p261
        %p578 = pneg %p258
        %p579 = pneg %p282
        %p580 = pneg %p279
        %p581 = pneg %p303
        %p582 = pneg %p300
        %p583 = pneg %p324
        %p584 = pneg %p321
        %p585 = pneg %p345
        %p586 = pneg %p342
        %p587 = pneg %p366
        %p588 = pneg %p363
        %p589 = pneg %p387
        %p590 = pneg %p384
        %p591 = pneg %p408
        %p592 = pneg %p405
        %p593 = pneg %p429
        %p594 = pneg %p426
        %p595 = pneg %p457
        %p596 = pneg %p454
        %s597 = sand.u32 %s444, 1
        %s598 = scalar_lea.sflag [#allocation5], %s597
        %s599 = sand.u32 %s444, 1
        %s600 = smul.addr %s599, 8
        %s601 = scalar_lea.vmem [#allocation4], %s600
        %p602 = scmp.lt.s32.totalorder %s36, 1
        %s603 = scalar_select %p602, %s36, 1
        %p604 = scmp.lt.s32.totalorder %s37, 0
        %s605 = scalar_select %p604, %s37, 0
        %s606 = sadd.s32 %s605, %s603
        %s607 = smul.addr %s606, 8
        %s608 = scalar_lea.vmem %s0, %s607
        %p609 = scmp.lt.s32.totalorder %s36, 1
        %s610 = scalar_select %p609, %s36, 1
        %s611 = smul.addr %s610, 4
        %s612 = scalar_lea.vmem %s1, %s611
        %v614 = vld [vmem:[%s608] sm:$0xff]
        %p615 = scmp.eq.s32.totalorder %s37, 0
        // Predicated region
        $region93: #{tpu_custom_call.1} parent=91 // pred_check
          %p616 = pneg %p615
        $region94: #{tpu_custom_call.1} parent=91 // pred_check_branch
          %618 = sbr.rel (%p616) target = $region96
        $region95: #{tpu_custom_call.1} parent=91 // pred_region
          %v619 = vld [vmem:[%s612] sm:$0xf]
          %v620 = vld [vmem:[%s4] sm:$0xf]
          %v621 = vld [vmem:[%s4 + $0x4] sm:$0xf]
          %v622 = vld [vmem:[%s4 + $0x8] sm:$0xf]
          %v623 = vld [vmem:[%s4 + $0xc] sm:$0xf]
          %v624 = vld [vmem:[%s5] sm:$0x1]
          %v626 = vlaneseq
          %v627 = vshrl.u32 %v626, 7
          %v628 = vsub.s32 0, %v627
          %v629 = vrot.slane %v624, %v628
          %v635 = vunpack.c.l.b16 %v620
          %v636 = vunpack.c.l.b16 %v621
          %v637 = vunpack.c.l.b16 %v622
          %v638 = vunpack.c.l.b16 %v623
          %v639 = vpack.c.b16 %v636, %v635
          %v640 = vpack.c.b16 %v638, %v637
          %vm643 = vcmask 261120
          %v645 = vsel %vm643, %v619, 0
          %647 = vmatprep.subr.bf16.mxu0 0
          %648 = vmatpush1.bf16.msra.mxu0 %v639
          %649 = vmatprep.subr.bf16.mxu0 0
          %650 = vmatpush1.bf16.msra.mxu0 %v640
          %651 = vmatprep.subr.bf16.mxu0 0
          %652 = vmatpush1.bf16.msra.mxu0 0
          %653 = vmatprep.subr.bf16.mxu0 0
          %654 = vmatpush1.bf16.msra.mxu0 0
          %655 = vmatprep.subr.bf16.mxu0 0
          %656 = vmatpush1.bf16.msra.mxu0 0
          %657 = vmatprep.subr.bf16.mxu0 0
          %658 = vmatpush1.bf16.msra.mxu0 0
          %659 = vmatprep.subr.bf16.mxu0 0
          %660 = vmatpush1.bf16.msra.mxu0 0
          %661 = vmatprep.subr.bf16.mxu0 0
          %662 = vmatpush1.bf16.msra.mxu0 0
          %663 = vmatprep.subr.bf16.mxu0 0
          %664 = vmatpush1.bf16.msra.mxu0 0
          %665 = vmatprep.subr.bf16.mxu0 0
          %666 = vmatpush1.bf16.msra.mxu0 0
          %667 = vmatprep.subr.bf16.mxu0 0
          %668 = vmatpush1.bf16.msra.mxu0 0
          %669 = vmatprep.subr.bf16.mxu0 0
          %670 = vmatpush1.bf16.msra.mxu0 0
          %671 = vmatprep.subr.bf16.mxu0 0
          %672 = vmatpush1.bf16.msra.mxu0 0
          %673 = vmatprep.subr.bf16.mxu0 0
          %674 = vmatpush1.bf16.msra.mxu0 0
          %675 = vmatprep.subr.bf16.mxu0 0
          %676 = vmatpush1.bf16.msra.mxu0 0
          %677 = vmatprep.subr.bf16.mxu0 0
          %678 = vmatpush1.bf16.msra.mxu0 0
          %679 = vmatprep.mubr.bf16.mxu0 0
          %680 = vmatmul.mubr.bf16.gmra.mrb[0].mxu0 %v645
          %v681 = vpop.f32.mrb[0].mxu0
          %v682 = vadd.f32 %v629, %v681
          %v683 = vpop.f32.mrb[0].mxu0
          %v684 = vpop.f32.mrb[0].mxu0
          %v685 = vpop.f32.mrb[0].mxu0
          %686 = vdwg.mxu0
          %v687 = vpack.c.bf16 %v682, %v682
          %vm688 = vcmask 60416
          %689 = vst.msk [vmem:[#allocation2] sm:$0xf] %vm688, %v687
          %v690 = vld [vmem:[%s6] sm:$0xf]
          %v691 = vld [vmem:[%s6 + $0x4] sm:$0xf]
          %v692 = vld [vmem:[%s6 + $0x8] sm:$0xf]
          %v693 = vld [vmem:[%s6 + $0xc] sm:$0xf]
          %v694 = vld [vmem:[%s7] sm:$0x1]
          %v696 = vlaneseq
          %v697 = vshrl.u32 %v696, 7
          %v698 = vsub.s32 0, %v697
          %v699 = vrot.slane %v694, %v698
          %v705 = vunpack.c.l.b16 %v690
          %v706 = vunpack.c.l.b16 %v691
          %v707 = vunpack.c.l.b16 %v692
          %v708 = vunpack.c.l.b16 %v693
          %v709 = vpack.c.b16 %v706, %v705
          %v710 = vpack.c.b16 %v708, %v707
          %713 = vmatprep.subr.bf16.mxu0 0
          %714 = vmatpush1.bf16.msra.mxu0 %v709
          %715 = vmatprep.subr.bf16.mxu0 0
          %716 = vmatpush1.bf16.msra.mxu0 %v710
          %717 = vmatprep.subr.bf16.mxu0 0
          %718 = vmatpush1.bf16.msra.mxu0 0
          %719 = vmatprep.subr.bf16.mxu0 0
          %720 = vmatpush1.bf16.msra.mxu0 0
          %721 = vmatprep.subr.bf16.mxu0 0
          %722 = vmatpush1.bf16.msra.mxu0 0
          %723 = vmatprep.subr.bf16.mxu0 0
          %724 = vmatpush1.bf16.msra.mxu0 0
          %725 = vmatprep.subr.bf16.mxu0 0
          %726 = vmatpush1.bf16.msra.mxu0 0
          %727 = vmatprep.subr.bf16.mxu0 0
          %728 = vmatpush1.bf16.msra.mxu0 0
          %729 = vmatprep.subr.bf16.mxu0 0
          %730 = vmatpush1.bf16.msra.mxu0 0
          %731 = vmatprep.subr.bf16.mxu0 0
          %732 = vmatpush1.bf16.msra.mxu0 0
          %733 = vmatprep.subr.bf16.mxu0 0
          %734 = vmatpush1.bf16.msra.mxu0 0
          %735 = vmatprep.subr.bf16.mxu0 0
          %736 = vmatpush1.bf16.msra.mxu0 0
          %737 = vmatprep.subr.bf16.mxu0 0
          %738 = vmatpush1.bf16.msra.mxu0 0
          %739 = vmatprep.subr.bf16.mxu0 0
          %740 = vmatpush1.bf16.msra.mxu0 0
          %741 = vmatprep.subr.bf16.mxu0 0
          %742 = vmatpush1.bf16.msra.mxu0 0
          %743 = vmatprep.subr.bf16.mxu0 0
          %744 = vmatpush1.bf16.msra.mxu0 0
          %745 = vmatprep.mubr.bf16.mxu0 0
          %746 = vmatmul.mubr.bf16.gmra.mrb[0].mxu0 %v645
          %v747 = vpop.f32.mrb[0].mxu0
          %v748 = vadd.f32 %v699, %v747
          %v749 = vpop.f32.mrb[0].mxu0
          %v750 = vpop.f32.mrb[0].mxu0
          %v751 = vpop.f32.mrb[0].mxu0
          %752 = vdwg.mxu0
          %v753 = vpack.c.bf16 %v748, %v748
          %754 = vst.msk [vmem:[#allocation3] sm:$0xf] %vm688, %v753
          %s755 = scalar_lea.vmem %s4, 16
          %v756 = vld [vmem:[%s755] sm:$0xf]
          %v757 = vld [vmem:[%s755 + $0x4] sm:$0xf]
          %v758 = vld [vmem:[%s755 + $0x8] sm:$0xf]
          %v759 = vld [vmem:[%s755 + $0xc] sm:$0xf]
          %s760 = scalar_lea.vmem %s5, 1
          %v761 = vld [vmem:[%s760] sm:$0x1]
          %v763 = vlaneseq
          %v764 = vshrl.u32 %v763, 7
          %v765 = vsub.s32 0, %v764
          %v766 = vrot.slane %v761, %v765
          %v772 = vunpack.c.l.b16 %v756
          %v773 = vunpack.c.l.b16 %v757
          %v774 = vunpack.c.l.b16 %v758
          %v775 = vunpack.c.l.b16 %v759
          %v776 = vpack.c.b16 %v773, %v772
          %v777 = vpack.c.b16 %v775, %v774
          %780 = vmatprep.subr.bf16.mxu0 0
          %781 = vmatpush1.bf16.msra.mxu0 %v776
          %782 = vmatprep.subr.bf16.mxu0 0
          %783 = vmatpush1.bf16.msra.mxu0 %v777
          %784 = vmatprep.subr.bf16.mxu0 0
          %785 = vmatpush1.bf16.msra.mxu0 0
          %786 = vmatprep.subr.bf16.mxu0 0
          %787 = vmatpush1.bf16.msra.mxu0 0
          %788 = vmatprep.subr.bf16.mxu0 0
          %789 = vmatpush1.bf16.msra.mxu0 0
          %790 = vmatprep.subr.bf16.mxu0 0
          %791 = vmatpush1.bf16.msra.mxu0 0
          %792 = vmatprep.subr.bf16.mxu0 0
          %793 = vmatpush1.bf16.msra.mxu0 0
          %794 = vmatprep.subr.bf16.mxu0 0
          %795 = vmatpush1.bf16.msra.mxu0 0
          %796 = vmatprep.subr.bf16.mxu0 0
          %797 = vmatpush1.bf16.msra.mxu0 0
          %798 = vmatprep.subr.bf16.mxu0 0
          %799 = vmatpush1.bf16.msra.mxu0 0
          %800 = vmatprep.subr.bf16.mxu0 0
          %801 = vmatpush1.bf16.msra.mxu0 0
          %802 = vmatprep.subr.bf16.mxu0 0
          %803 = vmatpush1.bf16.msra.mxu0 0
          %804 = vmatprep.subr.bf16.mxu0 0
          %805 = vmatpush1.bf16.msra.mxu0 0
          %806 = vmatprep.subr.bf16.mxu0 0
          %807 = vmatpush1.bf16.msra.mxu0 0
          %808 = vmatprep.subr.bf16.mxu0 0
          %809 = vmatpush1.bf16.msra.mxu0 0
          %810 = vmatprep.subr.bf16.mxu0 0
          %811 = vmatpush1.bf16.msra.mxu0 0
          %812 = vmatprep.mubr.bf16.mxu0 0
          %813 = vmatmul.mubr.bf16.gmra.mrb[0].mxu0 %v645
          %v814 = vpop.f32.mrb[0].mxu0
          %v815 = vadd.f32 %v766, %v814
          %v816 = vpop.f32.mrb[0].mxu0
          %v817 = vpop.f32.mrb[0].mxu0
          %v818 = vpop.f32.mrb[0].mxu0
          %819 = vdwg.mxu0
          %v820 = vpack.c.bf16 %v815, %v815
          %s821 = scalar_lea.vmem [#allocation2], 4
          %822 = vst.msk [vmem:[%s821] sm:$0xf] %vm688, %v820
          %s823 = scalar_lea.vmem %s6, 16
          %v824 = vld [vmem:[%s823] sm:$0xf]
          %v825 = vld [vmem:[%s823 + $0x4] sm:$0xf]
          %v826 = vld [vmem:[%s823 + $0x8] sm:$0xf]
          %v827 = vld [vmem:[%s823 + $0xc] sm:$0xf]
          %s828 = scalar_lea.vmem %s7, 1
          %v829 = vld [vmem:[%s828] sm:$0x1]
          %v831 = vlaneseq
          %v832 = vshrl.u32 %v831, 7
          %v833 = vsub.s32 0, %v832
          %v834 = vrot.slane %v829, %v833
          %v840 = vunpack.c.l.b16 %v824
          %v841 = vunpack.c.l.b16 %v825
          %v842 = vunpack.c.l.b16 %v826
          %v843 = vunpack.c.l.b16 %v827
          %v844 = vpack.c.b16 %v841, %v840
          %v845 = vpack.c.b16 %v843, %v842
          %848 = vmatprep.subr.bf16.mxu0 0
          %849 = vmatpush1.bf16.msra.mxu0 %v844
          %850 = vmatprep.subr.bf16.mxu0 0
          %851 = vmatpush1.bf16.msra.mxu0 %v845
          %852 = vmatprep.subr.bf16.mxu0 0
          %853 = vmatpush1.bf16.msra.mxu0 0
          %854 = vmatprep.subr.bf16.mxu0 0
          %855 = vmatpush1.bf16.msra.mxu0 0
          %856 = vmatprep.subr.bf16.mxu0 0
          %857 = vmatpush1.bf16.msra.mxu0 0
          %858 = vmatprep.subr.bf16.mxu0 0
          %859 = vmatpush1.bf16.msra.mxu0 0
          %860 = vmatprep.subr.bf16.mxu0 0
          %861 = vmatpush1.bf16.msra.mxu0 0
          %862 = vmatprep.subr.bf16.mxu0 0
          %863 = vmatpush1.bf16.msra.mxu0 0
          %864 = vmatprep.subr.bf16.mxu0 0
          %865 = vmatpush1.bf16.msra.mxu0 0
          %866 = vmatprep.subr.bf16.mxu0 0
          %867 = vmatpush1.bf16.msra.mxu0 0
          %868 = vmatprep.subr.bf16.mxu0 0
          %869 = vmatpush1.bf16.msra.mxu0 0
          %870 = vmatprep.subr.bf16.mxu0 0
          %871 = vmatpush1.bf16.msra.mxu0 0
          %872 = vmatprep.subr.bf16.mxu0 0
          %873 = vmatpush1.bf16.msra.mxu0 0
          %874 = vmatprep.subr.bf16.mxu0 0
          %875 = vmatpush1.bf16.msra.mxu0 0
          %876 = vmatprep.subr.bf16.mxu0 0
          %877 = vmatpush1.bf16.msra.mxu0 0
          %878 = vmatprep.subr.bf16.mxu0 0
          %879 = vmatpush1.bf16.msra.mxu0 0
          %880 = vmatprep.mubr.bf16.mxu0 0
          %881 = vmatmul.mubr.bf16.gmra.mrb[0].mxu0 %v645
          %v882 = vpop.f32.mrb[0].mxu0
          %v883 = vadd.f32 %v834, %v882
          %v884 = vpop.f32.mrb[0].mxu0
          %v885 = vpop.f32.mrb[0].mxu0
          %v886 = vpop.f32.mrb[0].mxu0
          %887 = vdwg.mxu0
          %v888 = vpack.c.bf16 %v883, %v883
          %s889 = scalar_lea.vmem [#allocation3], 4
          %890 = vst.msk [vmem:[%s889] sm:$0xf] %vm688, %v888
          %s891 = scalar_lea.vmem %s4, 32
          %v892 = vld [vmem:[%s891] sm:$0xf]
          %v893 = vld [vmem:[%s891 + $0x4] sm:$0xf]
          %v894 = vld [vmem:[%s891 + $0x8] sm:$0xf]
          %v895 = vld [vmem:[%s891 + $0xc] sm:$0xf]
          %s896 = scalar_lea.vmem %s5, 2
          %v897 = vld [vmem:[%s896] sm:$0x1]
          %v899 = vlaneseq
          %v900 = vshrl.u32 %v899, 7
          %v901 = vsub.s32 0, %v900
          %v902 = vrot.slane %v897, %v901
          %v908 = vunpack.c.l.b16 %v892
          %v909 = vunpack.c.l.b16 %v893
          %v910 = vunpack.c.l.b16 %v894
          %v911 = vunpack.c.l.b16 %v895
          %v912 = vpack.c.b16 %v909, %v908
          %v913 = vpack.c.b16 %v911, %v910
          %916 = vmatprep.subr.bf16.mxu0 0
          %917 = vmatpush1.bf16.msra.mxu0 %v912
          %918 = vmatprep.subr.bf16.mxu0 0
          %919 = vmatpush1.bf16.msra.mxu0 %v913
          %920 = vmatprep.subr.bf16.mxu0 0
          %921 = vmatpush1.bf16.msra.mxu0 0
          %922 = vmatprep.subr.bf16.mxu0 0
          %923 = vmatpush1.bf16.msra.mxu0 0
          %924 = vmatprep.subr.bf16.mxu0 0
          %925 = vmatpush1.bf16.msra.mxu0 0
          %926 = vmatprep.subr.bf16.mxu0 0
          %927 = vmatpush1.bf16.msra.mxu0 0
          %928 = vmatprep.subr.bf16.mxu0 0
          %929 = vmatpush1.bf16.msra.mxu0 0
          %930 = vmatprep.subr.bf16.mxu0 0
          %931 = vmatpush1.bf16.msra.mxu0 0
          %932 = vmatprep.subr.bf16.mxu0 0
          %933 = vmatpush1.bf16.msra.mxu0 0
          %934 = vmatprep.subr.bf16.mxu0 0
          %935 = vmatpush1.bf16.msra.mxu0 0
          %936 = vmatprep.subr.bf16.mxu0 0
          %937 = vmatpush1.bf16.msra.mxu0 0
          %938 = vmatprep.subr.bf16.mxu0 0
          %939 = vmatpush1.bf16.msra.mxu0 0
          %940 = vmatprep.subr.bf16.mxu0 0
          %941 = vmatpush1.bf16.msra.mxu0 0
          %942 = vmatprep.subr.bf16.mxu0 0
          %943 = vmatpush1.bf16.msra.mxu0 0
          %944 = vmatprep.subr.bf16.mxu0 0
          %945 = vmatpush1.bf16.msra.mxu0 0
          %946 = vmatprep.subr.bf16.mxu0 0
          %947 = vmatpush1.bf16.msra.mxu0 0
          %948 = vmatprep.mubr.bf16.mxu0 0
          %949 = vmatmul.mubr.bf16.gmra.mrb[0].mxu0 %v645
          %v950 = vpop.f32.mrb[0].mxu0
          %v951 = vadd.f32 %v902, %v950
          %v952 = vpop.f32.mrb[0].mxu0
          %v953 = vpop.f32.mrb[0].mxu0
          %v954 = vpop.f32.mrb[0].mxu0
          %955 = vdwg.mxu0
          %v956 = vpack.c.bf16 %v951, %v951
          %s957 = scalar_lea.vmem [#allocation2], 8
          %958 = vst.msk [vmem:[%s957] sm:$0xf] %vm688, %v956
          %s959 = scalar_lea.vmem %s6, 32
          %v960 = vld [vmem:[%s959] sm:$0xf]
          %v961 = vld [vmem:[%s959 + $0x4] sm:$0xf]
          %v962 = vld [vmem:[%s959 + $0x8] sm:$0xf]
          %v963 = vld [vmem:[%s959 + $0xc] sm:$0xf]
          %s964 = scalar_lea.vmem %s7, 2
          %v965 = vld [vmem:[%s964] sm:$0x1]
          %v967 = vlaneseq
          %v968 = vshrl.u32 %v967, 7
          %v969 = vsub.s32 0, %v968
          %v970 = vrot.slane %v965, %v969
          %v976 = vunpack.c.l.b16 %v960
          %v977 = vunpack.c.l.b16 %v961
          %v978 = vunpack.c.l.b16 %v962
          %v979 = vunpack.c.l.b16 %v963
          %v980 = vpack.c.b16 %v977, %v976
          %v981 = vpack.c.b16 %v979, %v978
          %984 = vmatprep.subr.bf16.mxu0 0
          %985 = vmatpush1.bf16.msra.mxu0 %v980
          %986 = vmatprep.subr.bf16.mxu0 0
          %987 = vmatpush1.bf16.msra.mxu0 %v981
          %988 = vmatprep.subr.bf16.mxu0 0
          %989 = vmatpush1.bf16.msra.mxu0 0
          %990 = vmatprep.subr.bf16.mxu0 0
          %991 = vmatpush1.bf16.msra.mxu0 0
          %992 = vmatprep.subr.bf16.mxu0 0
          %993 = vmatpush1.bf16.msra.mxu0 0
          %994 = vmatprep.subr.bf16.mxu0 0
          %995 = vmatpush1.bf16.msra.mxu0 0
          %996 = vmatprep.subr.bf16.mxu0 0
          %997 = vmatpush1.bf16.msra.mxu0 0
          %998 = vmatprep.subr.bf16.mxu0 0
          %999 = vmatpush1.bf16.msra.mxu0 0
          %1000 = vmatprep.subr.bf16.mxu0 0
          %1001 = vmatpush1.bf16.msra.mxu0 0
          %1002 = vmatprep.subr.bf16.mxu0 0
          %1003 = vmatpush1.bf16.msra.mxu0 0
          %1004 = vmatprep.subr.bf16.mxu0 0
          %1005 = vmatpush1.bf16.msra.mxu0 0
          %1006 = vmatprep.subr.bf16.mxu0 0
          %1007 = vmatpush1.bf16.msra.mxu0 0
          %1008 = vmatprep.subr.bf16.mxu0 0
          %1009 = vmatpush1.bf16.msra.mxu0 0
          %1010 = vmatprep.subr.bf16.mxu0 0
          %1011 = vmatpush1.bf16.msra.mxu0 0
          %1012 = vmatprep.subr.bf16.mxu0 0
          %1013 = vmatpush1.bf16.msra.mxu0 0
          %1014 = vmatprep.subr.bf16.mxu0 0
          %1015 = vmatpush1.bf16.msra.mxu0 0
          %1016 = vmatprep.mubr.bf16.mxu0 0
          %1017 = vmatmul.mubr.bf16.gmra.mrb[0].mxu0 %v645
          %v1018 = vpop.f32.mrb[0].mxu0
          %v1019 = vadd.f32 %v970, %v1018
          %v1020 = vpop.f32.mrb[0].mxu0
          %v1021 = vpop.f32.mrb[0].mxu0
          %v1022 = vpop.f32.mrb[0].mxu0
          %1023 = vdwg.mxu0
          %v1024 = vpack.c.bf16 %v1019, %v1019
          %s1025 = scalar_lea.vmem [#allocation3], 8
          %1026 = vst.msk [vmem:[%s1025] sm:$0xf] %vm688, %v1024
          %s1027 = scalar_lea.vmem %s4, 48
          %v1028 = vld [vmem:[%s1027] sm:$0xf]
          %v1029 = vld [vmem:[%s1027 + $0x4] sm:$0xf]
          %v1030 = vld [vmem:[%s1027 + $0x8] sm:$0xf]
          %v1031 = vld [vmem:[%s1027 + $0xc] sm:$0xf]
          %s1032 = scalar_lea.vmem %s5, 3
          %v1033 = vld [vmem:[%s1032] sm:$0x1]
          %v1035 = vlaneseq
          %v1036 = vshrl.u32 %v1035, 7
          %v1037 = vsub.s32 0, %v1036
          %v1038 = vrot.slane %v1033, %v1037
          %v1044 = vunpack.c.l.b16 %v1028
          %v1045 = vunpack.c.l.b16 %v1029
          %v1046 = vunpack.c.l.b16 %v1030
          %v1047 = vunpack.c.l.b16 %v1031
          %v1048 = vpack.c.b16 %v1045, %v1044
          %v1049 = vpack.c.b16 %v1047, %v1046
          %1052 = vmatprep.subr.bf16.mxu0 0
          %1053 = vmatpush1.bf16.msra.mxu0 %v1048
          %1054 = vmatprep.subr.bf16.mxu0 0
          %1055 = vmatpush1.bf16.msra.mxu0 %v1049
          %1056 = vmatprep.subr.bf16.mxu0 0
          %1057 = vmatpush1.bf16.msra.mxu0 0
          %1058 = vmatprep.subr.bf16.mxu0 0
          %1059 = vmatpush1.bf16.msra.mxu0 0
          %1060 = vmatprep.subr.bf16.mxu0 0
          %1061 = vmatpush1.bf16.msra.mxu0 0
          %1062 = vmatprep.subr.bf16.mxu0 0
          %1063 = vmatpush1.bf16.msra.mxu0 0
          %1064 = vmatprep.subr.bf16.mxu0 0
          %1065 = vmatpush1.bf16.msra.mxu0 0
          %1066 = vmatprep.subr.bf16.mxu0 0
          %1067 = vmatpush1.bf16.msra.mxu0 0
          %1068 = vmatprep.subr.bf16.mxu0 0
          %1069 = vmatpush1.bf16.msra.mxu0 0
          %1070 = vmatprep.subr.bf16.mxu0 0
          %1071 = vmatpush1.bf16.msra.mxu0 0
          %1072 = vmatprep.subr.bf16.mxu0 0
          %1073 = vmatpush1.bf16.msra.mxu0 0
          %1074 = vmatprep.subr.bf16.mxu0 0
          %1075 = vmatpush1.bf16.msra.mxu0 0
          %1076 = vmatprep.subr.bf16.mxu0 0
          %1077 = vmatpush1.bf16.msra.mxu0 0
          %1078 = vmatprep.subr.bf16.mxu0 0
          %1079 = vmatpush1.bf16.msra.mxu0 0
          %1080 = vmatprep.subr.bf16.mxu0 0
          %1081 = vmatpush1.bf16.msra.mxu0 0
          %1082 = vmatprep.subr.bf16.mxu0 0
          %1083 = vmatpush1.bf16.msra.mxu0 0
          %1084 = vmatprep.mubr.bf16.mxu0 0
          %1085 = vmatmul.mubr.bf16.gmra.mrb[0].mxu0 %v645
          %v1086 = vpop.f32.mrb[0].mxu0
          %v1087 = vadd.f32 %v1038, %v1086
          %v1088 = vpop.f32.mrb[0].mxu0
          %v1089 = vpop.f32.mrb[0].mxu0
          %v1090 = vpop.f32.mrb[0].mxu0
          %1091 = vdwg.mxu0
          %v1092 = vpack.c.bf16 %v1087, %v1087
          %s1093 = scalar_lea.vmem [#allocation2], 12
          %1094 = vst.msk [vmem:[%s1093] sm:$0xf] %vm688, %v1092
          %s1095 = scalar_lea.vmem %s6, 48
          %v1096 = vld [vmem:[%s1095] sm:$0xf]
          %v1097 = vld [vmem:[%s1095 + $0x4] sm:$0xf]
          %v1098 = vld [vmem:[%s1095 + $0x8] sm:$0xf]
          %v1099 = vld [vmem:[%s1095 + $0xc] sm:$0xf]
          %s1100 = scalar_lea.vmem %s7, 3
          %v1101 = vld [vmem:[%s1100] sm:$0x1]
          %v1103 = vlaneseq
          %v1104 = vshrl.u32 %v1103, 7
          %v1105 = vsub.s32 0, %v1104
          %v1106 = vrot.slane %v1101, %v1105
          %v1112 = vunpack.c.l.b16 %v1096
          %v1113 = vunpack.c.l.b16 %v1097
          %v1114 = vunpack.c.l.b16 %v1098
          %v1115 = vunpack.c.l.b16 %v1099
          %v1116 = vpack.c.b16 %v1113, %v1112
          %v1117 = vpack.c.b16 %v1115, %v1114
          %1120 = vmatprep.subr.bf16.mxu0 0
          %1121 = vmatpush1.bf16.msra.mxu0 %v1116
          %1122 = vmatprep.subr.bf16.mxu0 0
          %1123 = vmatpush1.bf16.msra.mxu0 %v1117
          %1124 = vmatprep.subr.bf16.mxu0 0
          %1125 = vmatpush1.bf16.msra.mxu0 0
          %1126 = vmatprep.subr.bf16.mxu0 0
          %1127 = vmatpush1.bf16.msra.mxu0 0
          %1128 = vmatprep.subr.bf16.mxu0 0
          %1129 = vmatpush1.bf16.msra.mxu0 0
          %1130 = vmatprep.subr.bf16.mxu0 0
          %1131 = vmatpush1.bf16.msra.mxu0 0
          %1132 = vmatprep.subr.bf16.mxu0 0
          %1133 = vmatpush1.bf16.msra.mxu0 0
          %1134 = vmatprep.subr.bf16.mxu0 0
          %1135 = vmatpush1.bf16.msra.mxu0 0
          %1136 = vmatprep.subr.bf16.mxu0 0
          %1137 = vmatpush1.bf16.msra.mxu0 0
          %1138 = vmatprep.subr.bf16.mxu0 0
          %1139 = vmatpush1.bf16.msra.mxu0 0
          %1140 = vmatprep.subr.bf16.mxu0 0
          %1141 = vmatpush1.bf16.msra.mxu0 0
          %1142 = vmatprep.subr.bf16.mxu0 0
          %1143 = vmatpush1.bf16.msra.mxu0 0
          %1144 = vmatprep.subr.bf16.mxu0 0
          %1145 = vmatpush1.bf16.msra.mxu0 0
          %1146 = vmatprep.subr.bf16.mxu0 0
          %1147 = vmatpush1.bf16.msra.mxu0 0
          %1148 = vmatprep.subr.bf16.mxu0 0
          %1149 = vmatpush1.bf16.msra.mxu0 0
          %1150 = vmatprep.subr.bf16.mxu0 0
          %1151 = vmatpush1.bf16.msra.mxu0 0
          %1152 = vmatprep.mubr.bf16.mxu0 0
          %1153 = vmatmul.mubr.bf16.gmra.mrb[0].mxu0 %v645
          %v1154 = vpop.f32.mrb[0].mxu0
          %v1155 = vadd.f32 %v1106, %v1154
          %v1156 = vpop.f32.mrb[0].mxu0
          %v1157 = vpop.f32.mrb[0].mxu0
          %v1158 = vpop.f32.mrb[0].mxu0
          %1159 = vdwg.mxu0
          %v1160 = vpack.c.bf16 %v1155, %v1155
          %s1161 = scalar_lea.vmem [#allocation3], 12
          %1162 = vst.msk [vmem:[%s1161] sm:$0xf] %vm688, %v1160
        $region96: #{tpu_custom_call.1} parent=91 // pred_fallthru
          _
        %v1163 = vpack.c.bf16 %v614, %v614
        %v1164 = vld [vmem:[%s2] sm:$0xf]
        %v1165 = vld [vmem:[%s2 + $0x4] sm:$0xf]
        %v1166 = vld [vmem:[%s2 + $0x8] sm:$0xf]
        %v1167 = vld [vmem:[%s2 + $0xc] sm:$0xf]
        %v1168 = vld [vmem:[%s3] sm:$0x1]
        %v1170 = vlaneseq
        %v1171 = vshrl.u32 %v1170, 7
        %v1172 = vsub.s32 0, %v1171
        %v1173 = vrot.slane %v1168, %v1172
        %v1179 = vunpack.c.l.b16 %v1164
        %v1180 = vunpack.c.l.b16 %v1165
        %v1181 = vunpack.c.l.b16 %v1166
        %v1182 = vunpack.c.l.b16 %v1167
        %v1183 = vpack.c.b16 %v1180, %v1179
        %v1184 = vpack.c.b16 %v1182, %v1181
        %vm1187 = vcmask 261120
        %v1189 = vsel %vm1187, %v1163, 0
        %1191 = vmatprep.subr.bf16.mxu0 0
        %1192 = vmatpush1.bf16.msra.mxu0 %v1183
        %1193 = vmatprep.subr.bf16.mxu0 0
        %1194 = vmatpush1.bf16.msra.mxu0 %v1184
        %1195 = vmatprep.subr.bf16.mxu0 0
        %1196 = vmatpush1.bf16.msra.mxu0 0
        %1197 = vmatprep.subr.bf16.mxu0 0
        %1198 = vmatpush1.bf16.msra.mxu0 0
        %1199 = vmatprep.subr.bf16.mxu0 0
        %1200 = vmatpush1.bf16.msra.mxu0 0
        %1201 = vmatprep.subr.bf16.mxu0 0
        %1202 = vmatpush1.bf16.msra.mxu0 0
        %1203 = vmatprep.subr.bf16.mxu0 0
        %1204 = vmatpush1.bf16.msra.mxu0 0
        %1205 = vmatprep.subr.bf16.mxu0 0
        %1206 = vmatpush1.bf16.msra.mxu0 0
        %1207 = vmatprep.subr.bf16.mxu0 0
        %1208 = vmatpush1.bf16.msra.mxu0 0
        %1209 = vmatprep.subr.bf16.mxu0 0
        %1210 = vmatpush1.bf16.msra.mxu0 0
        %1211 = vmatprep.subr.bf16.mxu0 0
        %1212 = vmatpush1.bf16.msra.mxu0 0
        %1213 = vmatprep.subr.bf16.mxu0 0
        %1214 = vmatpush1.bf16.msra.mxu0 0
        %1215 = vmatprep.subr.bf16.mxu0 0
        %1216 = vmatpush1.bf16.msra.mxu0 0
        %1217 = vmatprep.subr.bf16.mxu0 0
        %1218 = vmatpush1.bf16.msra.mxu0 0
        %1219 = vmatprep.subr.bf16.mxu0 0
        %1220 = vmatpush1.bf16.msra.mxu0 0
        %1221 = vmatprep.subr.bf16.mxu0 0
        %1222 = vmatpush1.bf16.msra.mxu0 0
        %1223 = vmatprep.mubr.bf16.mxu0 0
        %1224 = vmatmul.mubr.bf16.gmra.mrb[0].mxu0 %v1189
        %v1225 = vpop.f32.mrb[0].mxu0
        %v1226 = vadd.f32 %v1173, %v1225
        %v1227 = vpop.f32.mrb[0].mxu0
        %v1228 = vpop.f32.mrb[0].mxu0
        %v1229 = vpop.f32.mrb[0].mxu0
        %1230 = vdwg.mxu0
        %v1231 = vmul.f32 %v1226, 0.35355338
        %v1232 = vld [vmem:[#allocation2] sm:$0xf]
        %v1233 = vld [vmem:[#allocation3] sm:$0xf]
        %v1234 = vpack.c.bf16 %v1231, %v1231
        %vm1235 = vcmask 64512
        %v1237 = vsel %vm1235, %v1234, 0
        %v1240 = vsel %vm1235, %v1232, 0
        %1242 = vmatprep.subr.bf16.mxu0 0
        %1243 = vmatpush1.bf16.xpose.msra.mxu0 %v1240
        %1244 = vmatprep.subr.bf16.mxu0 0
        %1245 = vmatpush1.bf16.xpose.msra.mxu0 0
        %1246 = vmatprep.subr.bf16.mxu0 0
        %1247 = vmatpush1.bf16.xpose.msra.mxu0 0
        %1248 = vmatprep.subr.bf16.mxu0 0
        %1249 = vmatpush1.bf16.xpose.msra.mxu0 0
        %1250 = vmatprep.subr.bf16.mxu0 0
        %1251 = vmatpush1.bf16.xpose.msra.mxu0 0
        %1252 = vmatprep.subr.bf16.mxu0 0
        %1253 = vmatpush1.bf16.xpose.msra.mxu0 0
        %1254 = vmatprep.subr.bf16.mxu0 0
        %1255 = vmatpush1.bf16.xpose.msra.mxu0 0
        %1256 = vmatprep.subr.bf16.mxu0 0
        %1257 = vmatpush1.bf16.xpose.msra.mxu0 0
        %1258 = vmatprep.subr.bf16.mxu0 0
        %1259 = vmatpush1.bf16.xpose.msra.mxu0 0
        %1260 = vmatprep.subr.bf16.mxu0 0
        %1261 = vmatpush1.bf16.xpose.msra.mxu0 0
        %1262 = vmatprep.subr.bf16.mxu0 0
        %1263 = vmatpush1.bf16.xpose.msra.mxu0 0
        %1264 = vmatprep.subr.bf16.mxu0 0
        %1265 = vmatpush1.bf16.xpose.msra.mxu0 0
        %1266 = vmatprep.subr.bf16.mxu0 0
        %1267 = vmatpush1.bf16.xpose.msra.mxu0 0
        %1268 = vmatprep.subr.bf16.mxu0 0
        %1269 = vmatpush1.bf16.xpose.msra.mxu0 0
        %1270 = vmatprep.subr.bf16.mxu0 0
        %1271 = vmatpush1.bf16.xpose.msra.mxu0 0
        %1272 = vmatprep.subr.bf16.mxu0 0
        %1273 = vmatpush1.bf16.xpose.msra.mxu0 0
        %1274 = vmatprep.mubr.bf16.mxu0 0
        %1275 = vmatmul.mubr.bf16.gmra.mrb[0].mxu0 %v1237
        %v1276 = vpop.f32.mrb[0].mxu0
        %v1277 = vadd.f32 0.0, %v1276
        %v1278 = vpop.f32.mrb[0].mxu0
        %v1279 = vpop.f32.mrb[0].mxu0
        %v1280 = vpop.f32.mrb[0].mxu0
        %1281 = vdwg.mxu0
        %v1282 = vsel %vm1235, %v1277, -inf
        %1283 = vmax.xlane.f32.xlu0 %v1282
        %v1284 = vpop.xlane.xlu0 %1283
        %v1285 = vsub.f32 %v1277, %v1284
        %v1286 = vmul.f32 %v1285, 1.442695
        %v1287 = vpow.pop %v1286
        %v1288 = vsel %vm1235, %v1287, 0.0
        %1289 = vadd.xlane.f32.xlu0 %v1288
        %v1290 = vpop.xlane.xlu0 %1289
        %v1291 = vrcp.pop %v1290
        %v1292 = vmul.f32 %v1287, %v1291
        %v1293 = vpack.c.bf16 %v1292, %v1292
        %v1295 = vsel %vm1235, %v1293, 0
        %vm1297 = vcmask 1043456
        %v1299 = vsel %vm1297, %v1233, 0
        %1301 = vmatprep.subr.bf16.mxu0 0
        %1302 = vmatpush1.bf16.msra.mxu0 %v1299
        %1303 = vmatprep.subr.bf16.mxu0 0
        %1304 = vmatpush1.bf16.msra.mxu0 0
        %1305 = vmatprep.subr.bf16.mxu0 0
        %1306 = vmatpush1.bf16.msra.mxu0 0
        %1307 = vmatprep.subr.bf16.mxu0 0
        %1308 = vmatpush1.bf16.msra.mxu0 0
        %1309 = vmatprep.subr.bf16.mxu0 0
        %1310 = vmatpush1.bf16.msra.mxu0 0
        %1311 = vmatprep.subr.bf16.mxu0 0
        %1312 = vmatpush1.bf16.msra.mxu0 0
        %1313 = vmatprep.subr.bf16.mxu0 0
        %1314 = vmatpush1.bf16.msra.mxu0 0
        %1315 = vmatprep.subr.bf16.mxu0 0
        %1316 = vmatpush1.bf16.msra.mxu0 0
        %1317 = vmatprep.subr.bf16.mxu0 0
        %1318 = vmatpush1.bf16.msra.mxu0 0
        %1319 = vmatprep.subr.bf16.mxu0 0
        %1320 = vmatpush1.bf16.msra.mxu0 0
        %1321 = vmatprep.subr.bf16.mxu0 0
        %1322 = vmatpush1.bf16.msra.mxu0 0
        %1323 = vmatprep.subr.bf16.mxu0 0
        %1324 = vmatpush1.bf16.msra.mxu0 0
        %1325 = vmatprep.subr.bf16.mxu0 0
        %1326 = vmatpush1.bf16.msra.mxu0 0
        %1327 = vmatprep.subr.bf16.mxu0 0
        %1328 = vmatpush1.bf16.msra.mxu0 0
        %1329 = vmatprep.subr.bf16.mxu0 0
        %1330 = vmatpush1.bf16.msra.mxu0 0
        %1331 = vmatprep.subr.bf16.mxu0 0
        %1332 = vmatpush1.bf16.msra.mxu0 0
        %1333 = vmatprep.mubr.bf16.mxu0 0
        %1334 = vmatmul.mubr.bf16.gmra.mrb[0].mxu0 %v1295
        %v1335 = vpop.f32.mrb[0].mxu0
        %v1336 = vadd.f32 0.0, %v1335
        %v1337 = vpop.f32.mrb[0].mxu0
        %v1338 = vpop.f32.mrb[0].mxu0
        %v1339 = vpop.f32.mrb[0].mxu0
        %1340 = vdwg.mxu0
        %v1341 = vpack.c.bf16 %v1336, %v1336
        %v1342 = vld [vmem:[%s8] sm:$0xf]
        %s1343 = scalar_lea.vmem %s2, 16
        %v1344 = vld [vmem:[%s1343] sm:$0xf]
        %v1345 = vld [vmem:[%s1343 + $0x4] sm:$0xf]
        %v1346 = vld [vmem:[%s1343 + $0x8] sm:$0xf]
        %v1347 = vld [vmem:[%s1343 + $0xc] sm:$0xf]
        %s1348 = scalar_lea.vmem %s3, 1
        %v1349 = vld [vmem:[%s1348] sm:$0x1]
        %v1351 = vlaneseq
        %v1352 = vshrl.u32 %v1351, 7
        %v1353 = vsub.s32 0, %v1352
        %v1354 = vrot.slane %v1349, %v1353
        %v1360 = vunpack.c.l.b16 %v1344
        %v1361 = vunpack.c.l.b16 %v1345
        %v1362 = vunpack.c.l.b16 %v1346
        %v1363 = vunpack.c.l.b16 %v1347
        %v1364 = vpack.c.b16 %v1361, %v1360
        %v1365 = vpack.c.b16 %v1363, %v1362
        %1368 = vmatprep.subr.bf16.mxu0 0
        %1369 = vmatpush1.bf16.msra.mxu0 %v1364
        %1370 = vmatprep.subr.bf16.mxu0 0
        %1371 = vmatpush1.bf16.msra.mxu0 %v1365
        %1372 = vmatprep.subr.bf16.mxu0 0
        %1373 = vmatpush1.bf16.msra.mxu0 0
        %1374 = vmatprep.subr.bf16.mxu0 0
        %1375 = vmatpush1.bf16.msra.mxu0 0
        %1376 = vmatprep.subr.bf16.mxu0 0
        %1377 = vmatpush1.bf16.msra.mxu0 0
        %1378 = vmatprep.subr.bf16.mxu0 0
        %1379 = vmatpush1.bf16.msra.mxu0 0
        %1380 = vmatprep.subr.bf16.mxu0 0
        %1381 = vmatpush1.bf16.msra.mxu0 0
        %1382 = vmatprep.subr.bf16.mxu0 0
        %1383 = vmatpush1.bf16.msra.mxu0 0
        %1384 = vmatprep.subr.bf16.mxu0 0
        %1385 = vmatpush1.bf16.msra.mxu0 0
        %1386 = vmatprep.subr.bf16.mxu0 0
        %1387 = vmatpush1.bf16.msra.mxu0 0
        %1388 = vmatprep.subr.bf16.mxu0 0
        %1389 = vmatpush1.bf16.msra.mxu0 0
        %1390 = vmatprep.subr.bf16.mxu0 0
        %1391 = vmatpush1.bf16.msra.mxu0 0
        %1392 = vmatprep.subr.bf16.mxu0 0
        %1393 = vmatpush1.bf16.msra.mxu0 0
        %1394 = vmatprep.subr.bf16.mxu0 0
        %1395 = vmatpush1.bf16.msra.mxu0 0
        %1396 = vmatprep.subr.bf16.mxu0 0
        %1397 = vmatpush1.bf16.msra.mxu0 0
        %1398 = vmatprep.subr.bf16.mxu0 0
        %1399 = vmatpush1.bf16.msra.mxu0 0
        %1400 = vmatprep.mubr.bf16.mxu0 0
        %1401 = vmatmul.mubr.bf16.gmra.mrb[0].mxu0 %v1189
        %v1402 = vpop.f32.mrb[0].mxu0
        %v1403 = vadd.f32 %v1354, %v1402
        %v1404 = vpop.f32.mrb[0].mxu0
        %v1405 = vpop.f32.mrb[0].mxu0
        %v1406 = vpop.f32.mrb[0].mxu0
        %1407 = vdwg.mxu0
        %v1408 = vmul.f32 %v1403, 0.35355338
        %s1409 = scalar_lea.vmem [#allocation2], 4
        %v1410 = vld [vmem:[%s1409] sm:$0xf]
        %s1411 = scalar_lea.vmem [#allocation3], 4
        %v1412 = vld [vmem:[%s1411] sm:$0xf]
        %v1413 = vpack.c.bf16 %v1408, %v1408
        %v1415 = vsel %vm1235, %v1413, 0
        %v1418 = vsel %vm1235, %v1410, 0
        %1420 = vmatprep.subr.bf16.mxu0 0
        %1421 = vmatpush1.bf16.xpose.msra.mxu0 %v1418
        %1422 = vmatprep.subr.bf16.mxu0 0
        %1423 = vmatpush1.bf16.xpose.msra.mxu0 0
        %1424 = vmatprep.subr.bf16.mxu0 0
        %1425 = vmatpush1.bf16.xpose.msra.mxu0 0
        %1426 = vmatprep.subr.bf16.mxu0 0
        %1427 = vmatpush1.bf16.xpose.msra.mxu0 0
        %1428 = vmatprep.subr.bf16.mxu0 0
        %1429 = vmatpush1.bf16.xpose.msra.mxu0 0
        %1430 = vmatprep.subr.bf16.mxu0 0
        %1431 = vmatpush1.bf16.xpose.msra.mxu0 0
        %1432 = vmatprep.subr.bf16.mxu0 0
        %1433 = vmatpush1.bf16.xpose.msra.mxu0 0
        %1434 = vmatprep.subr.bf16.mxu0 0
        %1435 = vmatpush1.bf16.xpose.msra.mxu0 0
        %1436 = vmatprep.subr.bf16.mxu0 0
        %1437 = vmatpush1.bf16.xpose.msra.mxu0 0
        %1438 = vmatprep.subr.bf16.mxu0 0
        %1439 = vmatpush1.bf16.xpose.msra.mxu0 0
        %1440 = vmatprep.subr.bf16.mxu0 0
        %1441 = vmatpush1.bf16.xpose.msra.mxu0 0
        %1442 = vmatprep.subr.bf16.mxu0 0
        %1443 = vmatpush1.bf16.xpose.msra.mxu0 0
        %1444 = vmatprep.subr.bf16.mxu0 0
        %1445 = vmatpush1.bf16.xpose.msra.mxu0 0
        %1446 = vmatprep.subr.bf16.mxu0 0
        %1447 = vmatpush1.bf16.xpose.msra.mxu0 0
        %1448 = vmatprep.subr.bf16.mxu0 0
        %1449 = vmatpush1.bf16.xpose.msra.mxu0 0
        %1450 = vmatprep.subr.bf16.mxu0 0
        %1451 = vmatpush1.bf16.xpose.msra.mxu0 0
        %1452 = vmatprep.mubr.bf16.mxu0 0
        %1453 = vmatmul.mubr.bf16.gmra.mrb[0].mxu0 %v1415
        %v1454 = vpop.f32.mrb[0].mxu0
        %v1455 = vadd.f32 0.0, %v1454
        %v1456 = vpop.f32.mrb[0].mxu0
        %v1457 = vpop.f32.mrb[0].mxu0
        %v1458 = vpop.f32.mrb[0].mxu0
        %1459 = vdwg.mxu0
        %v1460 = vsel %vm1235, %v1455, -inf
        %1461 = vmax.xlane.f32.xlu0 %v1460
        %v1462 = vpop.xlane.xlu0 %1461
        %v1463 = vsub.f32 %v1455, %v1462
        %v1464 = vmul.f32 %v1463, 1.442695
        %v1465 = vpow.pop %v1464
        %v1466 = vsel %vm1235, %v1465, 0.0
        %1467 = vadd.xlane.f32.xlu0 %v1466
        %v1468 = vpop.xlane.xlu0 %1467
        %v1469 = vrcp.pop %v1468
        %v1470 = vmul.f32 %v1465, %v1469
        %v1471 = vpack.c.bf16 %v1470, %v1470
        %v1473 = vsel %vm1235, %v1471, 0
        %v1476 = vsel %vm1297, %v1412, 0
        %1478 = vmatprep.subr.bf16.mxu0 0
        %1479 = vmatpush1.bf16.msra.mxu0 %v1476
        %1480 = vmatprep.subr.bf16.mxu0 0
        %1481 = vmatpush1.bf16.msra.mxu0 0
        %1482 = vmatprep.subr.bf16.mxu0 0
        %1483 = vmatpush1.bf16.msra.mxu0 0
        %1484 = vmatprep.subr.bf16.mxu0 0
        %1485 = vmatpush1.bf16.msra.mxu0 0
        %1486 = vmatprep.subr.bf16.mxu0 0
        %1487 = vmatpush1.bf16.msra.mxu0 0
        %1488 = vmatprep.subr.bf16.mxu0 0
        %1489 = vmatpush1.bf16.msra.mxu0 0
        %1490 = vmatprep.subr.bf16.mxu0 0
        %1491 = vmatpush1.bf16.msra.mxu0 0
        %1492 = vmatprep.subr.bf16.mxu0 0
        %1493 = vmatpush1.bf16.msra.mxu0 0
        %1494 = vmatprep.subr.bf16.mxu0 0
        %1495 = vmatpush1.bf16.msra.mxu0 0
        %1496 = vmatprep.subr.bf16.mxu0 0
        %1497 = vmatpush1.bf16.msra.mxu0 0
        %1498 = vmatprep.subr.bf16.mxu0 0
        %1499 = vmatpush1.bf16.msra.mxu0 0
        %1500 = vmatprep.subr.bf16.mxu0 0
        %1501 = vmatpush1.bf16.msra.mxu0 0
        %1502 = vmatprep.subr.bf16.mxu0 0
        %1503 = vmatpush1.bf16.msra.mxu0 0
        %1504 = vmatprep.subr.bf16.mxu0 0
        %1505 = vmatpush1.bf16.msra.mxu0 0
        %1506 = vmatprep.subr.bf16.mxu0 0
        %1507 = vmatpush1.bf16.msra.mxu0 0
        %1508 = vmatprep.subr.bf16.mxu0 0
        %1509 = vmatpush1.bf16.msra.mxu0 0
        %1510 = vmatprep.mubr.bf16.mxu0 0
        %1511 = vmatmul.mubr.bf16.gmra.mrb[0].mxu0 %v1473
        %v1512 = vpop.f32.mrb[0].mxu0
        %v1513 = vadd.f32 0.0, %v1512
        %v1514 = vpop.f32.mrb[0].mxu0
        %v1515 = vpop.f32.mrb[0].mxu0
        %v1516 = vpop.f32.mrb[0].mxu0
        %1517 = vdwg.mxu0
        %v1518 = vpack.c.bf16 %v1513, %v1513
        %s1519 = scalar_lea.vmem %s8, 4
        %v1520 = vld [vmem:[%s1519] sm:$0xf]
        %v1522 = vsel %vm1235, %v1518, 0
        %v1525 = vsel %vm1297, %v1520, 0
        %1527 = vmatprep.subr.bf16.mxu0 0
        %1528 = vmatpush1.bf16.msra.mxu0 %v1525
        %1529 = vmatprep.subr.bf16.mxu0 0
        %1530 = vmatpush1.bf16.msra.mxu0 0
        %1531 = vmatprep.subr.bf16.mxu0 0
        %1532 = vmatpush1.bf16.msra.mxu0 0
        %1533 = vmatprep.subr.bf16.mxu0 0
        %1534 = vmatpush1.bf16.msra.mxu0 0
        %1535 = vmatprep.subr.bf16.mxu0 0
        %1536 = vmatpush1.bf16.msra.mxu0 0
        %1537 = vmatprep.subr.bf16.mxu0 0
        %1538 = vmatpush1.bf16.msra.mxu0 0
        %1539 = vmatprep.subr.bf16.mxu0 0
        %1540 = vmatpush1.bf16.msra.mxu0 0
        %1541 = vmatprep.subr.bf16.mxu0 0
        %1542 = vmatpush1.bf16.msra.mxu0 0
        %1543 = vmatprep.subr.bf16.mxu0 0
        %1544 = vmatpush1.bf16.msra.mxu0 0
        %1545 = vmatprep.subr.bf16.mxu0 0
        %1546 = vmatpush1.bf16.msra.mxu0 0
        %1547 = vmatprep.subr.bf16.mxu0 0
        %1548 = vmatpush1.bf16.msra.mxu0 0
        %1549 = vmatprep.subr.bf16.mxu0 0
        %1550 = vmatpush1.bf16.msra.mxu0 0
        %1551 = vmatprep.subr.bf16.mxu0 0
        %1552 = vmatpush1.bf16.msra.mxu0 0
        %1553 = vmatprep.subr.bf16.mxu0 0
        %1554 = vmatpush1.bf16.msra.mxu0 0
        %1555 = vmatprep.subr.bf16.mxu0 0
        %1556 = vmatpush1.bf16.msra.mxu0 0
        %1557 = vmatprep.subr.bf16.mxu0 0
        %1558 = vmatpush1.bf16.msra.mxu0 0
        %1559 = vmatprep.mubr.bf16.mxu0 0
        %1560 = vmatmul.mubr.bf16.gmra.mrb[0].mxu0 %v1522
        %v1561 = vpop.f32.mrb[0].mxu0
        %v1562 = vadd.f32 0.0, %v1561
        %v1563 = vpop.f32.mrb[0].mxu0
        %v1564 = vpop.f32.mrb[0].mxu0
        %v1565 = vpop.f32.mrb[0].mxu0
        %1566 = vdwg.mxu0
        %v1568 = vsel %vm1235, %v1341, 0
        %v1571 = vsel %vm1297, %v1342, 0
        %1573 = vmatprep.subr.bf16.mxu0 0
        %1574 = vmatpush1.bf16.msra.mxu0 %v1571
        %1575 = vmatprep.subr.bf16.mxu0 0
        %1576 = vmatpush1.bf16.msra.mxu0 0
        %1577 = vmatprep.subr.bf16.mxu0 0
        %1578 = vmatpush1.bf16.msra.mxu0 0
        %1579 = vmatprep.subr.bf16.mxu0 0
        %1580 = vmatpush1.bf16.msra.mxu0 0
        %1581 = vmatprep.subr.bf16.mxu0 0
        %1582 = vmatpush1.bf16.msra.mxu0 0
        %1583 = vmatprep.subr.bf16.mxu0 0
        %1584 = vmatpush1.bf16.msra.mxu0 0
        %1585 = vmatprep.subr.bf16.mxu0 0
        %1586 = vmatpush1.bf16.msra.mxu0 0
        %1587 = vmatprep.subr.bf16.mxu0 0
        %1588 = vmatpush1.bf16.msra.mxu0 0
        %1589 = vmatprep.subr.bf16.mxu0 0
        %1590 = vmatpush1.bf16.msra.mxu0 0
        %1591 = vmatprep.subr.bf16.mxu0 0
        %1592 = vmatpush1.bf16.msra.mxu0 0
        %1593 = vmatprep.subr.bf16.mxu0 0
        %1594 = vmatpush1.bf16.msra.mxu0 0
        %1595 = vmatprep.subr.bf16.mxu0 0
        %1596 = vmatpush1.bf16.msra.mxu0 0
        %1597 = vmatprep.subr.bf16.mxu0 0
        %1598 = vmatpush1.bf16.msra.mxu0 0
        %1599 = vmatprep.subr.bf16.mxu0 0
        %1600 = vmatpush1.bf16.msra.mxu0 0
        %1601 = vmatprep.subr.bf16.mxu0 0
        %1602 = vmatpush1.bf16.msra.mxu0 0
        %1603 = vmatprep.subr.bf16.mxu0 0
        %1604 = vmatpush1.bf16.msra.mxu0 0
        %1605 = vmatprep.mubr.bf16.mxu0 0
        %1606 = vmatmul.mubr.bf16.gmra.mrb[0].mxu0 %v1568
        %v1607 = vpop.f32.mrb[0].mxu0
        %v1608 = vadd.f32 %v1562, %v1607
        %v1609 = vpop.f32.mrb[0].mxu0
        %v1610 = vpop.f32.mrb[0].mxu0
        %v1611 = vpop.f32.mrb[0].mxu0
        %1612 = vdwg.mxu0
        %s1613 = scalar_lea.vmem %s2, 32
        %v1614 = vld [vmem:[%s1613] sm:$0xf]
        %v1615 = vld [vmem:[%s1613 + $0x4] sm:$0xf]
        %v1616 = vld [vmem:[%s1613 + $0x8] sm:$0xf]
        %v1617 = vld [vmem:[%s1613 + $0xc] sm:$0xf]
        %s1618 = scalar_lea.vmem %s3, 2
        %v1619 = vld [vmem:[%s1618] sm:$0x1]
        %v1621 = vlaneseq
        %v1622 = vshrl.u32 %v1621, 7
        %v1623 = vsub.s32 0, %v1622
        %v1624 = vrot.slane %v1619, %v1623
        %v1630 = vunpack.c.l.b16 %v1614
        %v1631 = vunpack.c.l.b16 %v1615
        %v1632 = vunpack.c.l.b16 %v1616
        %v1633 = vunpack.c.l.b16 %v1617
        %v1634 = vpack.c.b16 %v1631, %v1630
        %v1635 = vpack.c.b16 %v1633, %v1632
        %1638 = vmatprep.subr.bf16.mxu0 0
        %1639 = vmatpush1.bf16.msra.mxu0 %v1634
        %1640 = vmatprep.subr.bf16.mxu0 0
        %1641 = vmatpush1.bf16.msra.mxu0 %v1635
        %1642 = vmatprep.subr.bf16.mxu0 0
        %1643 = vmatpush1.bf16.msra.mxu0 0
        %1644 = vmatprep.subr.bf16.mxu0 0
        %1645 = vmatpush1.bf16.msra.mxu0 0
        %1646 = vmatprep.subr.bf16.mxu0 0
        %1647 = vmatpush1.bf16.msra.mxu0 0
        %1648 = vmatprep.subr.bf16.mxu0 0
        %1649 = vmatpush1.bf16.msra.mxu0 0
        %1650 = vmatprep.subr.bf16.mxu0 0
        %1651 = vmatpush1.bf16.msra.mxu0 0
        %1652 = vmatprep.subr.bf16.mxu0 0
        %1653 = vmatpush1.bf16.msra.mxu0 0
        %1654 = vmatprep.subr.bf16.mxu0 0
        %1655 = vmatpush1.bf16.msra.mxu0 0
        %1656 = vmatprep.subr.bf16.mxu0 0
        %1657 = vmatpush1.bf16.msra.mxu0 0
        %1658 = vmatprep.subr.bf16.mxu0 0
        %1659 = vmatpush1.bf16.msra.mxu0 0
        %1660 = vmatprep.subr.bf16.mxu0 0
        %1661 = vmatpush1.bf16.msra.mxu0 0
        %1662 = vmatprep.subr.bf16.mxu0 0
        %1663 = vmatpush1.bf16.msra.mxu0 0
        %1664 = vmatprep.subr.bf16.mxu0 0
        %1665 = vmatpush1.bf16.msra.mxu0 0
        %1666 = vmatprep.subr.bf16.mxu0 0
        %1667 = vmatpush1.bf16.msra.mxu0 0
        %1668 = vmatprep.subr.bf16.mxu0 0
        %1669 = vmatpush1.bf16.msra.mxu0 0
        %1670 = vmatprep.mubr.bf16.mxu0 0
        %1671 = vmatmul.mubr.bf16.gmra.mrb[0].mxu0 %v1189
        %v1672 = vpop.f32.mrb[0].mxu0
        %v1673 = vadd.f32 %v1624, %v1672
        %v1674 = vpop.f32.mrb[0].mxu0
        %v1675 = vpop.f32.mrb[0].mxu0
        %v1676 = vpop.f32.mrb[0].mxu0
        %1677 = vdwg.mxu0
        %v1678 = vmul.f32 %v1673, 0.35355338
        %s1679 = scalar_lea.vmem [#allocation2], 8
        %v1680 = vld [vmem:[%s1679] sm:$0xf]
        %s1681 = scalar_lea.vmem [#allocation3], 8
        %v1682 = vld [vmem:[%s1681] sm:$0xf]
        %v1683 = vpack.c.bf16 %v1678, %v1678
        %v1685 = vsel %vm1235, %v1683, 0
        %v1688 = vsel %vm1235, %v1680, 0
        %1690 = vmatprep.subr.bf16.mxu0 0
        %1691 = vmatpush1.bf16.xpose.msra.mxu0 %v1688
        %1692 = vmatprep.subr.bf16.mxu0 0
        %1693 = vmatpush1.bf16.xpose.msra.mxu0 0
        %1694 = vmatprep.subr.bf16.mxu0 0
        %1695 = vmatpush1.bf16.xpose.msra.mxu0 0
        %1696 = vmatprep.subr.bf16.mxu0 0
        %1697 = vmatpush1.bf16.xpose.msra.mxu0 0
        %1698 = vmatprep.subr.bf16.mxu0 0
        %1699 = vmatpush1.bf16.xpose.msra.mxu0 0
        %1700 = vmatprep.subr.bf16.mxu0 0
        %1701 = vmatpush1.bf16.xpose.msra.mxu0 0
        %1702 = vmatprep.subr.bf16.mxu0 0
        %1703 = vmatpush1.bf16.xpose.msra.mxu0 0
        %1704 = vmatprep.subr.bf16.mxu0 0
        %1705 = vmatpush1.bf16.xpose.msra.mxu0 0
        %1706 = vmatprep.subr.bf16.mxu0 0
        %1707 = vmatpush1.bf16.xpose.msra.mxu0 0
        %1708 = vmatprep.subr.bf16.mxu0 0
        %1709 = vmatpush1.bf16.xpose.msra.mxu0 0
        %1710 = vmatprep.subr.bf16.mxu0 0
        %1711 = vmatpush1.bf16.xpose.msra.mxu0 0
        %1712 = vmatprep.subr.bf16.mxu0 0
        %1713 = vmatpush1.bf16.xpose.msra.mxu0 0
        %1714 = vmatprep.subr.bf16.mxu0 0
        %1715 = vmatpush1.bf16.xpose.msra.mxu0 0
        %1716 = vmatprep.subr.bf16.mxu0 0
        %1717 = vmatpush1.bf16.xpose.msra.mxu0 0
        %1718 = vmatprep.subr.bf16.mxu0 0
        %1719 = vmatpush1.bf16.xpose.msra.mxu0 0
        %1720 = vmatprep.subr.bf16.mxu0 0
        %1721 = vmatpush1.bf16.xpose.msra.mxu0 0
        %1722 = vmatprep.mubr.bf16.mxu0 0
        %1723 = vmatmul.mubr.bf16.gmra.mrb[0].mxu0 %v1685
        %v1724 = vpop.f32.mrb[0].mxu0
        %v1725 = vadd.f32 0.0, %v1724
        %v1726 = vpop.f32.mrb[0].mxu0
        %v1727 = vpop.f32.mrb[0].mxu0
        %v1728 = vpop.f32.mrb[0].mxu0
        %1729 = vdwg.mxu0
        %v1730 = vsel %vm1235, %v1725, -inf
        %1731 = vmax.xlane.f32.xlu0 %v1730
        %v1732 = vpop.xlane.xlu0 %1731
        %v1733 = vsub.f32 %v1725, %v1732
        %v1734 = vmul.f32 %v1733, 1.442695
        %v1735 = vpow.pop %v1734
        %v1736 = vsel %vm1235, %v1735, 0.0
        %1737 = vadd.xlane.f32.xlu0 %v1736
        %v1738 = vpop.xlane.xlu0 %1737
        %v1739 = vrcp.pop %v1738
        %v1740 = vmul.f32 %v1735, %v1739
        %v1741 = vpack.c.bf16 %v1740, %v1740
        %v1743 = vsel %vm1235, %v1741, 0
        %v1746 = vsel %vm1297, %v1682, 0
        %1748 = vmatprep.subr.bf16.mxu0 0
        %1749 = vmatpush1.bf16.msra.mxu0 %v1746
        %1750 = vmatprep.subr.bf16.mxu0 0
        %1751 = vmatpush1.bf16.msra.mxu0 0
        %1752 = vmatprep.subr.bf16.mxu0 0
        %1753 = vmatpush1.bf16.msra.mxu0 0
        %1754 = vmatprep.subr.bf16.mxu0 0
        %1755 = vmatpush1.bf16.msra.mxu0 0
        %1756 = vmatprep.subr.bf16.mxu0 0
        %1757 = vmatpush1.bf16.msra.mxu0 0
        %1758 = vmatprep.subr.bf16.mxu0 0
        %1759 = vmatpush1.bf16.msra.mxu0 0
        %1760 = vmatprep.subr.bf16.mxu0 0
        %1761 = vmatpush1.bf16.msra.mxu0 0
        %1762 = vmatprep.subr.bf16.mxu0 0
        %1763 = vmatpush1.bf16.msra.mxu0 0
        %1764 = vmatprep.subr.bf16.mxu0 0
        %1765 = vmatpush1.bf16.msra.mxu0 0
        %1766 = vmatprep.subr.bf16.mxu0 0
        %1767 = vmatpush1.bf16.msra.mxu0 0
        %1768 = vmatprep.subr.bf16.mxu0 0
        %1769 = vmatpush1.bf16.msra.mxu0 0
        %1770 = vmatprep.subr.bf16.mxu0 0
        %1771 = vmatpush1.bf16.msra.mxu0 0
        %1772 = vmatprep.subr.bf16.mxu0 0
        %1773 = vmatpush1.bf16.msra.mxu0 0
        %1774 = vmatprep.subr.bf16.mxu0 0
        %1775 = vmatpush1.bf16.msra.mxu0 0
        %1776 = vmatprep.subr.bf16.mxu0 0
        %1777 = vmatpush1.bf16.msra.mxu0 0
        %1778 = vmatprep.subr.bf16.mxu0 0
        %1779 = vmatpush1.bf16.msra.mxu0 0
        %1780 = vmatprep.mubr.bf16.mxu0 0
        %1781 = vmatmul.mubr.bf16.gmra.mrb[0].mxu0 %v1743
        %v1782 = vpop.f32.mrb[0].mxu0
        %v1783 = vadd.f32 0.0, %v1782
        %v1784 = vpop.f32.mrb[0].mxu0
        %v1785 = vpop.f32.mrb[0].mxu0
        %v1786 = vpop.f32.mrb[0].mxu0
        %1787 = vdwg.mxu0
        %v1788 = vpack.c.bf16 %v1783, %v1783
        %s1789 = scalar_lea.vmem %s8, 8
        %v1790 = vld [vmem:[%s1789] sm:$0xf]
        %v1792 = vsel %vm1235, %v1788, 0
        %v1795 = vsel %vm1297, %v1790, 0
        %1797 = vmatprep.subr.bf16.mxu0 0
        %1798 = vmatpush1.bf16.msra.mxu0 %v1795
        %1799 = vmatprep.subr.bf16.mxu0 0
        %1800 = vmatpush1.bf16.msra.mxu0 0
        %1801 = vmatprep.subr.bf16.mxu0 0
        %1802 = vmatpush1.bf16.msra.mxu0 0
        %1803 = vmatprep.subr.bf16.mxu0 0
        %1804 = vmatpush1.bf16.msra.mxu0 0
        %1805 = vmatprep.subr.bf16.mxu0 0
        %1806 = vmatpush1.bf16.msra.mxu0 0
        %1807 = vmatprep.subr.bf16.mxu0 0
        %1808 = vmatpush1.bf16.msra.mxu0 0
        %1809 = vmatprep.subr.bf16.mxu0 0
        %1810 = vmatpush1.bf16.msra.mxu0 0
        %1811 = vmatprep.subr.bf16.mxu0 0
        %1812 = vmatpush1.bf16.msra.mxu0 0
        %1813 = vmatprep.subr.bf16.mxu0 0
        %1814 = vmatpush1.bf16.msra.mxu0 0
        %1815 = vmatprep.subr.bf16.mxu0 0
        %1816 = vmatpush1.bf16.msra.mxu0 0
        %1817 = vmatprep.subr.bf16.mxu0 0
        %1818 = vmatpush1.bf16.msra.mxu0 0
        %1819 = vmatprep.subr.bf16.mxu0 0
        %1820 = vmatpush1.bf16.msra.mxu0 0
        %1821 = vmatprep.subr.bf16.mxu0 0
        %1822 = vmatpush1.bf16.msra.mxu0 0
        %1823 = vmatprep.subr.bf16.mxu0 0
        %1824 = vmatpush1.bf16.msra.mxu0 0
        %1825 = vmatprep.subr.bf16.mxu0 0
        %1826 = vmatpush1.bf16.msra.mxu0 0
        %1827 = vmatprep.subr.bf16.mxu0 0
        %1828 = vmatpush1.bf16.msra.mxu0 0
        %1829 = vmatprep.mubr.bf16.mxu0 0
        %1830 = vmatmul.mubr.bf16.gmra.mrb[0].mxu0 %v1792
        %v1831 = vpop.f32.mrb[0].mxu0
        %v1832 = vadd.f32 0.0, %v1831
        %v1833 = vpop.f32.mrb[0].mxu0
        %v1834 = vpop.f32.mrb[0].mxu0
        %v1835 = vpop.f32.mrb[0].mxu0
        %1836 = vdwg.mxu0
        %v1837 = vadd.f32 %v1608, %v1832
        %s1838 = scalar_lea.vmem %s2, 48
        %v1839 = vld [vmem:[%s1838] sm:$0xf]
        %v1840 = vld [vmem:[%s1838 + $0x4] sm:$0xf]
        %v1841 = vld [vmem:[%s1838 + $0x8] sm:$0xf]
        %v1842 = vld [vmem:[%s1838 + $0xc] sm:$0xf]
        %s1843 = scalar_lea.vmem %s3, 3
        %v1844 = vld [vmem:[%s1843] sm:$0x1]
        %v1846 = vlaneseq
        %v1847 = vshrl.u32 %v1846, 7
        %v1848 = vsub.s32 0, %v1847
        %v1849 = vrot.slane %v1844, %v1848
        %v1855 = vunpack.c.l.b16 %v1839
        %v1856 = vunpack.c.l.b16 %v1840
        %v1857 = vunpack.c.l.b16 %v1841
        %v1858 = vunpack.c.l.b16 %v1842
        %v1859 = vpack.c.b16 %v1856, %v1855
        %v1860 = vpack.c.b16 %v1858, %v1857
        %1863 = vmatprep.subr.bf16.mxu0 0
        %1864 = vmatpush1.bf16.msra.mxu0 %v1859
        %1865 = vmatprep.subr.bf16.mxu0 0
        %1866 = vmatpush1.bf16.msra.mxu0 %v1860
        %1867 = vmatprep.subr.bf16.mxu0 0
        %1868 = vmatpush1.bf16.msra.mxu0 0
        %1869 = vmatprep.subr.bf16.mxu0 0
        %1870 = vmatpush1.bf16.msra.mxu0 0
        %1871 = vmatprep.subr.bf16.mxu0 0
        %1872 = vmatpush1.bf16.msra.mxu0 0
        %1873 = vmatprep.subr.bf16.mxu0 0
        %1874 = vmatpush1.bf16.msra.mxu0 0
        %1875 = vmatprep.subr.bf16.mxu0 0
        %1876 = vmatpush1.bf16.msra.mxu0 0
        %1877 = vmatprep.subr.bf16.mxu0 0
        %1878 = vmatpush1.bf16.msra.mxu0 0
        %1879 = vmatprep.subr.bf16.mxu0 0
        %1880 = vmatpush1.bf16.msra.mxu0 0
        %1881 = vmatprep.subr.bf16.mxu0 0
        %1882 = vmatpush1.bf16.msra.mxu0 0
        %1883 = vmatprep.subr.bf16.mxu0 0
        %1884 = vmatpush1.bf16.msra.mxu0 0
        %1885 = vmatprep.subr.bf16.mxu0 0
        %1886 = vmatpush1.bf16.msra.mxu0 0
        %1887 = vmatprep.subr.bf16.mxu0 0
        %1888 = vmatpush1.bf16.msra.mxu0 0
        %1889 = vmatprep.subr.bf16.mxu0 0
        %1890 = vmatpush1.bf16.msra.mxu0 0
        %1891 = vmatprep.subr.bf16.mxu0 0
        %1892 = vmatpush1.bf16.msra.mxu0 0
        %1893 = vmatprep.subr.bf16.mxu0 0
        %1894 = vmatpush1.bf16.msra.mxu0 0
        %1895 = vmatprep.mubr.bf16.mxu0 0
        %1896 = vmatmul.mubr.bf16.gmra.mrb[0].mxu0 %v1189
        %v1897 = vpop.f32.mrb[0].mxu0
        %v1898 = vadd.f32 %v1849, %v1897
        %v1899 = vpop.f32.mrb[0].mxu0
        %v1900 = vpop.f32.mrb[0].mxu0
        %v1901 = vpop.f32.mrb[0].mxu0
        %1902 = vdwg.mxu0
        %v1903 = vmul.f32 %v1898, 0.35355338
        %s1904 = scalar_lea.vmem [#allocation2], 12
        %v1905 = vld [vmem:[%s1904] sm:$0xf]
        %s1906 = scalar_lea.vmem [#allocation3], 12
        %v1907 = vld [vmem:[%s1906] sm:$0xf]
        %v1908 = vpack.c.bf16 %v1903, %v1903
        %v1910 = vsel %vm1235, %v1908, 0
        %v1913 = vsel %vm1235, %v1905, 0
        %1915 = vmatprep.subr.bf16.mxu0 0
        %1916 = vmatpush1.bf16.xpose.msra.mxu0 %v1913
        %1917 = vmatprep.subr.bf16.mxu0 0
        %1918 = vmatpush1.bf16.xpose.msra.mxu0 0
        %1919 = vmatprep.subr.bf16.mxu0 0
        %1920 = vmatpush1.bf16.xpose.msra.mxu0 0
        %1921 = vmatprep.subr.bf16.mxu0 0
        %1922 = vmatpush1.bf16.xpose.msra.mxu0 0
        %1923 = vmatprep.subr.bf16.mxu0 0
        %1924 = vmatpush1.bf16.xpose.msra.mxu0 0
        %1925 = vmatprep.subr.bf16.mxu0 0
        %1926 = vmatpush1.bf16.xpose.msra.mxu0 0
        %1927 = vmatprep.subr.bf16.mxu0 0
        %1928 = vmatpush1.bf16.xpose.msra.mxu0 0
        %1929 = vmatprep.subr.bf16.mxu0 0
        %1930 = vmatpush1.bf16.xpose.msra.mxu0 0
        %1931 = vmatprep.subr.bf16.mxu0 0
        %1932 = vmatpush1.bf16.xpose.msra.mxu0 0
        %1933 = vmatprep.subr.bf16.mxu0 0
        %1934 = vmatpush1.bf16.xpose.msra.mxu0 0
        %1935 = vmatprep.subr.bf16.mxu0 0
        %1936 = vmatpush1.bf16.xpose.msra.mxu0 0
        %1937 = vmatprep.subr.bf16.mxu0 0
        %1938 = vmatpush1.bf16.xpose.msra.mxu0 0
        %1939 = vmatprep.subr.bf16.mxu0 0
        %1940 = vmatpush1.bf16.xpose.msra.mxu0 0
        %1941 = vmatprep.subr.bf16.mxu0 0
        %1942 = vmatpush1.bf16.xpose.msra.mxu0 0
        %1943 = vmatprep.subr.bf16.mxu0 0
        %1944 = vmatpush1.bf16.xpose.msra.mxu0 0
        %1945 = vmatprep.subr.bf16.mxu0 0
        %1946 = vmatpush1.bf16.xpose.msra.mxu0 0
        %1947 = vmatprep.mubr.bf16.mxu0 0
        %1948 = vmatmul.mubr.bf16.gmra.mrb[0].mxu0 %v1910
        %v1949 = vpop.f32.mrb[0].mxu0
        %v1950 = vadd.f32 0.0, %v1949
        %v1951 = vpop.f32.mrb[0].mxu0
        %v1952 = vpop.f32.mrb[0].mxu0
        %v1953 = vpop.f32.mrb[0].mxu0
        %1954 = vdwg.mxu0
        %v1955 = vsel %vm1235, %v1950, -inf
        %1956 = vmax.xlane.f32.xlu0 %v1955
        %v1957 = vpop.xlane.xlu0 %1956
        %v1958 = vsub.f32 %v1950, %v1957
        %v1959 = vmul.f32 %v1958, 1.442695
        %v1960 = vpow.pop %v1959
        %v1961 = vsel %vm1235, %v1960, 0.0
        %1962 = vadd.xlane.f32.xlu0 %v1961
        %v1963 = vpop.xlane.xlu0 %1962
        %v1964 = vrcp.pop %v1963
        %v1965 = vmul.f32 %v1960, %v1964
        %v1966 = vpack.c.bf16 %v1965, %v1965
        %v1968 = vsel %vm1235, %v1966, 0
        %v1971 = vsel %vm1297, %v1907, 0
        %1973 = vmatprep.subr.bf16.mxu0 0
        %1974 = vmatpush1.bf16.msra.mxu0 %v1971
        %1975 = vmatprep.subr.bf16.mxu0 0
        %1976 = vmatpush1.bf16.msra.mxu0 0
        %1977 = vmatprep.subr.bf16.mxu0 0
        %1978 = vmatpush1.bf16.msra.mxu0 0
        %1979 = vmatprep.subr.bf16.mxu0 0
        %1980 = vmatpush1.bf16.msra.mxu0 0
        %1981 = vmatprep.subr.bf16.mxu0 0
        %1982 = vmatpush1.bf16.msra.mxu0 0
        %1983 = vmatprep.subr.bf16.mxu0 0
        %1984 = vmatpush1.bf16.msra.mxu0 0
        %1985 = vmatprep.subr.bf16.mxu0 0
        %1986 = vmatpush1.bf16.msra.mxu0 0
        %1987 = vmatprep.subr.bf16.mxu0 0
        %1988 = vmatpush1.bf16.msra.mxu0 0
        %1989 = vmatprep.subr.bf16.mxu0 0
        %1990 = vmatpush1.bf16.msra.mxu0 0
        %1991 = vmatprep.subr.bf16.mxu0 0
        %1992 = vmatpush1.bf16.msra.mxu0 0
        %1993 = vmatprep.subr.bf16.mxu0 0
        %1994 = vmatpush1.bf16.msra.mxu0 0
        %1995 = vmatprep.subr.bf16.mxu0 0
        %1996 = vmatpush1.bf16.msra.mxu0 0
        %1997 = vmatprep.subr.bf16.mxu0 0
        %1998 = vmatpush1.bf16.msra.mxu0 0
        %1999 = vmatprep.subr.bf16.mxu0 0
        %2000 = vmatpush1.bf16.msra.mxu0 0
        %2001 = vmatprep.subr.bf16.mxu0 0
        %2002 = vmatpush1.bf16.msra.mxu0 0
        %2003 = vmatprep.subr.bf16.mxu0 0
        %2004 = vmatpush1.bf16.msra.mxu0 0
        %2005 = vmatprep.mubr.bf16.mxu0 0
        %2006 = vmatmul.mubr.bf16.gmra.mrb[0].mxu0 %v1968
        %v2007 = vpop.f32.mrb[0].mxu0
        %v2008 = vadd.f32 0.0, %v2007
        %v2009 = vpop.f32.mrb[0].mxu0
        %v2010 = vpop.f32.mrb[0].mxu0
        %v2011 = vpop.f32.mrb[0].mxu0
        %2012 = vdwg.mxu0
        %v2013 = vpack.c.bf16 %v2008, %v2008
        %s2014 = scalar_lea.vmem %s8, 12
        %v2015 = vld [vmem:[%s2014] sm:$0xf]
        %v2017 = vsel %vm1235, %v2013, 0
        %v2020 = vsel %vm1297, %v2015, 0
        %2022 = vmatprep.subr.bf16.mxu0 0
        %2023 = vmatpush1.bf16.msra.mxu0 %v2020
        %2024 = vmatprep.subr.bf16.mxu0 0
        %2025 = vmatpush1.bf16.msra.mxu0 0
        %2026 = vmatprep.subr.bf16.mxu0 0
        %2027 = vmatpush1.bf16.msra.mxu0 0
        %2028 = vmatprep.subr.bf16.mxu0 0
        %2029 = vmatpush1.bf16.msra.mxu0 0
        %2030 = vmatprep.subr.bf16.mxu0 0
        %2031 = vmatpush1.bf16.msra.mxu0 0
        %2032 = vmatprep.subr.bf16.mxu0 0
        %2033 = vmatpush1.bf16.msra.mxu0 0
        %2034 = vmatprep.subr.bf16.mxu0 0
        %2035 = vmatpush1.bf16.msra.mxu0 0
        %2036 = vmatprep.subr.bf16.mxu0 0
        %2037 = vmatpush1.bf16.msra.mxu0 0
        %2038 = vmatprep.subr.bf16.mxu0 0
        %2039 = vmatpush1.bf16.msra.mxu0 0
        %2040 = vmatprep.subr.bf16.mxu0 0
        %2041 = vmatpush1.bf16.msra.mxu0 0
        %2042 = vmatprep.subr.bf16.mxu0 0
        %2043 = vmatpush1.bf16.msra.mxu0 0
        %2044 = vmatprep.subr.bf16.mxu0 0
        %2045 = vmatpush1.bf16.msra.mxu0 0
        %2046 = vmatprep.subr.bf16.mxu0 0
        %2047 = vmatpush1.bf16.msra.mxu0 0
        %2048 = vmatprep.subr.bf16.mxu0 0
        %2049 = vmatpush1.bf16.msra.mxu0 0
        %2050 = vmatprep.subr.bf16.mxu0 0
        %2051 = vmatpush1.bf16.msra.mxu0 0
        %2052 = vmatprep.subr.bf16.mxu0 0
        %2053 = vmatpush1.bf16.msra.mxu0 0
        %2054 = vmatprep.mubr.bf16.mxu0 0
        %2055 = vmatmul.mubr.bf16.gmra.mrb[0].mxu0 %v2017
        %v2056 = vpop.f32.mrb[0].mxu0
        %v2057 = vadd.f32 0.0, %v2056
        %v2058 = vpop.f32.mrb[0].mxu0
        %v2059 = vpop.f32.mrb[0].mxu0
        %v2060 = vpop.f32.mrb[0].mxu0
        %2061 = vdwg.mxu0
        %v2062 = vadd.f32 %v1837, %v2057
        %v2063 = vld [vmem:[%s9] sm:$0x1]
        %v2065 = vlaneseq
        %v2066 = vshrl.u32 %v2065, 7
        %v2067 = vsub.s32 0, %v2066
        %v2068 = vrot.slane %v2063, %v2067
        %v2070 = vadd.f32 %v2062, %v2068
        %v2071 = vadd.f32 %v2070, %v614
        %v2072 = vsel %vm1187, %v2071, 0.0
        %2073 = vadd.xlane.f32.xlu0 %v2072
        %v2074 = vpop.xlane.xlu0 %2073
        %v2075 = vrcp.pop 32.0
        %v2076 = vmul.f32 %v2074, %v2075
        %v2077 = vsub.f32 %v2071, %v2076
        %v2078 = vmul.f32 %v2077, %v2077
        %v2079 = vsel %vm1187, %v2078, 0.0
        %2080 = vadd.xlane.f32.xlu0 %v2079
        %v2081 = vpop.xlane.xlu0 %2080
        %v2082 = vmul.f32 %v2081, %v2075
        %v2083 = vld [vmem:[%s10] sm:$0x1]
        %v2085 = vlaneseq
        %v2086 = vshrl.u32 %v2085, 7
        %v2087 = vsub.s32 0, %v2086
        %v2088 = vrot.slane %v2083, %v2087
        %v2090 = vmul.f32 %v2088, %v2077
        %v2091 = vadd.f32 %v2082, 1e-12
        %v2092 = vrsqrt.pop %v2091
        %v2093 = vmul.f32 %v2090, %v2092
        %v2094 = vld [vmem:[%s11] sm:$0x1]
        %v2096 = vlaneseq
        %v2097 = vshrl.u32 %v2096, 7
        %v2098 = vsub.s32 0, %v2097
        %v2099 = vrot.slane %v2094, %v2098
        %v2101 = vadd.f32 %v2093, %v2099
        %v2102 = vpack.c.bf16 %v2101, %v2101
        %v2103 = vld [vmem:[%s12] sm:$0xf]
        %v2104 = vld [vmem:[%s12 + $0x4] sm:$0xf]
        %v2105 = vld [vmem:[%s12 + $0x8] sm:$0xf]
        %v2106 = vld [vmem:[%s12 + $0xc] sm:$0xf]
        %v2107 = vld [vmem:[%s13] sm:$0x1]
        %v2109 = vlaneseq
        %v2110 = vshrl.u32 %v2109, 7
        %v2111 = vsub.s32 0, %v2110
        %v2112 = vrot.slane %v2107, %v2111
        %v2118 = vunpack.c.l.b16 %v2103
        %v2119 = vunpack.c.l.b16 %v2104
        %v2120 = vunpack.c.l.b16 %v2105
        %v2121 = vunpack.c.l.b16 %v2106
        %v2122 = vpack.c.b16 %v2119, %v2118
        %v2123 = vpack.c.b16 %v2121, %v2120
        %v2127 = vsel %vm1187, %v2102, 0
        %2129 = vmatprep.subr.bf16.mxu0 0
        %2130 = vmatpush1.bf16.msra.mxu0 %v2122
        %2131 = vmatprep.subr.bf16.mxu0 0
        %2132 = vmatpush1.bf16.msra.mxu0 %v2123
        %2133 = vmatprep.subr.bf16.mxu0 0
        %2134 = vmatpush1.bf16.msra.mxu0 0
        %2135 = vmatprep.subr.bf16.mxu0 0
        %2136 = vmatpush1.bf16.msra.mxu0 0
        %2137 = vmatprep.subr.bf16.mxu0 0
        %2138 = vmatpush1.bf16.msra.mxu0 0
        %2139 = vmatprep.subr.bf16.mxu0 0
        %2140 = vmatpush1.bf16.msra.mxu0 0
        %2141 = vmatprep.subr.bf16.mxu0 0
        %2142 = vmatpush1.bf16.msra.mxu0 0
        %2143 = vmatprep.subr.bf16.mxu0 0
        %2144 = vmatpush1.bf16.msra.mxu0 0
        %2145 = vmatprep.subr.bf16.mxu0 0
        %2146 = vmatpush1.bf16.msra.mxu0 0
        %2147 = vmatprep.subr.bf16.mxu0 0
        %2148 = vmatpush1.bf16.msra.mxu0 0
        %2149 = vmatprep.subr.bf16.mxu0 0
        %2150 = vmatpush1.bf16.msra.mxu0 0
        %2151 = vmatprep.subr.bf16.mxu0 0
        %2152 = vmatpush1.bf16.msra.mxu0 0
        %2153 = vmatprep.subr.bf16.mxu0 0
        %2154 = vmatpush1.bf16.msra.mxu0 0
        %2155 = vmatprep.subr.bf16.mxu0 0
        %2156 = vmatpush1.bf16.msra.mxu0 0
        %2157 = vmatprep.subr.bf16.mxu0 0
        %2158 = vmatpush1.bf16.msra.mxu0 0
        %2159 = vmatprep.subr.bf16.mxu0 0
        %2160 = vmatpush1.bf16.msra.mxu0 0
        %2161 = vmatprep.mubr.bf16.mxu0 0
        %2162 = vmatmul.mubr.bf16.gmra.mrb[0].mxu0 %v2127
        %v2163 = vpop.f32.mrb[0].mxu0
        %v2164 = vadd.f32 %v2112, %v2163
        %v2165 = vpop.f32.mrb[0].mxu0
        %v2166 = vpop.f32.mrb[0].mxu0
        %v2167 = vpop.f32.mrb[0].mxu0
        %2168 = vdwg.mxu0
        %v2169 = vmax.f32 %v2164, 0.0
        %v2170 = vpack.c.bf16 %v2169, %v2169
        %v2171 = vld [vmem:[%s14] sm:$0xf]
        %v2172 = vld [vmem:[%s14 + $0x4] sm:$0xf]
        %v2173 = vld [vmem:[%s14 + $0x8] sm:$0xf]
        %v2174 = vld [vmem:[%s14 + $0xc] sm:$0xf]
        %v2175 = vld [vmem:[%s14 + $0x10] sm:$0xf]
        %v2176 = vld [vmem:[%s14 + $0x14] sm:$0xf]
        %v2177 = vld [vmem:[%s14 + $0x18] sm:$0xf]
        %v2178 = vld [vmem:[%s14 + $0x1c] sm:$0xf]
        %v2179 = vld [vmem:[%s15] sm:$0x1]
        %v2181 = vlaneseq
        %v2182 = vshrl.u32 %v2181, 7
        %v2183 = vsub.s32 0, %v2182
        %v2184 = vrot.slane %v2179, %v2183
        %v2194 = vunpack.c.l.b16 %v2171
        %v2195 = vunpack.c.l.b16 %v2172
        %v2196 = vunpack.c.l.b16 %v2173
        %v2197 = vunpack.c.l.b16 %v2174
        %v2198 = vunpack.c.l.b16 %v2175
        %v2199 = vunpack.c.l.b16 %v2176
        %v2200 = vunpack.c.l.b16 %v2177
        %v2201 = vunpack.c.l.b16 %v2178
        %v2202 = vpack.c.b16 %v2195, %v2194
        %v2203 = vpack.c.b16 %v2197, %v2196
        %v2204 = vpack.c.b16 %v2199, %v2198
        %v2205 = vpack.c.b16 %v2201, %v2200
        %vm2210 = vcmask 523264
        %v2212 = vsel %vm2210, %v2170, 0
        %2214 = vmatprep.subr.bf16.mxu0 0
        %2215 = vmatpush1.bf16.msra.mxu0 %v2202
        %2216 = vmatprep.subr.bf16.mxu0 0
        %2217 = vmatpush1.bf16.msra.mxu0 %v2203
        %2218 = vmatprep.subr.bf16.mxu0 0
        %2219 = vmatpush1.bf16.msra.mxu0 %v2204
        %2220 = vmatprep.subr.bf16.mxu0 0
        %2221 = vmatpush1.bf16.msra.mxu0 %v2205
        %2222 = vmatprep.subr.bf16.mxu0 0
        %2223 = vmatpush1.bf16.msra.mxu0 0
        %2224 = vmatprep.subr.bf16.mxu0 0
        %2225 = vmatpush1.bf16.msra.mxu0 0
        %2226 = vmatprep.subr.bf16.mxu0 0
        %2227 = vmatpush1.bf16.msra.mxu0 0
        %2228 = vmatprep.subr.bf16.mxu0 0
        %2229 = vmatpush1.bf16.msra.mxu0 0
        %2230 = vmatprep.subr.bf16.mxu0 0
        %2231 = vmatpush1.bf16.msra.mxu0 0
        %2232 = vmatprep.subr.bf16.mxu0 0
        %2233 = vmatpush1.bf16.msra.mxu0 0
        %2234 = vmatprep.subr.bf16.mxu0 0
        %2235 = vmatpush1.bf16.msra.mxu0 0
        %2236 = vmatprep.subr.bf16.mxu0 0
        %2237 = vmatpush1.bf16.msra.mxu0 0
        %2238 = vmatprep.subr.bf16.mxu0 0
        %2239 = vmatpush1.bf16.msra.mxu0 0
        %2240 = vmatprep.subr.bf16.mxu0 0
        %2241 = vmatpush1.bf16.msra.mxu0 0
        %2242 = vmatprep.subr.bf16.mxu0 0
        %2243 = vmatpush1.bf16.msra.mxu0 0
        %2244 = vmatprep.subr.bf16.mxu0 0
        %2245 = vmatpush1.bf16.msra.mxu0 0
        %2246 = vmatprep.mubr.bf16.mxu0 0
        %2247 = vmatmul.mubr.bf16.gmra.mrb[0].mxu0 %v2212
        %v2248 = vpop.f32.mrb[0].mxu0
        %v2249 = vadd.f32 %v2184, %v2248
        %v2250 = vpop.f32.mrb[0].mxu0
        %v2251 = vpop.f32.mrb[0].mxu0
        %v2252 = vpop.f32.mrb[0].mxu0
        %2253 = vdwg.mxu0
        %v2254 = vadd.f32 %v2249, %v2101
        %v2255 = vsel %vm1187, %v2254, 0.0
        %2256 = vadd.xlane.f32.xlu0 %v2255
        %v2257 = vpop.xlane.xlu0 %2256
        %v2258 = vmul.f32 %v2257, %v2075
        %v2259 = vsub.f32 %v2254, %v2258
        %v2260 = vmul.f32 %v2259, %v2259
        %v2261 = vsel %vm1187, %v2260, 0.0
        %2262 = vadd.xlane.f32.xlu0 %v2261
        %v2263 = vpop.xlane.xlu0 %2262
        %v2264 = vmul.f32 %v2263, %v2075
        %v2265 = vld [vmem:[%s16] sm:$0x1]
        %v2267 = vlaneseq
        %v2268 = vshrl.u32 %v2267, 7
        %v2269 = vsub.s32 0, %v2268
        %v2270 = vrot.slane %v2265, %v2269
        %v2272 = vmul.f32 %v2270, %v2259
        %v2273 = vadd.f32 %v2264, 1e-12
        %v2274 = vrsqrt.pop %v2273
        %v2275 = vmul.f32 %v2272, %v2274
        %v2276 = vld [vmem:[%s17] sm:$0x1]
        %v2278 = vlaneseq
        %v2279 = vshrl.u32 %v2278, 7
        %v2280 = vsub.s32 0, %v2279
        %v2281 = vrot.slane %v2276, %v2280
        %v2283 = vadd.f32 %v2275, %v2281
        %2284 = vst.msk [vmem:[%s601] sm:$0xff] %vm1187, %v2283
        %s2285 = sand.u32 %s444, 1
        %s2286 = scalar_lea.sflag [#allocation5], %s2285
        %s2287 = sand.u32 %s444, 1
        %s2288 = smul.addr %s2287, 8
        %s2289 = scalar_lea.vmem [#allocation4], %s2288
        // Predicated region
        $region97: #{tpu_custom_call.1} parent=91 // pred_check
          %p2290 = pneg %p454
        $region98: #{tpu_custom_call.1} parent=91 // pred_check_branch
          %2292 = sbr.rel (%p2290) target = $region100
        $region99: #{tpu_custom_call.1} parent=91 // pred_region
          %s2294 = ssub.s32 128, 128
          %2295 = vsyncadd %s2286, %s2294
          %s2296 = sadd.s32 %s37, %s36
          %s2297 = smul.addr %s2296, 128
          %s2298 = scalar_lea.hbm %s18, %s2297
          %s2300 = sshll.u32 %s2289, 4
          %s2301 = int_to_ptr.vmem [resolvable:$true] %s2300
          %2303 = dma.vmem_to_hbm [thread:$0]  %s2301, 128, %s2298, %s2286
        $region100: #{tpu_custom_call.1} parent=91 // pred_fallthru
          _
      $region92: #{tpu_custom_call.1} parent=5 // pred_fallthru
        _
      %p2304 = scmp.le.s32.totalorder 2, %s27
      // Predicated region
      $region101: #{tpu_custom_call.1} parent=5 // pred_check
        %p2305 = pneg %p2304
      $region102: #{tpu_custom_call.1} parent=5 // pred_check_branch
        %2307 = sbr.rel (%p2305) target = $region104
      $region103: #{tpu_custom_call.1} parent=5 // pred_region
        %s2308 = ssub.s32 %s27, 2
        // Predicated region
        $region105: #{tpu_custom_call.1} parent=103 // pred_check
          %p2309 = pneg %p460
        $region106: #{tpu_custom_call.1} parent=103 // pred_check_branch
          %2311 = sbr.rel (%p2309) target = $region108
        $region107: #{tpu_custom_call.1} parent=103 // pred_region
          %s2312 = sand.u32 %s445, 1
          %s2313 = scalar_lea.sflag [#allocation5], %s2312
          %s2314 = sand.u32 %s445, 1
          %s2315 = smul.addr %s2314, 8
          %s2316 = scalar_lea.vmem [#allocation4], %s2315
          %2317 = dma.done %s2313, 128
        $region108: #{tpu_custom_call.1} parent=103 // pred_fallthru
          _
      $region104: #{tpu_custom_call.1} parent=5 // pred_fallthru
        _
    $region6: #{tpu_custom_call.1} parent=1 // loop_footer
      %s31 = sadd.s32 1, %s27
    $region7: #{tpu_custom_call.1} parent=1 // loop_footer_branch
      %26 = sbr.rel target = $region3
    $region8: #{tpu_custom_call.1} parent=1 // loop_exit
      _
    %2318 = vsyncpa [#allocation5], 1
    %s2319 = scalar_lea.sflag [#allocation5], 1
    %2320 = vsyncpa %s2319, 1

</llo_original>
